<compile_context>
chip_gen: v6e
topology: v6e:2x2x1
jax: 0.10.0
libtpu: 0.0.40
codegen_flags: <defaults>
</compile_context>

<pallas_src>
import jax
import jax.numpy as jnp
from jax.experimental import pallas as pl
from jax.experimental.pallas import tpu as pltpu


def _set2vec_kernel(x_ref, w1_ref, w2_ref, wrzn_ref, ww_ref, bias_ref,
                    out_ref, m_scr):
    T, bt, F = x_ref.shape
    M = w2_ref.shape[0]
    d_out = out_ref.shape[1]

    # ---- hoisted weight / bias loads (outside the serial loop) ------------
    w1 = w1_ref[...]                       # (F, M)
    w2 = w2_ref[...]                       # (M, M)
    wrzn = wrzn_ref[...]                   # (2M, 3M)  pruned r|z|n gate slab
    wrzn_t = wrzn[:M, :]                   # rows multiplying q_hat
    wrzn_b = wrzn[M:, :]                   # rows multiplying r_vec
    ww = ww_ref[...]                       # (2M, d_out)
    wwt = ww[:M, :]
    wwb = ww[M:, :]
    bias = bias_ref[...]                   # (4, W) packed bias slab, f32
    b1 = bias[0:1, :M]
    b2 = bias[1:2, :M]
    brzn = bias[2:3, :3 * M]
    bw = bias[3:4, :d_out]

    def mm(a, w):
        # f32 accumulation always; operands optionally bf16 (use_bf16_mxu).
        return jnp.dot(a.astype(w.dtype), w, preferred_element_type=jnp.float32)

    # ---- embedding MLP: one (bt, F) x (F, M) matmul per set position ------
    # Written into a t-major (T, bt, M) scratch so the recurrence below never
    # needs a transpose or reshape.  This sits outside the serial chain.
    for t in range(T):
        h1 = jnp.maximum(mm(x_ref[t], w1) + b1, 0.0)      # (bt, M)
        m_scr[t] = mm(h1, w2) + b2                        # (bt, M)
    m_t = m_scr[...]                                      # (T, bt, M) loop-invariant

    # ---- T steps of the attention-GRU process block (serial recurrence) ---
    q_hat = jnp.zeros((bt, M), jnp.float32)
    r_vec = jnp.zeros((bt, M), jnp.float32)

    # T <= ~16 -> Python unroll is fine; use lax.fori_loop(unroll=k) if T grows.
    for _ in range(T):
        # Fused, pruned r|z|n gate: 2 MXU matmuls per iteration.
        g = mm(q_hat, wrzn_t) + mm(r_vec, wrzn_b) + brzn   # (bt, 3M)
        rz = jax.nn.sigmoid(g[:, :2 * M])                  # one sigmoid for r|z
        r = rz[:, :M]
        z = rz[:, M:]
        n = jnp.tanh(r * g[:, 2 * M:])
        q_hat = (1.0 - z) * n + z * q_hat                  # (bt, M)

        # Attention over the set, batched over bt:
        #   e[t, b] = <q_hat[b], m[t, b]>, softmax over t,
        #   r_vec[b] = sum_t a[t, b] * m[t, b].
        e = jnp.sum(q_hat[None, :, :] * m_t, axis=-1, keepdims=True)  # (T, bt, 1)
        e = e - jnp.max(e, axis=0, keepdims=True)
        p = jnp.exp(e)
        a = p / jnp.sum(p, axis=0, keepdims=True)          # exact divide (review)
        r_vec = jnp.sum(a * m_t, axis=0)                   # (bt, M)

    # ---- write linear: q = [q_hat | r_vec], ww row-split -> no concat -----
    out = mm(q_hat, wwt) + mm(r_vec, wwb) + bw             # (bt, d_out)
    out_ref[...] = out.astype(out_ref.dtype)


def _pack_params(params, use_bf16_mxu=False):
    """Host-side (free) weight re-packing: gate pruning + slab packing."""
    M = params['w2'].shape[0]
    d_out = params['ww'].shape[1]
    wg, bg = params['wg'], params['bg']            # (2M, 6M), (1, 6M)
    ww, bw = params['ww'], params['bw']            # (2M, D),  (1, D)

    # Only the first M columns of each gate feed q_hat = h[:, :M]; the other
    # 3M gate output columns are never consumed downstream (exact pruning).
    wr, br = wg[:, 0:M],         bg[:, 0:M]
    wz, bz = wg[:, 2 * M:3 * M], bg[:, 2 * M:3 * M]
    wn, bn = wg[:, 4 * M:5 * M], bg[:, 4 * M:5 * M]
    wrzn = jnp.concatenate([wr, wz, wn], axis=1)   # (2M, 3M)
    brzn = jnp.concatenate([br, bz, bn], axis=1)   # (1, 3M)

    # Bias slab: rows = [b1, b2, brzn, bw], zero-padded to a common width.
    W = max(M, 3 * M, d_out)

    def pad(b):
        return jnp.pad(b, ((0, 0), (0, W - b.shape[1])))

    bias = jnp.concatenate(
        [pad(params['b1']), pad(params['b2']), pad(brzn), pad(bw)], axis=0)

    wdt = jnp.bfloat16 if use_bf16_mxu else jnp.float32
    return dict(
        w1=params['w1'].astype(wdt), w2=params['w2'].astype(wdt),
        wrzn=wrzn.astype(wdt), ww=ww.astype(wdt),
        bias=bias.astype(jnp.float32))


def set2vec_pallas(x, params, *, batch_tile=None, use_bf16_mxu=False):
    B, T, F = x.shape
    M = params['w2'].shape[0]
    d_out = params['ww'].shape[1]
    p = _pack_params(params, use_bf16_mxu=use_bf16_mxu)

    # Batch tile: fill MXU rows of the gate matmuls.  ~128 on v5e, ~256 on
    # v6e/v7x for production batches; the toy batch runs in one grid step.
    if batch_tile is None:
        bt = min(B, 128)
    else:
        bt = batch_tile
    if B % bt != 0:
        bt = B
    grid = (B // bt,)

    # t-major layout so the batch tile sits in the sublanes of every
    # per-position slice (host-side transpose; plain XLA, outside the kernel).
    x_t = jnp.swapaxes(x, 0, 1)            # (T, B, F)

    def const_spec(a):
        nd = a.ndim
        return pl.BlockSpec(a.shape, lambda i, _nd=nd: (0,) * _nd)

    out = pl.pallas_call(
        _set2vec_kernel,
        out_shape=jax.ShapeDtypeStruct((B, d_out), jnp.float32),
        grid=grid,
        in_specs=[
            pl.BlockSpec((T, bt, F), lambda i: (0, i, 0)),   # x batch tile
            const_spec(p['w1']),
            const_spec(p['w2']),
            const_spec(p['wrzn']),
            const_spec(p['ww']),
            const_spec(p['bias']),
        ],
        out_specs=pl.BlockSpec((bt, d_out), lambda i: (i, 0)),  # dense slab
        scratch_shapes=[pltpu.VMEM((T, bt, M), jnp.float32)],   # t-major memory
        compiler_params=pltpu.CompilerParams(
            dimension_semantics=("parallel",),   # batch axis -> megacore split
            # Production note: on v7x (64 MiB VMEM / 32 MiB scoped) keep the
            # invariant weight specs single-buffered and size bt so
            # (T, bt, M) m + 2x x tiles fit; on v5e raise vmem_limit_bytes
            # when bt / M grow past the 16 MiB scoped default.
        ),
    )(x_t, p['w1'], p['w2'], p['wrzn'], p['ww'], p['bias'])
    return out


def set2vec_reference(x, p):
    """Pure-JAX reference of the PyTorch forward (faithful / unsplit)."""
    m = jnp.maximum(jnp.matmul(x, p['w1']) + p['b1'], 0.0)
    m = jnp.matmul(m, p['w2']) + p['b2']                    # (B, T, M)
    B, T, M = m.shape
    q = jnp.zeros((B, 2 * M), jnp.float32)
    for _ in range(T):
        g = q @ p['wg'] + p['bg']
        r_, z_, n_ = jnp.split(g, 3, axis=1)
        r = jax.nn.sigmoid(r_)
        z = jax.nn.sigmoid(z_)
        n = jnp.tanh(r * n_)
        h = (1.0 - z) * n + z * q
        q_hat = h[:, :M]
        e = jnp.einsum('btm,bm->bt', m, q_hat)
        a = jax.nn.softmax(e, axis=1)
        r_vec = jnp.sum(a[:, :, None] * m, axis=1)
        q = jnp.concatenate([q_hat, r_vec], axis=1)
    return q @ p['ww'] + p['bw']


def init_params(key, input_dim, output_dim, memory_dim):
    """Deterministic synthetic init (PyTorch-Linear-style uniform bounds)."""
    def linear(k, fan_in, fan_out):
        kw, kb = jax.random.split(k)
        bound = 1.0 / jnp.sqrt(fan_in)
        w = jax.random.uniform(kw, (fan_in, fan_out), jnp.float32, -bound, bound)
        b = jax.random.uniform(kb, (1, fan_out), jnp.float32, -bound, bound)
        return w, b

    k1, k2, k3, k4 = jax.random.split(key, 4)
    w1, b1 = linear(k1, input_dim, memory_dim)            # embedding[0]
    w2, b2 = linear(k2, memory_dim, memory_dim)           # embedding[2]
    wg, bg = linear(k3, 2 * memory_dim, 6 * memory_dim)   # NoInputGRUCell.linear
    ww, bw = linear(k4, 2 * memory_dim, output_dim)       # write
    return dict(w1=w1, b1=b1, w2=w2, b2=b2, wg=wg, bg=bg, ww=ww, bw=bw)


if __name__ == "__main__":
    B, T, F = 2, 8, 4          # batch, seq_length, input feature dim
    M, D_OUT = 32, 16          # memory_dim, output_dim

    key = jax.random.PRNGKey(0)
    kx, kp = jax.random.split(key)
    x = jax.random.normal(kx, (B, T, F), jnp.float32)
    params = init_params(kp, F, D_OUT, M)

    out = jax.block_until_ready(set2vec_pallas(x, params))
    ref = jax.block_until_ready(set2vec_reference(x, params))

    assert out.shape == (B, D_OUT)
    # Exact softmax divide now; remaining tolerance absorbs MXU f32-pass /
    # accumulation-order differences vs. the monolithic XLA reference.
    assert jnp.allclose(out, ref, rtol=1e-3, atol=1e-3), "mismatch vs reference"
    print("KERNEL_OK")
</pallas_src>

<mosaic_0001>
module attributes {stable_mosaic.version = 11 : i64} {
  func.func @_set2vec_kernel(%arg0: i32, %arg1: memref<8x2x4xf32, #tpu.memory_space<vmem>>, %arg2: memref<4x32xf32, #tpu.memory_space<vmem>>, %arg3: memref<32x32xf32, #tpu.memory_space<vmem>>, %arg4: memref<64x96xf32, #tpu.memory_space<vmem>>, %arg5: memref<64x16xf32, #tpu.memory_space<vmem>>, %arg6: memref<4x96xf32, #tpu.memory_space<vmem>>, %arg7: memref<2x16xf32, #tpu.memory_space<vmem>>, %arg8: memref<8x2x32xf32, #tpu.memory_space<vmem>>) attributes {dimension_semantics = [#tpu.dimension_semantics<parallel>], iteration_bounds = array<i64: 1>, scalar_prefetch = 0 : i64, scratch_operands = 1 : i64, tpu.core_type = #tpu.core_type<tc>, window_params = [{transform_indices = @transform_0, window_bounds = array<i64: 8, 2, 4>}, {pipeline_mode = #tpu.pipeline_mode<synchronous>, transform_indices = @transform_1, window_bounds = array<i64: 4, 32>}, {pipeline_mode = #tpu.pipeline_mode<synchronous>, transform_indices = @transform_2, window_bounds = array<i64: 32, 32>}, {pipeline_mode = #tpu.pipeline_mode<synchronous>, transform_indices = @transform_3, window_bounds = array<i64: 64, 96>}, {pipeline_mode = #tpu.pipeline_mode<synchronous>, transform_indices = @transform_4, window_bounds = array<i64: 64, 16>}, {pipeline_mode = #tpu.pipeline_mode<synchronous>, transform_indices = @transform_5, window_bounds = array<i64: 4, 96>}, {transform_indices = @transform_6, window_bounds = array<i64: 2, 16>}]} {
    %c0 = arith.constant 0 : index
    %c0_0 = arith.constant 0 : index
    %0 = vector.load %arg2[%c0, %c0_0] : memref<4x32xf32, #tpu.memory_space<vmem>>, vector<4x32xf32>
    %c0_1 = arith.constant 0 : index
    %c0_2 = arith.constant 0 : index
    %1 = vector.load %arg3[%c0_1, %c0_2] : memref<32x32xf32, #tpu.memory_space<vmem>>, vector<32x32xf32>
    %c0_3 = arith.constant 0 : index
    %c0_4 = arith.constant 0 : index
    %2 = vector.load %arg4[%c0_3, %c0_4] : memref<64x96xf32, #tpu.memory_space<vmem>>, vector<64x96xf32>
    %3 = vector.extract_strided_slice %2 {offsets = [0, 0], sizes = [32, 96], strides = [1, 1]} : vector<64x96xf32> to vector<32x96xf32>
    %4 = vector.extract_strided_slice %2 {offsets = [32, 0], sizes = [32, 96], strides = [1, 1]} : vector<64x96xf32> to vector<32x96xf32>
    %c0_5 = arith.constant 0 : index
    %c0_6 = arith.constant 0 : index
    %5 = vector.load %arg5[%c0_5, %c0_6] : memref<64x16xf32, #tpu.memory_space<vmem>>, vector<64x16xf32>
    %6 = vector.extract_strided_slice %5 {offsets = [0, 0], sizes = [32, 16], strides = [1, 1]} : vector<64x16xf32> to vector<32x16xf32>
    %7 = vector.extract_strided_slice %5 {offsets = [32, 0], sizes = [32, 16], strides = [1, 1]} : vector<64x16xf32> to vector<32x16xf32>
    %c0_7 = arith.constant 0 : index
    %c0_8 = arith.constant 0 : index
    %8 = vector.load %arg6[%c0_7, %c0_8] : memref<4x96xf32, #tpu.memory_space<vmem>>, vector<4x96xf32>
    %9 = vector.extract_strided_slice %8 {offsets = [0, 0], sizes = [1, 32], strides = [1, 1]} : vector<4x96xf32> to vector<1x32xf32>
    %10 = vector.extract_strided_slice %8 {offsets = [1, 0], sizes = [1, 32], strides = [1, 1]} : vector<4x96xf32> to vector<1x32xf32>
    %11 = vector.extract_strided_slice %8 {offsets = [2, 0], sizes = [1, 96], strides = [1, 1]} : vector<4x96xf32> to vector<1x96xf32>
    %12 = vector.extract_strided_slice %8 {offsets = [3, 0], sizes = [1, 16], strides = [1, 1]} : vector<4x96xf32> to vector<1x16xf32>
    %c0_9 = arith.constant 0 : index
    %c0_10 = arith.constant 0 : index
    %c0_11 = arith.constant 0 : index
    %13 = vector.load %arg1[%c0_9, %c0_10, %c0_11] : memref<8x2x4xf32, #tpu.memory_space<vmem>>, vector<1x2x4xf32>
    %14 = vector.shape_cast %13 : vector<1x2x4xf32> to vector<2x4xf32>
    %cst = arith.constant dense<0.000000e+00> : vector<2x32xf32>
    %15 = tpu.matmul %14, %0, %cst {dimension_numbers = #tpu.dot_dimension_numbers<[1], [0], [0], [1], [0, 0, 1, 1], [], []>} : vector<2x4xf32>, vector<4x32xf32>, vector<2x32xf32> -> vector<2x32xf32>
    %16 = vector.broadcast %9 : vector<1x32xf32> to vector<2x32xf32>
    %17 = arith.addf %15, %16 : vector<2x32xf32>
    %cst_12 = arith.constant 0.000000e+00 : f32
    %18 = vector.broadcast %cst_12 : f32 to vector<2x32xf32>
    %19 = arith.maximumf %17, %18 : vector<2x32xf32>
    %cst_13 = arith.constant dense<0.000000e+00> : vector<2x32xf32>
    %20 = tpu.matmul %19, %1, %cst_13 {dimension_numbers = #tpu.dot_dimension_numbers<[1], [0], [0], [1], [0, 0, 1, 1], [], []>} : vector<2x32xf32>, vector<32x32xf32>, vector<2x32xf32> -> vector<2x32xf32>
    %21 = vector.broadcast %10 : vector<1x32xf32> to vector<2x32xf32>
    %22 = arith.addf %20, %21 : vector<2x32xf32>
    %c0_14 = arith.constant 0 : index
    %c0_15 = arith.constant 0 : index
    %c0_16 = arith.constant 0 : index
    %23 = vector.load %arg8[%c0_14, %c0_15, %c0_16] : memref<8x2x32xf32, #tpu.memory_space<vmem>>, vector<1x2x32xf32>
    %24 = vector.shape_cast %23 : vector<1x2x32xf32> to vector<2x32xf32>
    %25 = vector.shape_cast %22 : vector<2x32xf32> to vector<1x2x32xf32>
    tpu.vector_store %arg8[%c0_14, %c0_15, %c0_16], %25 {strides = array<i32>} : memref<8x2x32xf32, #tpu.memory_space<vmem>>, vector<1x2x32xf32>,
    %c1 = arith.constant 1 : index
    %c0_17 = arith.constant 0 : index
    %c0_18 = arith.constant 0 : index
    %26 = vector.load %arg1[%c1, %c0_17, %c0_18] : memref<8x2x4xf32, #tpu.memory_space<vmem>>, vector<1x2x4xf32>
    %27 = vector.shape_cast %26 : vector<1x2x4xf32> to vector<2x4xf32>
    %cst_19 = arith.constant dense<0.000000e+00> : vector<2x32xf32>
    %28 = tpu.matmul %27, %0, %cst_19 {dimension_numbers = #tpu.dot_dimension_numbers<[1], [0], [0], [1], [0, 0, 1, 1], [], []>} : vector<2x4xf32>, vector<4x32xf32>, vector<2x32xf32> -> vector<2x32xf32>
    %29 = vector.broadcast %9 : vector<1x32xf32> to vector<2x32xf32>
    %30 = arith.addf %28, %29 : vector<2x32xf32>
    %cst_20 = arith.constant 0.000000e+00 : f32
    %31 = vector.broadcast %cst_20 : f32 to vector<2x32xf32>
    %32 = arith.maximumf %30, %31 : vector<2x32xf32>
    %cst_21 = arith.constant dense<0.000000e+00> : vector<2x32xf32>
    %33 = tpu.matmul %32, %1, %cst_21 {dimension_numbers = #tpu.dot_dimension_numbers<[1], [0], [0], [1], [0, 0, 1, 1], [], []>} : vector<2x32xf32>, vector<32x32xf32>, vector<2x32xf32> -> vector<2x32xf32>
    %34 = vector.broadcast %10 : vector<1x32xf32> to vector<2x32xf32>
    %35 = arith.addf %33, %34 : vector<2x32xf32>
    %c1_22 = arith.constant 1 : index
    %c0_23 = arith.constant 0 : index
    %c0_24 = arith.constant 0 : index
    %36 = vector.load %arg8[%c1_22, %c0_23, %c0_24] : memref<8x2x32xf32, #tpu.memory_space<vmem>>, vector<1x2x32xf32>
    %37 = vector.shape_cast %36 : vector<1x2x32xf32> to vector<2x32xf32>
    %38 = vector.shape_cast %35 : vector<2x32xf32> to vector<1x2x32xf32>
    tpu.vector_store %arg8[%c1_22, %c0_23, %c0_24], %38 {strides = array<i32>} : memref<8x2x32xf32, #tpu.memory_space<vmem>>, vector<1x2x32xf32>,
    %c2 = arith.constant 2 : index
    %c0_25 = arith.constant 0 : index
    %c0_26 = arith.constant 0 : index
    %39 = vector.load %arg1[%c2, %c0_25, %c0_26] : memref<8x2x4xf32, #tpu.memory_space<vmem>>, vector<1x2x4xf32>
    %40 = vector.shape_cast %39 : vector<1x2x4xf32> to vector<2x4xf32>
    %cst_27 = arith.constant dense<0.000000e+00> : vector<2x32xf32>
    %41 = tpu.matmul %40, %0, %cst_27 {dimension_numbers = #tpu.dot_dimension_numbers<[1], [0], [0], [1], [0, 0, 1, 1], [], []>} : vector<2x4xf32>, vector<4x32xf32>, vector<2x32xf32> -> vector<2x32xf32>
    %42 = vector.broadcast %9 : vector<1x32xf32> to vector<2x32xf32>
    %43 = arith.addf %41, %42 : vector<2x32xf32>
    %cst_28 = arith.constant 0.000000e+00 : f32
    %44 = vector.broadcast %cst_28 : f32 to vector<2x32xf32>
    %45 = arith.maximumf %43, %44 : vector<2x32xf32>
    %cst_29 = arith.constant dense<0.000000e+00> : vector<2x32xf32>
    %46 = tpu.matmul %45, %1, %cst_29 {dimension_numbers = #tpu.dot_dimension_numbers<[1], [0], [0], [1], [0, 0, 1, 1], [], []>} : vector<2x32xf32>, vector<32x32xf32>, vector<2x32xf32> -> vector<2x32xf32>
    %47 = vector.broadcast %10 : vector<1x32xf32> to vector<2x32xf32>
    %48 = arith.addf %46, %47 : vector<2x32xf32>
    %c2_30 = arith.constant 2 : index
    %c0_31 = arith.constant 0 : index
    %c0_32 = arith.constant 0 : index
    %49 = vector.load %arg8[%c2_30, %c0_31, %c0_32] : memref<8x2x32xf32, #tpu.memory_space<vmem>>, vector<1x2x32xf32>
    %50 = vector.shape_cast %49 : vector<1x2x32xf32> to vector<2x32xf32>
    %51 = vector.shape_cast %48 : vector<2x32xf32> to vector<1x2x32xf32>
    tpu.vector_store %arg8[%c2_30, %c0_31, %c0_32], %51 {strides = array<i32>} : memref<8x2x32xf32, #tpu.memory_space<vmem>>, vector<1x2x32xf32>,
    %c3 = arith.constant 3 : index
    %c0_33 = arith.constant 0 : index
    %c0_34 = arith.constant 0 : index
    %52 = vector.load %arg1[%c3, %c0_33, %c0_34] : memref<8x2x4xf32, #tpu.memory_space<vmem>>, vector<1x2x4xf32>
    %53 = vector.shape_cast %52 : vector<1x2x4xf32> to vector<2x4xf32>
    %cst_35 = arith.constant dense<0.000000e+00> : vector<2x32xf32>
    %54 = tpu.matmul %53, %0, %cst_35 {dimension_numbers = #tpu.dot_dimension_numbers<[1], [0], [0], [1], [0, 0, 1, 1], [], []>} : vector<2x4xf32>, vector<4x32xf32>, vector<2x32xf32> -> vector<2x32xf32>
    %55 = vector.broadcast %9 : vector<1x32xf32> to vector<2x32xf32>
    %56 = arith.addf %54, %55 : vector<2x32xf32>
    %cst_36 = arith.constant 0.000000e+00 : f32
    %57 = vector.broadcast %cst_36 : f32 to vector<2x32xf32>
    %58 = arith.maximumf %56, %57 : vector<2x32xf32>
    %cst_37 = arith.constant dense<0.000000e+00> : vector<2x32xf32>
    %59 = tpu.matmul %58, %1, %cst_37 {dimension_numbers = #tpu.dot_dimension_numbers<[1], [0], [0], [1], [0, 0, 1, 1], [], []>} : vector<2x32xf32>, vector<32x32xf32>, vector<2x32xf32> -> vector<2x32xf32>
    %60 = vector.broadcast %10 : vector<1x32xf32> to vector<2x32xf32>
    %61 = arith.addf %59, %60 : vector<2x32xf32>
    %c3_38 = arith.constant 3 : index
    %c0_39 = arith.constant 0 : index
    %c0_40 = arith.constant 0 : index
    %62 = vector.load %arg8[%c3_38, %c0_39, %c0_40] : memref<8x2x32xf32, #tpu.memory_space<vmem>>, vector<1x2x32xf32>
    %63 = vector.shape_cast %62 : vector<1x2x32xf32> to vector<2x32xf32>
    %64 = vector.shape_cast %61 : vector<2x32xf32> to vector<1x2x32xf32>
    tpu.vector_store %arg8[%c3_38, %c0_39, %c0_40], %64 {strides = array<i32>} : memref<8x2x32xf32, #tpu.memory_space<vmem>>, vector<1x2x32xf32>,
    %c4 = arith.constant 4 : index
    %c0_41 = arith.constant 0 : index
    %c0_42 = arith.constant 0 : index
    %65 = vector.load %arg1[%c4, %c0_41, %c0_42] : memref<8x2x4xf32, #tpu.memory_space<vmem>>, vector<1x2x4xf32>
    %66 = vector.shape_cast %65 : vector<1x2x4xf32> to vector<2x4xf32>
    %cst_43 = arith.constant dense<0.000000e+00> : vector<2x32xf32>
    %67 = tpu.matmul %66, %0, %cst_43 {dimension_numbers = #tpu.dot_dimension_numbers<[1], [0], [0], [1], [0, 0, 1, 1], [], []>} : vector<2x4xf32>, vector<4x32xf32>, vector<2x32xf32> -> vector<2x32xf32>
    %68 = vector.broadcast %9 : vector<1x32xf32> to vector<2x32xf32>
    %69 = arith.addf %67, %68 : vector<2x32xf32>
    %cst_44 = arith.constant 0.000000e+00 : f32
    %70 = vector.broadcast %cst_44 : f32 to vector<2x32xf32>
    %71 = arith.maximumf %69, %70 : vector<2x32xf32>
    %cst_45 = arith.constant dense<0.000000e+00> : vector<2x32xf32>
    %72 = tpu.matmul %71, %1, %cst_45 {dimension_numbers = #tpu.dot_dimension_numbers<[1], [0], [0], [1], [0, 0, 1, 1], [], []>} : vector<2x32xf32>, vector<32x32xf32>, vector<2x32xf32> -> vector<2x32xf32>
    %73 = vector.broadcast %10 : vector<1x32xf32> to vector<2x32xf32>
    %74 = arith.addf %72, %73 : vector<2x32xf32>
    %c4_46 = arith.constant 4 : index
    %c0_47 = arith.constant 0 : index
    %c0_48 = arith.constant 0 : index
    %75 = vector.load %arg8[%c4_46, %c0_47, %c0_48] : memref<8x2x32xf32, #tpu.memory_space<vmem>>, vector<1x2x32xf32>
    %76 = vector.shape_cast %75 : vector<1x2x32xf32> to vector<2x32xf32>
    %77 = vector.shape_cast %74 : vector<2x32xf32> to vector<1x2x32xf32>
    tpu.vector_store %arg8[%c4_46, %c0_47, %c0_48], %77 {strides = array<i32>} : memref<8x2x32xf32, #tpu.memory_space<vmem>>, vector<1x2x32xf32>,
    %c5 = arith.constant 5 : index
    %c0_49 = arith.constant 0 : index
    %c0_50 = arith.constant 0 : index
    %78 = vector.load %arg1[%c5, %c0_49, %c0_50] : memref<8x2x4xf32, #tpu.memory_space<vmem>>, vector<1x2x4xf32>
    %79 = vector.shape_cast %78 : vector<1x2x4xf32> to vector<2x4xf32>
    %cst_51 = arith.constant dense<0.000000e+00> : vector<2x32xf32>
    %80 = tpu.matmul %79, %0, %cst_51 {dimension_numbers = #tpu.dot_dimension_numbers<[1], [0], [0], [1], [0, 0, 1, 1], [], []>} : vector<2x4xf32>, vector<4x32xf32>, vector<2x32xf32> -> vector<2x32xf32>
    %81 = vector.broadcast %9 : vector<1x32xf32> to vector<2x32xf32>
    %82 = arith.addf %80, %81 : vector<2x32xf32>
    %cst_52 = arith.constant 0.000000e+00 : f32
    %83 = vector.broadcast %cst_52 : f32 to vector<2x32xf32>
    %84 = arith.maximumf %82, %83 : vector<2x32xf32>
    %cst_53 = arith.constant dense<0.000000e+00> : vector<2x32xf32>
    %85 = tpu.matmul %84, %1, %cst_53 {dimension_numbers = #tpu.dot_dimension_numbers<[1], [0], [0], [1], [0, 0, 1, 1], [], []>} : vector<2x32xf32>, vector<32x32xf32>, vector<2x32xf32> -> vector<2x32xf32>
    %86 = vector.broadcast %10 : vector<1x32xf32> to vector<2x32xf32>
    %87 = arith.addf %85, %86 : vector<2x32xf32>
    %c5_54 = arith.constant 5 : index
    %c0_55 = arith.constant 0 : index
    %c0_56 = arith.constant 0 : index
    %88 = vector.load %arg8[%c5_54, %c0_55, %c0_56] : memref<8x2x32xf32, #tpu.memory_space<vmem>>, vector<1x2x32xf32>
    %89 = vector.shape_cast %88 : vector<1x2x32xf32> to vector<2x32xf32>
    %90 = vector.shape_cast %87 : vector<2x32xf32> to vector<1x2x32xf32>
    tpu.vector_store %arg8[%c5_54, %c0_55, %c0_56], %90 {strides = array<i32>} : memref<8x2x32xf32, #tpu.memory_space<vmem>>, vector<1x2x32xf32>,
    %c6 = arith.constant 6 : index
    %c0_57 = arith.constant 0 : index
    %c0_58 = arith.constant 0 : index
    %91 = vector.load %arg1[%c6, %c0_57, %c0_58] : memref<8x2x4xf32, #tpu.memory_space<vmem>>, vector<1x2x4xf32>
    %92 = vector.shape_cast %91 : vector<1x2x4xf32> to vector<2x4xf32>
    %cst_59 = arith.constant dense<0.000000e+00> : vector<2x32xf32>
    %93 = tpu.matmul %92, %0, %cst_59 {dimension_numbers = #tpu.dot_dimension_numbers<[1], [0], [0], [1], [0, 0, 1, 1], [], []>} : vector<2x4xf32>, vector<4x32xf32>, vector<2x32xf32> -> vector<2x32xf32>
    %94 = vector.broadcast %9 : vector<1x32xf32> to vector<2x32xf32>
    %95 = arith.addf %93, %94 : vector<2x32xf32>
    %cst_60 = arith.constant 0.000000e+00 : f32
    %96 = vector.broadcast %cst_60 : f32 to vector<2x32xf32>
    %97 = arith.maximumf %95, %96 : vector<2x32xf32>
    %cst_61 = arith.constant dense<0.000000e+00> : vector<2x32xf32>
    %98 = tpu.matmul %97, %1, %cst_61 {dimension_numbers = #tpu.dot_dimension_numbers<[1], [0], [0], [1], [0, 0, 1, 1], [], []>} : vector<2x32xf32>, vector<32x32xf32>, vector<2x32xf32> -> vector<2x32xf32>
    %99 = vector.broadcast %10 : vector<1x32xf32> to vector<2x32xf32>
    %100 = arith.addf %98, %99 : vector<2x32xf32>
    %c6_62 = arith.constant 6 : index
    %c0_63 = arith.constant 0 : index
    %c0_64 = arith.constant 0 : index
    %101 = vector.load %arg8[%c6_62, %c0_63, %c0_64] : memref<8x2x32xf32, #tpu.memory_space<vmem>>, vector<1x2x32xf32>
    %102 = vector.shape_cast %101 : vector<1x2x32xf32> to vector<2x32xf32>
    %103 = vector.shape_cast %100 : vector<2x32xf32> to vector<1x2x32xf32>
    tpu.vector_store %arg8[%c6_62, %c0_63, %c0_64], %103 {strides = array<i32>} : memref<8x2x32xf32, #tpu.memory_space<vmem>>, vector<1x2x32xf32>,
    %c7 = arith.constant 7 : index
    %c0_65 = arith.constant 0 : index
    %c0_66 = arith.constant 0 : index
    %104 = vector.load %arg1[%c7, %c0_65, %c0_66] : memref<8x2x4xf32, #tpu.memory_space<vmem>>, vector<1x2x4xf32>
    %105 = vector.shape_cast %104 : vector<1x2x4xf32> to vector<2x4xf32>
    %cst_67 = arith.constant dense<0.000000e+00> : vector<2x32xf32>
    %106 = tpu.matmul %105, %0, %cst_67 {dimension_numbers = #tpu.dot_dimension_numbers<[1], [0], [0], [1], [0, 0, 1, 1], [], []>} : vector<2x4xf32>, vector<4x32xf32>, vector<2x32xf32> -> vector<2x32xf32>
    %107 = vector.broadcast %9 : vector<1x32xf32> to vector<2x32xf32>
    %108 = arith.addf %106, %107 : vector<2x32xf32>
    %cst_68 = arith.constant 0.000000e+00 : f32
    %109 = vector.broadcast %cst_68 : f32 to vector<2x32xf32>
    %110 = arith.maximumf %108, %109 : vector<2x32xf32>
    %cst_69 = arith.constant dense<0.000000e+00> : vector<2x32xf32>
    %111 = tpu.matmul %110, %1, %cst_69 {dimension_numbers = #tpu.dot_dimension_numbers<[1], [0], [0], [1], [0, 0, 1, 1], [], []>} : vector<2x32xf32>, vector<32x32xf32>, vector<2x32xf32> -> vector<2x32xf32>
    %112 = vector.broadcast %10 : vector<1x32xf32> to vector<2x32xf32>
    %113 = arith.addf %111, %112 : vector<2x32xf32>
    %c7_70 = arith.constant 7 : index
    %c0_71 = arith.constant 0 : index
    %c0_72 = arith.constant 0 : index
    %114 = vector.load %arg8[%c7_70, %c0_71, %c0_72] : memref<8x2x32xf32, #tpu.memory_space<vmem>>, vector<1x2x32xf32>
    %115 = vector.shape_cast %114 : vector<1x2x32xf32> to vector<2x32xf32>
    %116 = vector.shape_cast %113 : vector<2x32xf32> to vector<1x2x32xf32>
    tpu.vector_store %arg8[%c7_70, %c0_71, %c0_72], %116 {strides = array<i32>} : memref<8x2x32xf32, #tpu.memory_space<vmem>>, vector<1x2x32xf32>,
    %c0_73 = arith.constant 0 : index
    %c0_74 = arith.constant 0 : index
    %c0_75 = arith.constant 0 : index
    %117 = vector.load %arg8[%c0_73, %c0_74, %c0_75] : memref<8x2x32xf32, #tpu.memory_space<vmem>>, vector<8x2x32xf32>
    %cst_76 = arith.constant 0.000000e+00 : f32
    %118 = vector.broadcast %cst_76 : f32 to vector<2x32xf32>
    %cst_77 = arith.constant 0.000000e+00 : f32
    %119 = vector.broadcast %cst_77 : f32 to vector<2x32xf32>
    %cst_78 = arith.constant dense<0.000000e+00> : vector<2x96xf32>
    %120 = tpu.matmul %118, %3, %cst_78 {dimension_numbers = #tpu.dot_dimension_numbers<[1], [0], [0], [1], [0, 0, 1, 1], [], []>} : vector<2x32xf32>, vector<32x96xf32>, vector<2x96xf32> -> vector<2x96xf32>
    %cst_79 = arith.constant dense<0.000000e+00> : vector<2x96xf32>
    %121 = tpu.matmul %119, %4, %cst_79 {dimension_numbers = #tpu.dot_dimension_numbers<[1], [0], [0], [1], [0, 0, 1, 1], [], []>} : vector<2x32xf32>, vector<32x96xf32>, vector<2x96xf32> -> vector<2x96xf32>
    %122 = arith.addf %120, %121 : vector<2x96xf32>
    %123 = vector.broadcast %11 : vector<1x96xf32> to vector<2x96xf32>
    %124 = arith.addf %122, %123 : vector<2x96xf32>
    %125 = vector.extract_strided_slice %124 {offsets = [0, 0], sizes = [2, 64], strides = [1, 1]} : vector<2x96xf32> to vector<2x64xf32>
    %126 = arith.negf %125 : vector<2x64xf32>
    %127 = math.exp %126 : vector<2x64xf32>
    %cst_80 = arith.constant 1.000000e+00 : f32
    %128 = vector.broadcast %cst_80 : f32 to vector<2x64xf32>
    %129 = arith.addf %128, %127 : vector<2x64xf32>
    %130 = arith.divf %128, %129 : vector<2x64xf32>
    %131 = vector.extract_strided_slice %130 {offsets = [0, 0], sizes = [2, 32], strides = [1, 1]} : vector<2x64xf32> to vector<2x32xf32>
    %132 = vector.extract_strided_slice %130 {offsets = [0, 32], sizes = [2, 32], strides = [1, 1]} : vector<2x64xf32> to vector<2x32xf32>
    %133 = vector.extract_strided_slice %124 {offsets = [0, 64], sizes = [2, 32], strides = [1, 1]} : vector<2x96xf32> to vector<2x32xf32>
    %134 = arith.mulf %131, %133 : vector<2x32xf32>
    %135 = math.tanh %134 : vector<2x32xf32>
    %cst_81 = arith.constant 1.000000e+00 : f32
    %136 = vector.broadcast %cst_81 : f32 to vector<2x32xf32>
    %137 = arith.subf %136, %132 : vector<2x32xf32>
    %138 = arith.mulf %137, %135 : vector<2x32xf32>
    %139 = arith.mulf %132, %118 : vector<2x32xf32>
    %140 = arith.addf %138, %139 : vector<2x32xf32>
    %141 = vector.shape_cast %140 : vector<2x32xf32> to vector<1x2x32xf32>
    %142 = vector.broadcast %141 : vector<1x2x32xf32> to vector<8x2x32xf32>
    %143 = arith.mulf %142, %117 : vector<8x2x32xf32>
    %cst_82 = arith.constant dense<0.000000e+00> : vector<8x2xf32>
    %144 = vector.multi_reduction <add>, %143, %cst_82 [2] : vector<8x2x32xf32> to vector<8x2xf32>
    %145 = vector.shape_cast %144 : vector<8x2xf32> to vector<8x2x1xf32>
    %cst_83 = arith.constant dense<0xFF800000> : vector<2x1xf32>
    %146 = vector.multi_reduction <maximumf>, %145, %cst_83 [0] : vector<8x2x1xf32> to vector<2x1xf32>
    %147 = vector.shape_cast %146 : vector<2x1xf32> to vector<1x2x1xf32>
    %148 = vector.broadcast %147 : vector<1x2x1xf32> to vector<8x2x1xf32>
    %149 = arith.subf %145, %148 : vector<8x2x1xf32>
    %150 = math.exp %149 : vector<8x2x1xf32>
    %cst_84 = arith.constant dense<0.000000e+00> : vector<2x1xf32>
    %151 = vector.multi_reduction <add>, %150, %cst_84 [0] : vector<8x2x1xf32> to vector<2x1xf32>
    %152 = vector.shape_cast %151 : vector<2x1xf32> to vector<1x2x1xf32>
    %153 = vector.broadcast %152 : vector<1x2x1xf32> to vector<8x2x1xf32>
    %154 = arith.divf %150, %153 : vector<8x2x1xf32>
    %155 = vector.broadcast %154 : vector<8x2x1xf32> to vector<8x2x32xf32>
    %156 = arith.mulf %155, %117 : vector<8x2x32xf32>
    %cst_85 = arith.constant dense<0.000000e+00> : vector<2x32xf32>
    %157 = vector.multi_reduction <add>, %156, %cst_85 [0] : vector<8x2x32xf32> to vector<2x32xf32>
    %cst_86 = arith.constant dense<0.000000e+00> : vector<2x96xf32>
    %158 = tpu.matmul %140, %3, %cst_86 {dimension_numbers = #tpu.dot_dimension_numbers<[1], [0], [0], [1], [0, 0, 1, 1], [], []>} : vector<2x32xf32>, vector<32x96xf32>, vector<2x96xf32> -> vector<2x96xf32>
    %cst_87 = arith.constant dense<0.000000e+00> : vector<2x96xf32>
    %159 = tpu.matmul %157, %4, %cst_87 {dimension_numbers = #tpu.dot_dimension_numbers<[1], [0], [0], [1], [0, 0, 1, 1], [], []>} : vector<2x32xf32>, vector<32x96xf32>, vector<2x96xf32> -> vector<2x96xf32>
    %160 = arith.addf %158, %159 : vector<2x96xf32>
    %161 = vector.broadcast %11 : vector<1x96xf32> to vector<2x96xf32>
    %162 = arith.addf %160, %161 : vector<2x96xf32>
    %163 = vector.extract_strided_slice %162 {offsets = [0, 0], sizes = [2, 64], strides = [1, 1]} : vector<2x96xf32> to vector<2x64xf32>
    %164 = arith.negf %163 : vector<2x64xf32>
    %165 = math.exp %164 : vector<2x64xf32>
    %cst_88 = arith.constant 1.000000e+00 : f32
    %166 = vector.broadcast %cst_88 : f32 to vector<2x64xf32>
    %167 = arith.addf %166, %165 : vector<2x64xf32>
    %168 = arith.divf %166, %167 : vector<2x64xf32>
    %169 = vector.extract_strided_slice %168 {offsets = [0, 0], sizes = [2, 32], strides = [1, 1]} : vector<2x64xf32> to vector<2x32xf32>
    %170 = vector.extract_strided_slice %168 {offsets = [0, 32], sizes = [2, 32], strides = [1, 1]} : vector<2x64xf32> to vector<2x32xf32>
    %171 = vector.extract_strided_slice %162 {offsets = [0, 64], sizes = [2, 32], strides = [1, 1]} : vector<2x96xf32> to vector<2x32xf32>
    %172 = arith.mulf %169, %171 : vector<2x32xf32>
    %173 = math.tanh %172 : vector<2x32xf32>
    %cst_89 = arith.constant 1.000000e+00 : f32
    %174 = vector.broadcast %cst_89 : f32 to vector<2x32xf32>
    %175 = arith.subf %174, %170 : vector<2x32xf32>
    %176 = arith.mulf %175, %173 : vector<2x32xf32>
    %177 = arith.mulf %170, %140 : vector<2x32xf32>
    %178 = arith.addf %176, %177 : vector<2x32xf32>
    %179 = vector.shape_cast %178 : vector<2x32xf32> to vector<1x2x32xf32>
    %180 = vector.broadcast %179 : vector<1x2x32xf32> to vector<8x2x32xf32>
    %181 = arith.mulf %180, %117 : vector<8x2x32xf32>
    %cst_90 = arith.constant dense<0.000000e+00> : vector<8x2xf32>
    %182 = vector.multi_reduction <add>, %181, %cst_90 [2] : vector<8x2x32xf32> to vector<8x2xf32>
    %183 = vector.shape_cast %182 : vector<8x2xf32> to vector<8x2x1xf32>
    %cst_91 = arith.constant dense<0xFF800000> : vector<2x1xf32>
    %184 = vector.multi_reduction <maximumf>, %183, %cst_91 [0] : vector<8x2x1xf32> to vector<2x1xf32>
    %185 = vector.shape_cast %184 : vector<2x1xf32> to vector<1x2x1xf32>
    %186 = vector.broadcast %185 : vector<1x2x1xf32> to vector<8x2x1xf32>
    %187 = arith.subf %183, %186 : vector<8x2x1xf32>
    %188 = math.exp %187 : vector<8x2x1xf32>
    %cst_92 = arith.constant dense<0.000000e+00> : vector<2x1xf32>
    %189 = vector.multi_reduction <add>, %188, %cst_92 [0] : vector<8x2x1xf32> to vector<2x1xf32>
    %190 = vector.shape_cast %189 : vector<2x1xf32> to vector<1x2x1xf32>
    %191 = vector.broadcast %190 : vector<1x2x1xf32> to vector<8x2x1xf32>
    %192 = arith.divf %188, %191 : vector<8x2x1xf32>
    %193 = vector.broadcast %192 : vector<8x2x1xf32> to vector<8x2x32xf32>
    %194 = arith.mulf %193, %117 : vector<8x2x32xf32>
    %cst_93 = arith.constant dense<0.000000e+00> : vector<2x32xf32>
    %195 = vector.multi_reduction <add>, %194, %cst_93 [0] : vector<8x2x32xf32> to vector<2x32xf32>
    %cst_94 = arith.constant dense<0.000000e+00> : vector<2x96xf32>
    %196 = tpu.matmul %178, %3, %cst_94 {dimension_numbers = #tpu.dot_dimension_numbers<[1], [0], [0], [1], [0, 0, 1, 1], [], []>} : vector<2x32xf32>, vector<32x96xf32>, vector<2x96xf32> -> vector<2x96xf32>
    %cst_95 = arith.constant dense<0.000000e+00> : vector<2x96xf32>
    %197 = tpu.matmul %195, %4, %cst_95 {dimension_numbers = #tpu.dot_dimension_numbers<[1], [0], [0], [1], [0, 0, 1, 1], [], []>} : vector<2x32xf32>, vector<32x96xf32>, vector<2x96xf32> -> vector<2x96xf32>
    %198 = arith.addf %196, %197 : vector<2x96xf32>
    %199 = vector.broadcast %11 : vector<1x96xf32> to vector<2x96xf32>
    %200 = arith.addf %198, %199 : vector<2x96xf32>
    %201 = vector.extract_strided_slice %200 {offsets = [0, 0], sizes = [2, 64], strides = [1, 1]} : vector<2x96xf32> to vector<2x64xf32>
    %202 = arith.negf %201 : vector<2x64xf32>
    %203 = math.exp %202 : vector<2x64xf32>
    %cst_96 = arith.constant 1.000000e+00 : f32
    %204 = vector.broadcast %cst_96 : f32 to vector<2x64xf32>
    %205 = arith.addf %204, %203 : vector<2x64xf32>
    %206 = arith.divf %204, %205 : vector<2x64xf32>
    %207 = vector.extract_strided_slice %206 {offsets = [0, 0], sizes = [2, 32], strides = [1, 1]} : vector<2x64xf32> to vector<2x32xf32>
    %208 = vector.extract_strided_slice %206 {offsets = [0, 32], sizes = [2, 32], strides = [1, 1]} : vector<2x64xf32> to vector<2x32xf32>
    %209 = vector.extract_strided_slice %200 {offsets = [0, 64], sizes = [2, 32], strides = [1, 1]} : vector<2x96xf32> to vector<2x32xf32>
    %210 = arith.mulf %207, %209 : vector<2x32xf32>
    %211 = math.tanh %210 : vector<2x32xf32>
    %cst_97 = arith.constant 1.000000e+00 : f32
    %212 = vector.broadcast %cst_97 : f32 to vector<2x32xf32>
    %213 = arith.subf %212, %208 : vector<2x32xf32>
    %214 = arith.mulf %213, %211 : vector<2x32xf32>
    %215 = arith.mulf %208, %178 : vector<2x32xf32>
    %216 = arith.addf %214, %215 : vector<2x32xf32>
    %217 = vector.shape_cast %216 : vector<2x32xf32> to vector<1x2x32xf32>
    %218 = vector.broadcast %217 : vector<1x2x32xf32> to vector<8x2x32xf32>
    %219 = arith.mulf %218, %117 : vector<8x2x32xf32>
    %cst_98 = arith.constant dense<0.000000e+00> : vector<8x2xf32>
    %220 = vector.multi_reduction <add>, %219, %cst_98 [2] : vector<8x2x32xf32> to vector<8x2xf32>
    %221 = vector.shape_cast %220 : vector<8x2xf32> to vector<8x2x1xf32>
    %cst_99 = arith.constant dense<0xFF800000> : vector<2x1xf32>
    %222 = vector.multi_reduction <maximumf>, %221, %cst_99 [0] : vector<8x2x1xf32> to vector<2x1xf32>
    %223 = vector.shape_cast %222 : vector<2x1xf32> to vector<1x2x1xf32>
    %224 = vector.broadcast %223 : vector<1x2x1xf32> to vector<8x2x1xf32>
    %225 = arith.subf %221, %224 : vector<8x2x1xf32>
    %226 = math.exp %225 : vector<8x2x1xf32>
    %cst_100 = arith.constant dense<0.000000e+00> : vector<2x1xf32>
    %227 = vector.multi_reduction <add>, %226, %cst_100 [0] : vector<8x2x1xf32> to vector<2x1xf32>
    %228 = vector.shape_cast %227 : vector<2x1xf32> to vector<1x2x1xf32>
    %229 = vector.broadcast %228 : vector<1x2x1xf32> to vector<8x2x1xf32>
    %230 = arith.divf %226, %229 : vector<8x2x1xf32>
    %231 = vector.broadcast %230 : vector<8x2x1xf32> to vector<8x2x32xf32>
    %232 = arith.mulf %231, %117 : vector<8x2x32xf32>
    %cst_101 = arith.constant dense<0.000000e+00> : vector<2x32xf32>
    %233 = vector.multi_reduction <add>, %232, %cst_101 [0] : vector<8x2x32xf32> to vector<2x32xf32>
    %cst_102 = arith.constant dense<0.000000e+00> : vector<2x96xf32>
    %234 = tpu.matmul %216, %3, %cst_102 {dimension_numbers = #tpu.dot_dimension_numbers<[1], [0], [0], [1], [0, 0, 1, 1], [], []>} : vector<2x32xf32>, vector<32x96xf32>, vector<2x96xf32> -> vector<2x96xf32>
    %cst_103 = arith.constant dense<0.000000e+00> : vector<2x96xf32>
    %235 = tpu.matmul %233, %4, %cst_103 {dimension_numbers = #tpu.dot_dimension_numbers<[1], [0], [0], [1], [0, 0, 1, 1], [], []>} : vector<2x32xf32>, vector<32x96xf32>, vector<2x96xf32> -> vector<2x96xf32>
    %236 = arith.addf %234, %235 : vector<2x96xf32>
    %237 = vector.broadcast %11 : vector<1x96xf32> to vector<2x96xf32>
    %238 = arith.addf %236, %237 : vector<2x96xf32>
    %239 = vector.extract_strided_slice %238 {offsets = [0, 0], sizes = [2, 64], strides = [1, 1]} : vector<2x96xf32> to vector<2x64xf32>
    %240 = arith.negf %239 : vector<2x64xf32>
    %241 = math.exp %240 : vector<2x64xf32>
    %cst_104 = arith.constant 1.000000e+00 : f32
    %242 = vector.broadcast %cst_104 : f32 to vector<2x64xf32>
    %243 = arith.addf %242, %241 : vector<2x64xf32>
    %244 = arith.divf %242, %243 : vector<2x64xf32>
    %245 = vector.extract_strided_slice %244 {offsets = [0, 0], sizes = [2, 32], strides = [1, 1]} : vector<2x64xf32> to vector<2x32xf32>
    %246 = vector.extract_strided_slice %244 {offsets = [0, 32], sizes = [2, 32], strides = [1, 1]} : vector<2x64xf32> to vector<2x32xf32>
    %247 = vector.extract_strided_slice %238 {offsets = [0, 64], sizes = [2, 32], strides = [1, 1]} : vector<2x96xf32> to vector<2x32xf32>
    %248 = arith.mulf %245, %247 : vector<2x32xf32>
    %249 = math.tanh %248 : vector<2x32xf32>
    %cst_105 = arith.constant 1.000000e+00 : f32
    %250 = vector.broadcast %cst_105 : f32 to vector<2x32xf32>
    %251 = arith.subf %250, %246 : vector<2x32xf32>
    %252 = arith.mulf %251, %249 : vector<2x32xf32>
    %253 = arith.mulf %246, %216 : vector<2x32xf32>
    %254 = arith.addf %252, %253 : vector<2x32xf32>
    %255 = vector.shape_cast %254 : vector<2x32xf32> to vector<1x2x32xf32>
    %256 = vector.broadcast %255 : vector<1x2x32xf32> to vector<8x2x32xf32>
    %257 = arith.mulf %256, %117 : vector<8x2x32xf32>
    %cst_106 = arith.constant dense<0.000000e+00> : vector<8x2xf32>
    %258 = vector.multi_reduction <add>, %257, %cst_106 [2] : vector<8x2x32xf32> to vector<8x2xf32>
    %259 = vector.shape_cast %258 : vector<8x2xf32> to vector<8x2x1xf32>
    %cst_107 = arith.constant dense<0xFF800000> : vector<2x1xf32>
    %260 = vector.multi_reduction <maximumf>, %259, %cst_107 [0] : vector<8x2x1xf32> to vector<2x1xf32>
    %261 = vector.shape_cast %260 : vector<2x1xf32> to vector<1x2x1xf32>
    %262 = vector.broadcast %261 : vector<1x2x1xf32> to vector<8x2x1xf32>
    %263 = arith.subf %259, %262 : vector<8x2x1xf32>
    %264 = math.exp %263 : vector<8x2x1xf32>
    %cst_108 = arith.constant dense<0.000000e+00> : vector<2x1xf32>
    %265 = vector.multi_reduction <add>, %264, %cst_108 [0] : vector<8x2x1xf32> to vector<2x1xf32>
    %266 = vector.shape_cast %265 : vector<2x1xf32> to vector<1x2x1xf32>
    %267 = vector.broadcast %266 : vector<1x2x1xf32> to vector<8x2x1xf32>
    %268 = arith.divf %264, %267 : vector<8x2x1xf32>
    %269 = vector.broadcast %268 : vector<8x2x1xf32> to vector<8x2x32xf32>
    %270 = arith.mulf %269, %117 : vector<8x2x32xf32>
    %cst_109 = arith.constant dense<0.000000e+00> : vector<2x32xf32>
    %271 = vector.multi_reduction <add>, %270, %cst_109 [0] : vector<8x2x32xf32> to vector<2x32xf32>
    %cst_110 = arith.constant dense<0.000000e+00> : vector<2x96xf32>
    %272 = tpu.matmul %254, %3, %cst_110 {dimension_numbers = #tpu.dot_dimension_numbers<[1], [0], [0], [1], [0, 0, 1, 1], [], []>} : vector<2x32xf32>, vector<32x96xf32>, vector<2x96xf32> -> vector<2x96xf32>
    %cst_111 = arith.constant dense<0.000000e+00> : vector<2x96xf32>
    %273 = tpu.matmul %271, %4, %cst_111 {dimension_numbers = #tpu.dot_dimension_numbers<[1], [0], [0], [1], [0, 0, 1, 1], [], []>} : vector<2x32xf32>, vector<32x96xf32>, vector<2x96xf32> -> vector<2x96xf32>
    %274 = arith.addf %272, %273 : vector<2x96xf32>
    %275 = vector.broadcast %11 : vector<1x96xf32> to vector<2x96xf32>
    %276 = arith.addf %274, %275 : vector<2x96xf32>
    %277 = vector.extract_strided_slice %276 {offsets = [0, 0], sizes = [2, 64], strides = [1, 1]} : vector<2x96xf32> to vector<2x64xf32>
    %278 = arith.negf %277 : vector<2x64xf32>
    %279 = math.exp %278 : vector<2x64xf32>
    %cst_112 = arith.constant 1.000000e+00 : f32
    %280 = vector.broadcast %cst_112 : f32 to vector<2x64xf32>
    %281 = arith.addf %280, %279 : vector<2x64xf32>
    %282 = arith.divf %280, %281 : vector<2x64xf32>
    %283 = vector.extract_strided_slice %282 {offsets = [0, 0], sizes = [2, 32], strides = [1, 1]} : vector<2x64xf32> to vector<2x32xf32>
    %284 = vector.extract_strided_slice %282 {offsets = [0, 32], sizes = [2, 32], strides = [1, 1]} : vector<2x64xf32> to vector<2x32xf32>
    %285 = vector.extract_strided_slice %276 {offsets = [0, 64], sizes = [2, 32], strides = [1, 1]} : vector<2x96xf32> to vector<2x32xf32>
    %286 = arith.mulf %283, %285 : vector<2x32xf32>
    %287 = math.tanh %286 : vector<2x32xf32>
    %cst_113 = arith.constant 1.000000e+00 : f32
    %288 = vector.broadcast %cst_113 : f32 to vector<2x32xf32>
    %289 = arith.subf %288, %284 : vector<2x32xf32>
    %290 = arith.mulf %289, %287 : vector<2x32xf32>
    %291 = arith.mulf %284, %254 : vector<2x32xf32>
    %292 = arith.addf %290, %291 : vector<2x32xf32>
    %293 = vector.shape_cast %292 : vector<2x32xf32> to vector<1x2x32xf32>
    %294 = vector.broadcast %293 : vector<1x2x32xf32> to vector<8x2x32xf32>
    %295 = arith.mulf %294, %117 : vector<8x2x32xf32>
    %cst_114 = arith.constant dense<0.000000e+00> : vector<8x2xf32>
    %296 = vector.multi_reduction <add>, %295, %cst_114 [2] : vector<8x2x32xf32> to vector<8x2xf32>
    %297 = vector.shape_cast %296 : vector<8x2xf32> to vector<8x2x1xf32>
    %cst_115 = arith.constant dense<0xFF800000> : vector<2x1xf32>
    %298 = vector.multi_reduction <maximumf>, %297, %cst_115 [0] : vector<8x2x1xf32> to vector<2x1xf32>
    %299 = vector.shape_cast %298 : vector<2x1xf32> to vector<1x2x1xf32>
    %300 = vector.broadcast %299 : vector<1x2x1xf32> to vector<8x2x1xf32>
    %301 = arith.subf %297, %300 : vector<8x2x1xf32>
    %302 = math.exp %301 : vector<8x2x1xf32>
    %cst_116 = arith.constant dense<0.000000e+00> : vector<2x1xf32>
    %303 = vector.multi_reduction <add>, %302, %cst_116 [0] : vector<8x2x1xf32> to vector<2x1xf32>
    %304 = vector.shape_cast %303 : vector<2x1xf32> to vector<1x2x1xf32>
    %305 = vector.broadcast %304 : vector<1x2x1xf32> to vector<8x2x1xf32>
    %306 = arith.divf %302, %305 : vector<8x2x1xf32>
    %307 = vector.broadcast %306 : vector<8x2x1xf32> to vector<8x2x32xf32>
    %308 = arith.mulf %307, %117 : vector<8x2x32xf32>
    %cst_117 = arith.constant dense<0.000000e+00> : vector<2x32xf32>
    %309 = vector.multi_reduction <add>, %308, %cst_117 [0] : vector<8x2x32xf32> to vector<2x32xf32>
    %cst_118 = arith.constant dense<0.000000e+00> : vector<2x96xf32>
    %310 = tpu.matmul %292, %3, %cst_118 {dimension_numbers = #tpu.dot_dimension_numbers<[1], [0], [0], [1], [0, 0, 1, 1], [], []>} : vector<2x32xf32>, vector<32x96xf32>, vector<2x96xf32> -> vector<2x96xf32>
    %cst_119 = arith.constant dense<0.000000e+00> : vector<2x96xf32>
    %311 = tpu.matmul %309, %4, %cst_119 {dimension_numbers = #tpu.dot_dimension_numbers<[1], [0], [0], [1], [0, 0, 1, 1], [], []>} : vector<2x32xf32>, vector<32x96xf32>, vector<2x96xf32> -> vector<2x96xf32>
    %312 = arith.addf %310, %311 : vector<2x96xf32>
    %313 = vector.broadcast %11 : vector<1x96xf32> to vector<2x96xf32>
    %314 = arith.addf %312, %313 : vector<2x96xf32>
    %315 = vector.extract_strided_slice %314 {offsets = [0, 0], sizes = [2, 64], strides = [1, 1]} : vector<2x96xf32> to vector<2x64xf32>
    %316 = arith.negf %315 : vector<2x64xf32>
    %317 = math.exp %316 : vector<2x64xf32>
    %cst_120 = arith.constant 1.000000e+00 : f32
    %318 = vector.broadcast %cst_120 : f32 to vector<2x64xf32>
    %319 = arith.addf %318, %317 : vector<2x64xf32>
    %320 = arith.divf %318, %319 : vector<2x64xf32>
    %321 = vector.extract_strided_slice %320 {offsets = [0, 0], sizes = [2, 32], strides = [1, 1]} : vector<2x64xf32> to vector<2x32xf32>
    %322 = vector.extract_strided_slice %320 {offsets = [0, 32], sizes = [2, 32], strides = [1, 1]} : vector<2x64xf32> to vector<2x32xf32>
    %323 = vector.extract_strided_slice %314 {offsets = [0, 64], sizes = [2, 32], strides = [1, 1]} : vector<2x96xf32> to vector<2x32xf32>
    %324 = arith.mulf %321, %323 : vector<2x32xf32>
    %325 = math.tanh %324 : vector<2x32xf32>
    %cst_121 = arith.constant 1.000000e+00 : f32
    %326 = vector.broadcast %cst_121 : f32 to vector<2x32xf32>
    %327 = arith.subf %326, %322 : vector<2x32xf32>
    %328 = arith.mulf %327, %325 : vector<2x32xf32>
    %329 = arith.mulf %322, %292 : vector<2x32xf32>
    %330 = arith.addf %328, %329 : vector<2x32xf32>
    %331 = vector.shape_cast %330 : vector<2x32xf32> to vector<1x2x32xf32>
    %332 = vector.broadcast %331 : vector<1x2x32xf32> to vector<8x2x32xf32>
    %333 = arith.mulf %332, %117 : vector<8x2x32xf32>
    %cst_122 = arith.constant dense<0.000000e+00> : vector<8x2xf32>
    %334 = vector.multi_reduction <add>, %333, %cst_122 [2] : vector<8x2x32xf32> to vector<8x2xf32>
    %335 = vector.shape_cast %334 : vector<8x2xf32> to vector<8x2x1xf32>
    %cst_123 = arith.constant dense<0xFF800000> : vector<2x1xf32>
    %336 = vector.multi_reduction <maximumf>, %335, %cst_123 [0] : vector<8x2x1xf32> to vector<2x1xf32>
    %337 = vector.shape_cast %336 : vector<2x1xf32> to vector<1x2x1xf32>
    %338 = vector.broadcast %337 : vector<1x2x1xf32> to vector<8x2x1xf32>
    %339 = arith.subf %335, %338 : vector<8x2x1xf32>
    %340 = math.exp %339 : vector<8x2x1xf32>
    %cst_124 = arith.constant dense<0.000000e+00> : vector<2x1xf32>
    %341 = vector.multi_reduction <add>, %340, %cst_124 [0] : vector<8x2x1xf32> to vector<2x1xf32>
    %342 = vector.shape_cast %341 : vector<2x1xf32> to vector<1x2x1xf32>
    %343 = vector.broadcast %342 : vector<1x2x1xf32> to vector<8x2x1xf32>
    %344 = arith.divf %340, %343 : vector<8x2x1xf32>
    %345 = vector.broadcast %344 : vector<8x2x1xf32> to vector<8x2x32xf32>
    %346 = arith.mulf %345, %117 : vector<8x2x32xf32>
    %cst_125 = arith.constant dense<0.000000e+00> : vector<2x32xf32>
    %347 = vector.multi_reduction <add>, %346, %cst_125 [0] : vector<8x2x32xf32> to vector<2x32xf32>
    %cst_126 = arith.constant dense<0.000000e+00> : vector<2x96xf32>
    %348 = tpu.matmul %330, %3, %cst_126 {dimension_numbers = #tpu.dot_dimension_numbers<[1], [0], [0], [1], [0, 0, 1, 1], [], []>} : vector<2x32xf32>, vector<32x96xf32>, vector<2x96xf32> -> vector<2x96xf32>
    %cst_127 = arith.constant dense<0.000000e+00> : vector<2x96xf32>
    %349 = tpu.matmul %347, %4, %cst_127 {dimension_numbers = #tpu.dot_dimension_numbers<[1], [0], [0], [1], [0, 0, 1, 1], [], []>} : vector<2x32xf32>, vector<32x96xf32>, vector<2x96xf32> -> vector<2x96xf32>
    %350 = arith.addf %348, %349 : vector<2x96xf32>
    %351 = vector.broadcast %11 : vector<1x96xf32> to vector<2x96xf32>
    %352 = arith.addf %350, %351 : vector<2x96xf32>
    %353 = vector.extract_strided_slice %352 {offsets = [0, 0], sizes = [2, 64], strides = [1, 1]} : vector<2x96xf32> to vector<2x64xf32>
    %354 = arith.negf %353 : vector<2x64xf32>
    %355 = math.exp %354 : vector<2x64xf32>
    %cst_128 = arith.constant 1.000000e+00 : f32
    %356 = vector.broadcast %cst_128 : f32 to vector<2x64xf32>
    %357 = arith.addf %356, %355 : vector<2x64xf32>
    %358 = arith.divf %356, %357 : vector<2x64xf32>
    %359 = vector.extract_strided_slice %358 {offsets = [0, 0], sizes = [2, 32], strides = [1, 1]} : vector<2x64xf32> to vector<2x32xf32>
    %360 = vector.extract_strided_slice %358 {offsets = [0, 32], sizes = [2, 32], strides = [1, 1]} : vector<2x64xf32> to vector<2x32xf32>
    %361 = vector.extract_strided_slice %352 {offsets = [0, 64], sizes = [2, 32], strides = [1, 1]} : vector<2x96xf32> to vector<2x32xf32>
    %362 = arith.mulf %359, %361 : vector<2x32xf32>
    %363 = math.tanh %362 : vector<2x32xf32>
    %cst_129 = arith.constant 1.000000e+00 : f32
    %364 = vector.broadcast %cst_129 : f32 to vector<2x32xf32>
    %365 = arith.subf %364, %360 : vector<2x32xf32>
    %366 = arith.mulf %365, %363 : vector<2x32xf32>
    %367 = arith.mulf %360, %330 : vector<2x32xf32>
    %368 = arith.addf %366, %367 : vector<2x32xf32>
    %369 = vector.shape_cast %368 : vector<2x32xf32> to vector<1x2x32xf32>
    %370 = vector.broadcast %369 : vector<1x2x32xf32> to vector<8x2x32xf32>
    %371 = arith.mulf %370, %117 : vector<8x2x32xf32>
    %cst_130 = arith.constant dense<0.000000e+00> : vector<8x2xf32>
    %372 = vector.multi_reduction <add>, %371, %cst_130 [2] : vector<8x2x32xf32> to vector<8x2xf32>
    %373 = vector.shape_cast %372 : vector<8x2xf32> to vector<8x2x1xf32>
    %cst_131 = arith.constant dense<0xFF800000> : vector<2x1xf32>
    %374 = vector.multi_reduction <maximumf>, %373, %cst_131 [0] : vector<8x2x1xf32> to vector<2x1xf32>
    %375 = vector.shape_cast %374 : vector<2x1xf32> to vector<1x2x1xf32>
    %376 = vector.broadcast %375 : vector<1x2x1xf32> to vector<8x2x1xf32>
    %377 = arith.subf %373, %376 : vector<8x2x1xf32>
    %378 = math.exp %377 : vector<8x2x1xf32>
    %cst_132 = arith.constant dense<0.000000e+00> : vector<2x1xf32>
    %379 = vector.multi_reduction <add>, %378, %cst_132 [0] : vector<8x2x1xf32> to vector<2x1xf32>
    %380 = vector.shape_cast %379 : vector<2x1xf32> to vector<1x2x1xf32>
    %381 = vector.broadcast %380 : vector<1x2x1xf32> to vector<8x2x1xf32>
    %382 = arith.divf %378, %381 : vector<8x2x1xf32>
    %383 = vector.broadcast %382 : vector<8x2x1xf32> to vector<8x2x32xf32>
    %384 = arith.mulf %383, %117 : vector<8x2x32xf32>
    %cst_133 = arith.constant dense<0.000000e+00> : vector<2x32xf32>
    %385 = vector.multi_reduction <add>, %384, %cst_133 [0] : vector<8x2x32xf32> to vector<2x32xf32>
    %cst_134 = arith.constant dense<0.000000e+00> : vector<2x96xf32>
    %386 = tpu.matmul %368, %3, %cst_134 {dimension_numbers = #tpu.dot_dimension_numbers<[1], [0], [0], [1], [0, 0, 1, 1], [], []>} : vector<2x32xf32>, vector<32x96xf32>, vector<2x96xf32> -> vector<2x96xf32>
    %cst_135 = arith.constant dense<0.000000e+00> : vector<2x96xf32>
    %387 = tpu.matmul %385, %4, %cst_135 {dimension_numbers = #tpu.dot_dimension_numbers<[1], [0], [0], [1], [0, 0, 1, 1], [], []>} : vector<2x32xf32>, vector<32x96xf32>, vector<2x96xf32> -> vector<2x96xf32>
    %388 = arith.addf %386, %387 : vector<2x96xf32>
    %389 = vector.broadcast %11 : vector<1x96xf32> to vector<2x96xf32>
    %390 = arith.addf %388, %389 : vector<2x96xf32>
    %391 = vector.extract_strided_slice %390 {offsets = [0, 0], sizes = [2, 64], strides = [1, 1]} : vector<2x96xf32> to vector<2x64xf32>
    %392 = arith.negf %391 : vector<2x64xf32>
    %393 = math.exp %392 : vector<2x64xf32>
    %cst_136 = arith.constant 1.000000e+00 : f32
    %394 = vector.broadcast %cst_136 : f32 to vector<2x64xf32>
    %395 = arith.addf %394, %393 : vector<2x64xf32>
    %396 = arith.divf %394, %395 : vector<2x64xf32>
    %397 = vector.extract_strided_slice %396 {offsets = [0, 0], sizes = [2, 32], strides = [1, 1]} : vector<2x64xf32> to vector<2x32xf32>
    %398 = vector.extract_strided_slice %396 {offsets = [0, 32], sizes = [2, 32], strides = [1, 1]} : vector<2x64xf32> to vector<2x32xf32>
    %399 = vector.extract_strided_slice %390 {offsets = [0, 64], sizes = [2, 32], strides = [1, 1]} : vector<2x96xf32> to vector<2x32xf32>
    %400 = arith.mulf %397, %399 : vector<2x32xf32>
    %401 = math.tanh %400 : vector<2x32xf32>
    %cst_137 = arith.constant 1.000000e+00 : f32
    %402 = vector.broadcast %cst_137 : f32 to vector<2x32xf32>
    %403 = arith.subf %402, %398 : vector<2x32xf32>
    %404 = arith.mulf %403, %401 : vector<2x32xf32>
    %405 = arith.mulf %398, %368 : vector<2x32xf32>
    %406 = arith.addf %404, %405 : vector<2x32xf32>
    %407 = vector.shape_cast %406 : vector<2x32xf32> to vector<1x2x32xf32>
    %408 = vector.broadcast %407 : vector<1x2x32xf32> to vector<8x2x32xf32>
    %409 = arith.mulf %408, %117 : vector<8x2x32xf32>
    %cst_138 = arith.constant dense<0.000000e+00> : vector<8x2xf32>
    %410 = vector.multi_reduction <add>, %409, %cst_138 [2] : vector<8x2x32xf32> to vector<8x2xf32>
    %411 = vector.shape_cast %410 : vector<8x2xf32> to vector<8x2x1xf32>
    %cst_139 = arith.constant dense<0xFF800000> : vector<2x1xf32>
    %412 = vector.multi_reduction <maximumf>, %411, %cst_139 [0] : vector<8x2x1xf32> to vector<2x1xf32>
    %413 = vector.shape_cast %412 : vector<2x1xf32> to vector<1x2x1xf32>
    %414 = vector.broadcast %413 : vector<1x2x1xf32> to vector<8x2x1xf32>
    %415 = arith.subf %411, %414 : vector<8x2x1xf32>
    %416 = math.exp %415 : vector<8x2x1xf32>
    %cst_140 = arith.constant dense<0.000000e+00> : vector<2x1xf32>
    %417 = vector.multi_reduction <add>, %416, %cst_140 [0] : vector<8x2x1xf32> to vector<2x1xf32>
    %418 = vector.shape_cast %417 : vector<2x1xf32> to vector<1x2x1xf32>
    %419 = vector.broadcast %418 : vector<1x2x1xf32> to vector<8x2x1xf32>
    %420 = arith.divf %416, %419 : vector<8x2x1xf32>
    %421 = vector.broadcast %420 : vector<8x2x1xf32> to vector<8x2x32xf32>
    %422 = arith.mulf %421, %117 : vector<8x2x32xf32>
    %cst_141 = arith.constant dense<0.000000e+00> : vector<2x32xf32>
    %423 = vector.multi_reduction <add>, %422, %cst_141 [0] : vector<8x2x32xf32> to vector<2x32xf32>
    %cst_142 = arith.constant dense<0.000000e+00> : vector<2x16xf32>
    %424 = tpu.matmul %406, %6, %cst_142 {dimension_numbers = #tpu.dot_dimension_numbers<[1], [0], [0], [1], [0, 0, 1, 1], [], []>} : vector<2x32xf32>, vector<32x16xf32>, vector<2x16xf32> -> vector<2x16xf32>
    %cst_143 = arith.constant dense<0.000000e+00> : vector<2x16xf32>
    %425 = tpu.matmul %423, %7, %cst_143 {dimension_numbers = #tpu.dot_dimension_numbers<[1], [0], [0], [1], [0, 0, 1, 1], [], []>} : vector<2x32xf32>, vector<32x16xf32>, vector<2x16xf32> -> vector<2x16xf32>
    %426 = arith.addf %424, %425 : vector<2x16xf32>
    %427 = vector.broadcast %12 : vector<1x16xf32> to vector<2x16xf32>
    %428 = arith.addf %426, %427 : vector<2x16xf32>
    %c0_144 = arith.constant 0 : index
    %c0_145 = arith.constant 0 : index
    %429 = vector.load %arg7[%c0_144, %c0_145] : memref<2x16xf32, #tpu.memory_space<vmem>>, vector<2x16xf32>
    tpu.vector_store %arg7[%c0_144, %c0_145], %428 {strides = array<i32>} : memref<2x16xf32, #tpu.memory_space<vmem>>, vector<2x16xf32>,
    return
  }
  func.func @transform_0(%arg0: i32) -> (i32, i32, i32) {
    %c0_i32 = arith.constant 0 : i32
    %c0_i32_0 = arith.constant 0 : i32
    %c0_i32_1 = arith.constant 0 : i32
    return %c0_i32, %arg0, %c0_i32_0 : i32, i32, i32
  }
  func.func @transform_1(%arg0: i32) -> (i32, i32) {
    %c0_i32 = arith.constant 0 : i32
    %c0_i32_0 = arith.constant 0 : i32
    %c0_i32_1 = arith.constant 0 : i32
    return %c0_i32, %c0_i32_0 : i32, i32
  }
  func.func @transform_2(%arg0: i32) -> (i32, i32) {
    %c0_i32 = arith.constant 0 : i32
    %c0_i32_0 = arith.constant 0 : i32
    %c0_i32_1 = arith.constant 0 : i32
    return %c0_i32, %c0_i32_0 : i32, i32
  }
  func.func @transform_3(%arg0: i32) -> (i32, i32) {
    %c0_i32 = arith.constant 0 : i32
    %c0_i32_0 = arith.constant 0 : i32
    %c0_i32_1 = arith.constant 0 : i32
    return %c0_i32, %c0_i32_0 : i32, i32
  }
  func.func @transform_4(%arg0: i32) -> (i32, i32) {
    %c0_i32 = arith.constant 0 : i32
    %c0_i32_0 = arith.constant 0 : i32
    %c0_i32_1 = arith.constant 0 : i32
    return %c0_i32, %c0_i32_0 : i32, i32
  }
  func.func @transform_5(%arg0: i32) -> (i32, i32) {
    %c0_i32 = arith.constant 0 : i32
    %c0_i32_0 = arith.constant 0 : i32
    %c0_i32_1 = arith.constant 0 : i32
    return %c0_i32, %c0_i32_0 : i32, i32
  }
  func.func @transform_6(%arg0: i32) -> (i32, i32) {
    %c0_i32 = arith.constant 0 : i32
    %c0_i32_0 = arith.constant 0 : i32
    return %arg0, %c0_i32 : i32, i32
  }
}

</mosaic_0001>

<llo_original>
// kernel: tpu_custom_call.1
$region0: #{tpu_custom_call.1}
  #allocation0 [shape = 'u32[]', space=smem, size = 0x4, offset = 0x4, fixed_abs, tag = 'smem constant byte address 0x4 - core index']
  #allocation1 [shape = 'u32[144,128]{1,0:T(1,128)}', space=vmem, size = 0x12000, scoped, tag = 'internal scratch']
  #allocation2 [shape = 'f32[8,2,32]{2,1,0:T(2,128)}', space=vmem, size = 0x2000, scoped, tag = 'scratch operand']
  %s0 = inlined_call_operand.vmem [shape: f32[8,2,4], index: 0, kind: input, shape index: {}]
  %s1 = inlined_call_operand.vmem [shape: f32[4,32], index: 1, kind: input, shape index: {}]
  %s2 = inlined_call_operand.vmem [shape: f32[32,32], index: 2, kind: input, shape index: {}]
  %s3 = inlined_call_operand.vmem [shape: f32[64,96], index: 3, kind: input, shape index: {}]
  %s4 = inlined_call_operand.vmem [shape: f32[64,16], index: 4, kind: input, shape index: {}]
  %s5 = inlined_call_operand.vmem [shape: f32[4,96], index: 5, kind: input, shape index: {}]
  %s6 = inlined_call_operand.hbm [shape: f32[2,16], index: 6, kind: output, shape index: {}]
  %s7 = sld [smem:[#allocation0]]
  $region34: #{tpu_custom_call.1} parent=0
    _
  %s9 = ssub.s32 1, %s7
  %s10 = scalar_select 0, %s9, %s7
  $region1: #{tpu_custom_call.1} parent=0
    #allocation3 [shape = 'u8[1024]{0}', space=vmem, size = 0x400, scoped, tag = 'output window, operand 0, single buffered']
    #allocation4 [shape = 's32[1]{0}', space=sflag, size = 0x4, scoped, tag = 'scoped memory for tpu_custom_call.1']
    %11 = vsyncpa [#allocation4], 0
    // Predicated region
    $region2: #{tpu_custom_call.1} parent=1 // pred_check
      _
    $region3: #{tpu_custom_call.1} parent=1 // pred_check_branch
      %13 = sbr.rel (0) target = $region5
    $region4: #{tpu_custom_call.1} parent=1 // pred_region
      _
    $region5: #{tpu_custom_call.1} parent=1 // pred_fallthru
      _
    // Predicated region
    $region6: #{tpu_custom_call.1} parent=1 // pred_check
      _
    $region7: #{tpu_custom_call.1} parent=1 // pred_check_branch
      %15 = sbr.rel (0) target = $region9
    $region8: #{tpu_custom_call.1} parent=1 // pred_region
      _
    $region9: #{tpu_custom_call.1} parent=1 // pred_fallthru
      _
    // Predicated region
    $region10: #{tpu_custom_call.1} parent=1 // pred_check
      _
    $region11: #{tpu_custom_call.1} parent=1 // pred_check_branch
      %17 = sbr.rel (0) target = $region13
    $region12: #{tpu_custom_call.1} parent=1 // pred_region
      _
    $region13: #{tpu_custom_call.1} parent=1 // pred_fallthru
      _
    // Predicated region
    $region14: #{tpu_custom_call.1} parent=1 // pred_check
      _
    $region15: #{tpu_custom_call.1} parent=1 // pred_check_branch
      %19 = sbr.rel (0) target = $region17
    $region16: #{tpu_custom_call.1} parent=1 // pred_region
      _
    $region17: #{tpu_custom_call.1} parent=1 // pred_fallthru
      _
    // Predicated region
    $region18: #{tpu_custom_call.1} parent=1 // pred_check
      _
    $region19: #{tpu_custom_call.1} parent=1 // pred_check_branch
      %21 = sbr.rel (0) target = $region21
    $region20: #{tpu_custom_call.1} parent=1 // pred_region
      _
    $region21: #{tpu_custom_call.1} parent=1 // pred_fallthru
      _
    // Predicated region
    $region22: #{tpu_custom_call.1} parent=1 // pred_check
      _
    $region23: #{tpu_custom_call.1} parent=1 // pred_check_branch
      %23 = sbr.rel (0) target = $region25
    $region24: #{tpu_custom_call.1} parent=1 // pred_region
      _
    $region25: #{tpu_custom_call.1} parent=1 // pred_fallthru
      _
    %v24 = vld [vmem:[%s1] sm:$0xf]
    %v25 = vld [vmem:[%s2] sm:$0xff]
    %v26 = vld [vmem:[%s2 + $0x8] sm:$0xff]
    %v27 = vld [vmem:[%s2 + $0x10] sm:$0xff]
    %v28 = vld [vmem:[%s2 + $0x18] sm:$0xff]
    %v29 = vld [vmem:[%s3] sm:$0xff]
    %v30 = vld [vmem:[%s3 + $0x8] sm:$0xff]
    %v31 = vld [vmem:[%s3 + $0x10] sm:$0xff]
    %v32 = vld [vmem:[%s3 + $0x18] sm:$0xff]
    %v33 = vld [vmem:[%s3 + $0x20] sm:$0xff]
    %v34 = vld [vmem:[%s3 + $0x28] sm:$0xff]
    %v35 = vld [vmem:[%s3 + $0x30] sm:$0xff]
    %v36 = vld [vmem:[%s3 + $0x38] sm:$0xff]
    %v37 = vld [vmem:[%s4] sm:$0xff]
    %v38 = vld [vmem:[%s4 + $0x8] sm:$0xff]
    %v39 = vld [vmem:[%s4 + $0x10] sm:$0xff]
    %v40 = vld [vmem:[%s4 + $0x18] sm:$0xff]
    %v41 = vld [vmem:[%s4 + $0x20] sm:$0xff]
    %v42 = vld [vmem:[%s4 + $0x28] sm:$0xff]
    %v43 = vld [vmem:[%s4 + $0x30] sm:$0xff]
    %v44 = vld [vmem:[%s4 + $0x38] sm:$0xff]
    %v45 = vld [vmem:[%s5] sm:$0xf]
    %v46 = vld [vmem:[%s0] sm:$0x3]
    %v47 = vlaneseq
    %v48 = vshrl.u32 %v47, 7
    %v49 = vsub.s32 0, %v48
    %v50 = vrot.slane %v45, %v49
    %vm51 = vcmask 31744
    %v53 = vsel %vm51, %v46, 0
    %vm55 = vcmask 1043456
    %v57 = vsel %vm55, %v24, 0
    %59 = vmatprep.subr.mxu0 0.0
    %60 = vmatpush1.msra.mxu0 0.0
    %61 = vmatprep.subr.mxu0 0.0
    %62 = vmatpush1.msra.mxu0 0.0
    %63 = vmatprep.subr.mxu0 0.0
    %64 = vmatpush1.msra.mxu0 0.0
    %65 = vmatprep.subr.mxu0 0.0
    %66 = vmatpush1.msra.mxu0 0.0
    %67 = vmatprep.subr.mxu0 0.0
    %68 = vmatpush1.msra.mxu0 0.0
    %69 = vmatprep.subr.mxu0 0.0
    %70 = vmatpush1.msra.mxu0 0.0
    %71 = vmatprep.subr.mxu0 0.0
    %72 = vmatpush1.msra.mxu0 0.0
    %73 = vmatprep.subr.mxu0 0.0
    %74 = vmatpush1.msra.mxu0 0.0
    %75 = vmatprep.subr.mxu0 0.0
    %76 = vmatpush1.msra.mxu0 0.0
    %77 = vmatprep.subr.mxu0 0.0
    %78 = vmatpush1.msra.mxu0 0.0
    %79 = vmatprep.subr.mxu0 0.0
    %80 = vmatpush1.msra.mxu0 0.0
    %81 = vmatprep.subr.mxu0 0.0
    %82 = vmatpush1.msra.mxu0 0.0
    %83 = vmatprep.subr.mxu0 0.0
    %84 = vmatpush1.msra.mxu0 0.0
    %85 = vmatprep.subr.mxu0 0.0
    %86 = vmatpush1.msra.mxu0 0.0
    %87 = vmatprep.subr.mxu0 0.0
    %88 = vmatpush1.msra.mxu0 0.0
    %89 = vmatprep.subr.mxu0 0.0
    %90 = vmatpush1.msra.mxu0 %v57
    %91 = vmatprep.subr.mxu0 0.0
    %92 = vmatpush2.msra.mxu0 0.0
    %93 = vmatprep.subr.mxu0 0.0
    %94 = vmatpush2.msra.mxu0 0.0
    %95 = vmatprep.subr.mxu0 0.0
    %96 = vmatpush2.msra.mxu0 0.0
    %97 = vmatprep.subr.mxu0 0.0
    %98 = vmatpush2.msra.mxu0 0.0
    %99 = vmatprep.subr.mxu0 0.0
    %100 = vmatpush2.msra.mxu0 0.0
    %101 = vmatprep.subr.mxu0 0.0
    %102 = vmatpush2.msra.mxu0 0.0
    %103 = vmatprep.subr.mxu0 0.0
    %104 = vmatpush2.msra.mxu0 0.0
    %105 = vmatprep.subr.mxu0 0.0
    %106 = vmatpush2.msra.mxu0 0.0
    %107 = vmatprep.subr.mxu0 0.0
    %108 = vmatpush2.msra.mxu0 0.0
    %109 = vmatprep.subr.mxu0 0.0
    %110 = vmatpush2.msra.mxu0 0.0
    %111 = vmatprep.subr.mxu0 0.0
    %112 = vmatpush2.msra.mxu0 0.0
    %113 = vmatprep.subr.mxu0 0.0
    %114 = vmatpush2.msra.mxu0 0.0
    %115 = vmatprep.subr.mxu0 0.0
    %116 = vmatpush2.msra.mxu0 0.0
    %117 = vmatprep.subr.mxu0 0.0
    %118 = vmatpush2.msra.mxu0 0.0
    %119 = vmatprep.subr.mxu0 0.0
    %120 = vmatpush2.msra.mxu0 0.0
    %121 = vmatprep.subr.mxu0 0.0
    %122 = vmatpush2.msra.mxu0 0.0
    %123 = vmatprep.mubr.f32.mxu0 0.0
    %124 = vmatmul.mubr.f32.gmra.mxu0 %v53
    %v125 = vpop.f32.mrf.mxu0
    %v126 = vadd.f32 %v50, %v125
    %v127 = vpop.f32.mrf.mxu0
    %128 = vdwg.mxu0
    %v129 = vmax.f32 %v126, 0.0
    %v130 = vlaneseq
    %v131 = vshrl.u32 %v130, 7
    %v132 = vsub.s32 1, %v131
    %v133 = vrot.slane %v45, %v132
    %vm134 = vcmask 261120
    %v136 = vsel %vm134, %v129, 0
    %138 = vmatprep.subr.mxu0 0.0
    %139 = vmatpush1.msra.mxu0 0.0
    %140 = vmatprep.subr.mxu0 0.0
    %141 = vmatpush1.msra.mxu0 0.0
    %142 = vmatprep.subr.mxu0 0.0
    %143 = vmatpush1.msra.mxu0 0.0
    %144 = vmatprep.subr.mxu0 0.0
    %145 = vmatpush1.msra.mxu0 0.0
    %146 = vmatprep.subr.mxu0 0.0
    %147 = vmatpush1.msra.mxu0 0.0
    %148 = vmatprep.subr.mxu0 0.0
    %149 = vmatpush1.msra.mxu0 0.0
    %150 = vmatprep.subr.mxu0 0.0
    %151 = vmatpush1.msra.mxu0 0.0
    %152 = vmatprep.subr.mxu0 0.0
    %153 = vmatpush1.msra.mxu0 0.0
    %154 = vmatprep.subr.mxu0 0.0
    %155 = vmatpush1.msra.mxu0 0.0
    %156 = vmatprep.subr.mxu0 0.0
    %157 = vmatpush1.msra.mxu0 0.0
    %158 = vmatprep.subr.mxu0 0.0
    %159 = vmatpush1.msra.mxu0 0.0
    %160 = vmatprep.subr.mxu0 0.0
    %161 = vmatpush1.msra.mxu0 0.0
    %162 = vmatprep.subr.mxu0 0.0
    %163 = vmatpush1.msra.mxu0 %v28
    %164 = vmatprep.subr.mxu0 0.0
    %165 = vmatpush1.msra.mxu0 %v27
    %166 = vmatprep.subr.mxu0 0.0
    %167 = vmatpush1.msra.mxu0 %v26
    %168 = vmatprep.subr.mxu0 0.0
    %169 = vmatpush1.msra.mxu0 %v25
    %170 = vmatprep.subr.mxu0 0.0
    %171 = vmatpush2.msra.mxu0 0.0
    %172 = vmatprep.subr.mxu0 0.0
    %173 = vmatpush2.msra.mxu0 0.0
    %174 = vmatprep.subr.mxu0 0.0
    %175 = vmatpush2.msra.mxu0 0.0
    %176 = vmatprep.subr.mxu0 0.0
    %177 = vmatpush2.msra.mxu0 0.0
    %178 = vmatprep.subr.mxu0 0.0
    %179 = vmatpush2.msra.mxu0 0.0
    %180 = vmatprep.subr.mxu0 0.0
    %181 = vmatpush2.msra.mxu0 0.0
    %182 = vmatprep.subr.mxu0 0.0
    %183 = vmatpush2.msra.mxu0 0.0
    %184 = vmatprep.subr.mxu0 0.0
    %185 = vmatpush2.msra.mxu0 0.0
    %186 = vmatprep.subr.mxu0 0.0
    %187 = vmatpush2.msra.mxu0 0.0
    %188 = vmatprep.subr.mxu0 0.0
    %189 = vmatpush2.msra.mxu0 0.0
    %190 = vmatprep.subr.mxu0 0.0
    %191 = vmatpush2.msra.mxu0 0.0
    %192 = vmatprep.subr.mxu0 0.0
    %193 = vmatpush2.msra.mxu0 0.0
    %194 = vmatprep.subr.mxu0 0.0
    %195 = vmatpush2.msra.mxu0 0.0
    %196 = vmatprep.subr.mxu0 0.0
    %197 = vmatpush2.msra.mxu0 0.0
    %198 = vmatprep.subr.mxu0 0.0
    %199 = vmatpush2.msra.mxu0 0.0
    %200 = vmatprep.subr.mxu0 0.0
    %201 = vmatpush2.msra.mxu0 0.0
    %202 = vmatprep.mubr.f32.mxu0 0.0
    %203 = vmatmul.mubr.f32.gmra.mxu0 %v136
    %v204 = vpop.f32.mrf.mxu0
    %v205 = vadd.f32 %v133, %v204
    %v206 = vpop.f32.mrf.mxu0
    %207 = vdwg.mxu0
    %vm208 = vcmask 254976
    %209 = vst.msk [vmem:[#allocation2] sm:$0x3] %vm208, %v205
    %s210 = scalar_lea.vmem %s0, 2
    %v211 = vld [vmem:[%s210] sm:$0x3]
    %v213 = vsel %vm51, %v211, 0
    %215 = vmatprep.subr.mxu0 0.0
    %216 = vmatpush1.msra.mxu0 0.0
    %217 = vmatprep.subr.mxu0 0.0
    %218 = vmatpush1.msra.mxu0 0.0
    %219 = vmatprep.subr.mxu0 0.0
    %220 = vmatpush1.msra.mxu0 0.0
    %221 = vmatprep.subr.mxu0 0.0
    %222 = vmatpush1.msra.mxu0 0.0
    %223 = vmatprep.subr.mxu0 0.0
    %224 = vmatpush1.msra.mxu0 0.0
    %225 = vmatprep.subr.mxu0 0.0
    %226 = vmatpush1.msra.mxu0 0.0
    %227 = vmatprep.subr.mxu0 0.0
    %228 = vmatpush1.msra.mxu0 0.0
    %229 = vmatprep.subr.mxu0 0.0
    %230 = vmatpush1.msra.mxu0 0.0
    %231 = vmatprep.subr.mxu0 0.0
    %232 = vmatpush1.msra.mxu0 0.0
    %233 = vmatprep.subr.mxu0 0.0
    %234 = vmatpush1.msra.mxu0 0.0
    %235 = vmatprep.subr.mxu0 0.0
    %236 = vmatpush1.msra.mxu0 0.0
    %237 = vmatprep.subr.mxu0 0.0
    %238 = vmatpush1.msra.mxu0 0.0
    %239 = vmatprep.subr.mxu0 0.0
    %240 = vmatpush1.msra.mxu0 0.0
    %241 = vmatprep.subr.mxu0 0.0
    %242 = vmatpush1.msra.mxu0 0.0
    %243 = vmatprep.subr.mxu0 0.0
    %244 = vmatpush1.msra.mxu0 0.0
    %245 = vmatprep.subr.mxu0 0.0
    %246 = vmatpush1.msra.mxu0 %v57
    %247 = vmatprep.subr.mxu0 0.0
    %248 = vmatpush2.msra.mxu0 0.0
    %249 = vmatprep.subr.mxu0 0.0
    %250 = vmatpush2.msra.mxu0 0.0
    %251 = vmatprep.subr.mxu0 0.0
    %252 = vmatpush2.msra.mxu0 0.0
    %253 = vmatprep.subr.mxu0 0.0
    %254 = vmatpush2.msra.mxu0 0.0
    %255 = vmatprep.subr.mxu0 0.0
    %256 = vmatpush2.msra.mxu0 0.0
    %257 = vmatprep.subr.mxu0 0.0
    %258 = vmatpush2.msra.mxu0 0.0
    %259 = vmatprep.subr.mxu0 0.0
    %260 = vmatpush2.msra.mxu0 0.0
    %261 = vmatprep.subr.mxu0 0.0
    %262 = vmatpush2.msra.mxu0 0.0
    %263 = vmatprep.subr.mxu0 0.0
    %264 = vmatpush2.msra.mxu0 0.0
    %265 = vmatprep.subr.mxu0 0.0
    %266 = vmatpush2.msra.mxu0 0.0
    %267 = vmatprep.subr.mxu0 0.0
    %268 = vmatpush2.msra.mxu0 0.0
    %269 = vmatprep.subr.mxu0 0.0
    %270 = vmatpush2.msra.mxu0 0.0
    %271 = vmatprep.subr.mxu0 0.0
    %272 = vmatpush2.msra.mxu0 0.0
    %273 = vmatprep.subr.mxu0 0.0
    %274 = vmatpush2.msra.mxu0 0.0
    %275 = vmatprep.subr.mxu0 0.0
    %276 = vmatpush2.msra.mxu0 0.0
    %277 = vmatprep.subr.mxu0 0.0
    %278 = vmatpush2.msra.mxu0 0.0
    %279 = vmatprep.mubr.f32.mxu0 0.0
    %280 = vmatmul.mubr.f32.gmra.mxu0 %v213
    %v281 = vpop.f32.mrf.mxu0
    %v282 = vadd.f32 %v50, %v281
    %v283 = vpop.f32.mrf.mxu0
    %284 = vdwg.mxu0
    %v285 = vmax.f32 %v282, 0.0
    %v287 = vsel %vm134, %v285, 0
    %289 = vmatprep.subr.mxu0 0.0
    %290 = vmatpush1.msra.mxu0 0.0
    %291 = vmatprep.subr.mxu0 0.0
    %292 = vmatpush1.msra.mxu0 0.0
    %293 = vmatprep.subr.mxu0 0.0
    %294 = vmatpush1.msra.mxu0 0.0
    %295 = vmatprep.subr.mxu0 0.0
    %296 = vmatpush1.msra.mxu0 0.0
    %297 = vmatprep.subr.mxu0 0.0
    %298 = vmatpush1.msra.mxu0 0.0
    %299 = vmatprep.subr.mxu0 0.0
    %300 = vmatpush1.msra.mxu0 0.0
    %301 = vmatprep.subr.mxu0 0.0
    %302 = vmatpush1.msra.mxu0 0.0
    %303 = vmatprep.subr.mxu0 0.0
    %304 = vmatpush1.msra.mxu0 0.0
    %305 = vmatprep.subr.mxu0 0.0
    %306 = vmatpush1.msra.mxu0 0.0
    %307 = vmatprep.subr.mxu0 0.0
    %308 = vmatpush1.msra.mxu0 0.0
    %309 = vmatprep.subr.mxu0 0.0
    %310 = vmatpush1.msra.mxu0 0.0
    %311 = vmatprep.subr.mxu0 0.0
    %312 = vmatpush1.msra.mxu0 0.0
    %313 = vmatprep.subr.mxu0 0.0
    %314 = vmatpush1.msra.mxu0 %v28
    %315 = vmatprep.subr.mxu0 0.0
    %316 = vmatpush1.msra.mxu0 %v27
    %317 = vmatprep.subr.mxu0 0.0
    %318 = vmatpush1.msra.mxu0 %v26
    %319 = vmatprep.subr.mxu0 0.0
    %320 = vmatpush1.msra.mxu0 %v25
    %321 = vmatprep.subr.mxu0 0.0
    %322 = vmatpush2.msra.mxu0 0.0
    %323 = vmatprep.subr.mxu0 0.0
    %324 = vmatpush2.msra.mxu0 0.0
    %325 = vmatprep.subr.mxu0 0.0
    %326 = vmatpush2.msra.mxu0 0.0
    %327 = vmatprep.subr.mxu0 0.0
    %328 = vmatpush2.msra.mxu0 0.0
    %329 = vmatprep.subr.mxu0 0.0
    %330 = vmatpush2.msra.mxu0 0.0
    %331 = vmatprep.subr.mxu0 0.0
    %332 = vmatpush2.msra.mxu0 0.0
    %333 = vmatprep.subr.mxu0 0.0
    %334 = vmatpush2.msra.mxu0 0.0
    %335 = vmatprep.subr.mxu0 0.0
    %336 = vmatpush2.msra.mxu0 0.0
    %337 = vmatprep.subr.mxu0 0.0
    %338 = vmatpush2.msra.mxu0 0.0
    %339 = vmatprep.subr.mxu0 0.0
    %340 = vmatpush2.msra.mxu0 0.0
    %341 = vmatprep.subr.mxu0 0.0
    %342 = vmatpush2.msra.mxu0 0.0
    %343 = vmatprep.subr.mxu0 0.0
    %344 = vmatpush2.msra.mxu0 0.0
    %345 = vmatprep.subr.mxu0 0.0
    %346 = vmatpush2.msra.mxu0 0.0
    %347 = vmatprep.subr.mxu0 0.0
    %348 = vmatpush2.msra.mxu0 0.0
    %349 = vmatprep.subr.mxu0 0.0
    %350 = vmatpush2.msra.mxu0 0.0
    %351 = vmatprep.subr.mxu0 0.0
    %352 = vmatpush2.msra.mxu0 0.0
    %353 = vmatprep.mubr.f32.mxu0 0.0
    %354 = vmatmul.mubr.f32.gmra.mxu0 %v287
    %v355 = vpop.f32.mrf.mxu0
    %v356 = vadd.f32 %v133, %v355
    %v357 = vpop.f32.mrf.mxu0
    %358 = vdwg.mxu0
    %s359 = scalar_lea.vmem [#allocation2], 2
    %360 = vst.msk [vmem:[%s359] sm:$0x3] %vm208, %v356
    %s361 = scalar_lea.vmem %s0, 4
    %v362 = vld [vmem:[%s361] sm:$0x3]
    %v364 = vsel %vm51, %v362, 0
    %366 = vmatprep.subr.mxu0 0.0
    %367 = vmatpush1.msra.mxu0 0.0
    %368 = vmatprep.subr.mxu0 0.0
    %369 = vmatpush1.msra.mxu0 0.0
    %370 = vmatprep.subr.mxu0 0.0
    %371 = vmatpush1.msra.mxu0 0.0
    %372 = vmatprep.subr.mxu0 0.0
    %373 = vmatpush1.msra.mxu0 0.0
    %374 = vmatprep.subr.mxu0 0.0
    %375 = vmatpush1.msra.mxu0 0.0
    %376 = vmatprep.subr.mxu0 0.0
    %377 = vmatpush1.msra.mxu0 0.0
    %378 = vmatprep.subr.mxu0 0.0
    %379 = vmatpush1.msra.mxu0 0.0
    %380 = vmatprep.subr.mxu0 0.0
    %381 = vmatpush1.msra.mxu0 0.0
    %382 = vmatprep.subr.mxu0 0.0
    %383 = vmatpush1.msra.mxu0 0.0
    %384 = vmatprep.subr.mxu0 0.0
    %385 = vmatpush1.msra.mxu0 0.0
    %386 = vmatprep.subr.mxu0 0.0
    %387 = vmatpush1.msra.mxu0 0.0
    %388 = vmatprep.subr.mxu0 0.0
    %389 = vmatpush1.msra.mxu0 0.0
    %390 = vmatprep.subr.mxu0 0.0
    %391 = vmatpush1.msra.mxu0 0.0
    %392 = vmatprep.subr.mxu0 0.0
    %393 = vmatpush1.msra.mxu0 0.0
    %394 = vmatprep.subr.mxu0 0.0
    %395 = vmatpush1.msra.mxu0 0.0
    %396 = vmatprep.subr.mxu0 0.0
    %397 = vmatpush1.msra.mxu0 %v57
    %398 = vmatprep.subr.mxu0 0.0
    %399 = vmatpush2.msra.mxu0 0.0
    %400 = vmatprep.subr.mxu0 0.0
    %401 = vmatpush2.msra.mxu0 0.0
    %402 = vmatprep.subr.mxu0 0.0
    %403 = vmatpush2.msra.mxu0 0.0
    %404 = vmatprep.subr.mxu0 0.0
    %405 = vmatpush2.msra.mxu0 0.0
    %406 = vmatprep.subr.mxu0 0.0
    %407 = vmatpush2.msra.mxu0 0.0
    %408 = vmatprep.subr.mxu0 0.0
    %409 = vmatpush2.msra.mxu0 0.0
    %410 = vmatprep.subr.mxu0 0.0
    %411 = vmatpush2.msra.mxu0 0.0
    %412 = vmatprep.subr.mxu0 0.0
    %413 = vmatpush2.msra.mxu0 0.0
    %414 = vmatprep.subr.mxu0 0.0
    %415 = vmatpush2.msra.mxu0 0.0
    %416 = vmatprep.subr.mxu0 0.0
    %417 = vmatpush2.msra.mxu0 0.0
    %418 = vmatprep.subr.mxu0 0.0
    %419 = vmatpush2.msra.mxu0 0.0
    %420 = vmatprep.subr.mxu0 0.0
    %421 = vmatpush2.msra.mxu0 0.0
    %422 = vmatprep.subr.mxu0 0.0
    %423 = vmatpush2.msra.mxu0 0.0
    %424 = vmatprep.subr.mxu0 0.0
    %425 = vmatpush2.msra.mxu0 0.0
    %426 = vmatprep.subr.mxu0 0.0
    %427 = vmatpush2.msra.mxu0 0.0
    %428 = vmatprep.subr.mxu0 0.0
    %429 = vmatpush2.msra.mxu0 0.0
    %430 = vmatprep.mubr.f32.mxu0 0.0
    %431 = vmatmul.mubr.f32.gmra.mxu0 %v364
    %v432 = vpop.f32.mrf.mxu0
    %v433 = vadd.f32 %v50, %v432
    %v434 = vpop.f32.mrf.mxu0
    %435 = vdwg.mxu0
    %v436 = vmax.f32 %v433, 0.0
    %v438 = vsel %vm134, %v436, 0
    %440 = vmatprep.subr.mxu0 0.0
    %441 = vmatpush1.msra.mxu0 0.0
    %442 = vmatprep.subr.mxu0 0.0
    %443 = vmatpush1.msra.mxu0 0.0
    %444 = vmatprep.subr.mxu0 0.0
    %445 = vmatpush1.msra.mxu0 0.0
    %446 = vmatprep.subr.mxu0 0.0
    %447 = vmatpush1.msra.mxu0 0.0
    %448 = vmatprep.subr.mxu0 0.0
    %449 = vmatpush1.msra.mxu0 0.0
    %450 = vmatprep.subr.mxu0 0.0
    %451 = vmatpush1.msra.mxu0 0.0
    %452 = vmatprep.subr.mxu0 0.0
    %453 = vmatpush1.msra.mxu0 0.0
    %454 = vmatprep.subr.mxu0 0.0
    %455 = vmatpush1.msra.mxu0 0.0
    %456 = vmatprep.subr.mxu0 0.0
    %457 = vmatpush1.msra.mxu0 0.0
    %458 = vmatprep.subr.mxu0 0.0
    %459 = vmatpush1.msra.mxu0 0.0
    %460 = vmatprep.subr.mxu0 0.0
    %461 = vmatpush1.msra.mxu0 0.0
    %462 = vmatprep.subr.mxu0 0.0
    %463 = vmatpush1.msra.mxu0 0.0
    %464 = vmatprep.subr.mxu0 0.0
    %465 = vmatpush1.msra.mxu0 %v28
    %466 = vmatprep.subr.mxu0 0.0
    %467 = vmatpush1.msra.mxu0 %v27
    %468 = vmatprep.subr.mxu0 0.0
    %469 = vmatpush1.msra.mxu0 %v26
    %470 = vmatprep.subr.mxu0 0.0
    %471 = vmatpush1.msra.mxu0 %v25
    %472 = vmatprep.subr.mxu0 0.0
    %473 = vmatpush2.msra.mxu0 0.0
    %474 = vmatprep.subr.mxu0 0.0
    %475 = vmatpush2.msra.mxu0 0.0
    %476 = vmatprep.subr.mxu0 0.0
    %477 = vmatpush2.msra.mxu0 0.0
    %478 = vmatprep.subr.mxu0 0.0
    %479 = vmatpush2.msra.mxu0 0.0
    %480 = vmatprep.subr.mxu0 0.0
    %481 = vmatpush2.msra.mxu0 0.0
    %482 = vmatprep.subr.mxu0 0.0
    %483 = vmatpush2.msra.mxu0 0.0
    %484 = vmatprep.subr.mxu0 0.0
    %485 = vmatpush2.msra.mxu0 0.0
    %486 = vmatprep.subr.mxu0 0.0
    %487 = vmatpush2.msra.mxu0 0.0
    %488 = vmatprep.subr.mxu0 0.0
    %489 = vmatpush2.msra.mxu0 0.0
    %490 = vmatprep.subr.mxu0 0.0
    %491 = vmatpush2.msra.mxu0 0.0
    %492 = vmatprep.subr.mxu0 0.0
    %493 = vmatpush2.msra.mxu0 0.0
    %494 = vmatprep.subr.mxu0 0.0
    %495 = vmatpush2.msra.mxu0 0.0
    %496 = vmatprep.subr.mxu0 0.0
    %497 = vmatpush2.msra.mxu0 0.0
    %498 = vmatprep.subr.mxu0 0.0
    %499 = vmatpush2.msra.mxu0 0.0
    %500 = vmatprep.subr.mxu0 0.0
    %501 = vmatpush2.msra.mxu0 0.0
    %502 = vmatprep.subr.mxu0 0.0
    %503 = vmatpush2.msra.mxu0 0.0
    %504 = vmatprep.mubr.f32.mxu0 0.0
    %505 = vmatmul.mubr.f32.gmra.mxu0 %v438
    %v506 = vpop.f32.mrf.mxu0
    %v507 = vadd.f32 %v133, %v506
    %v508 = vpop.f32.mrf.mxu0
    %509 = vdwg.mxu0
    %s510 = scalar_lea.vmem [#allocation2], 4
    %511 = vst.msk [vmem:[%s510] sm:$0x3] %vm208, %v507
    %s512 = scalar_lea.vmem %s0, 6
    %v513 = vld [vmem:[%s512] sm:$0x3]
    %v515 = vsel %vm51, %v513, 0
    %517 = vmatprep.subr.mxu0 0.0
    %518 = vmatpush1.msra.mxu0 0.0
    %519 = vmatprep.subr.mxu0 0.0
    %520 = vmatpush1.msra.mxu0 0.0
    %521 = vmatprep.subr.mxu0 0.0
    %522 = vmatpush1.msra.mxu0 0.0
    %523 = vmatprep.subr.mxu0 0.0
    %524 = vmatpush1.msra.mxu0 0.0
    %525 = vmatprep.subr.mxu0 0.0
    %526 = vmatpush1.msra.mxu0 0.0
    %527 = vmatprep.subr.mxu0 0.0
    %528 = vmatpush1.msra.mxu0 0.0
    %529 = vmatprep.subr.mxu0 0.0
    %530 = vmatpush1.msra.mxu0 0.0
    %531 = vmatprep.subr.mxu0 0.0
    %532 = vmatpush1.msra.mxu0 0.0
    %533 = vmatprep.subr.mxu0 0.0
    %534 = vmatpush1.msra.mxu0 0.0
    %535 = vmatprep.subr.mxu0 0.0
    %536 = vmatpush1.msra.mxu0 0.0
    %537 = vmatprep.subr.mxu0 0.0
    %538 = vmatpush1.msra.mxu0 0.0
    %539 = vmatprep.subr.mxu0 0.0
    %540 = vmatpush1.msra.mxu0 0.0
    %541 = vmatprep.subr.mxu0 0.0
    %542 = vmatpush1.msra.mxu0 0.0
    %543 = vmatprep.subr.mxu0 0.0
    %544 = vmatpush1.msra.mxu0 0.0
    %545 = vmatprep.subr.mxu0 0.0
    %546 = vmatpush1.msra.mxu0 0.0
    %547 = vmatprep.subr.mxu0 0.0
    %548 = vmatpush1.msra.mxu0 %v57
    %549 = vmatprep.subr.mxu0 0.0
    %550 = vmatpush2.msra.mxu0 0.0
    %551 = vmatprep.subr.mxu0 0.0
    %552 = vmatpush2.msra.mxu0 0.0
    %553 = vmatprep.subr.mxu0 0.0
    %554 = vmatpush2.msra.mxu0 0.0
    %555 = vmatprep.subr.mxu0 0.0
    %556 = vmatpush2.msra.mxu0 0.0
    %557 = vmatprep.subr.mxu0 0.0
    %558 = vmatpush2.msra.mxu0 0.0
    %559 = vmatprep.subr.mxu0 0.0
    %560 = vmatpush2.msra.mxu0 0.0
    %561 = vmatprep.subr.mxu0 0.0
    %562 = vmatpush2.msra.mxu0 0.0
    %563 = vmatprep.subr.mxu0 0.0
    %564 = vmatpush2.msra.mxu0 0.0
    %565 = vmatprep.subr.mxu0 0.0
    %566 = vmatpush2.msra.mxu0 0.0
    %567 = vmatprep.subr.mxu0 0.0
    %568 = vmatpush2.msra.mxu0 0.0
    %569 = vmatprep.subr.mxu0 0.0
    %570 = vmatpush2.msra.mxu0 0.0
    %571 = vmatprep.subr.mxu0 0.0
    %572 = vmatpush2.msra.mxu0 0.0
    %573 = vmatprep.subr.mxu0 0.0
    %574 = vmatpush2.msra.mxu0 0.0
    %575 = vmatprep.subr.mxu0 0.0
    %576 = vmatpush2.msra.mxu0 0.0
    %577 = vmatprep.subr.mxu0 0.0
    %578 = vmatpush2.msra.mxu0 0.0
    %579 = vmatprep.subr.mxu0 0.0
    %580 = vmatpush2.msra.mxu0 0.0
    %581 = vmatprep.mubr.f32.mxu0 0.0
    %582 = vmatmul.mubr.f32.gmra.mxu0 %v515
    %v583 = vpop.f32.mrf.mxu0
    %v584 = vadd.f32 %v50, %v583
    %v585 = vpop.f32.mrf.mxu0
    %586 = vdwg.mxu0
    %v587 = vmax.f32 %v584, 0.0
    %v589 = vsel %vm134, %v587, 0
    %591 = vmatprep.subr.mxu0 0.0
    %592 = vmatpush1.msra.mxu0 0.0
    %593 = vmatprep.subr.mxu0 0.0
    %594 = vmatpush1.msra.mxu0 0.0
    %595 = vmatprep.subr.mxu0 0.0
    %596 = vmatpush1.msra.mxu0 0.0
    %597 = vmatprep.subr.mxu0 0.0
    %598 = vmatpush1.msra.mxu0 0.0
    %599 = vmatprep.subr.mxu0 0.0
    %600 = vmatpush1.msra.mxu0 0.0
    %601 = vmatprep.subr.mxu0 0.0
    %602 = vmatpush1.msra.mxu0 0.0
    %603 = vmatprep.subr.mxu0 0.0
    %604 = vmatpush1.msra.mxu0 0.0
    %605 = vmatprep.subr.mxu0 0.0
    %606 = vmatpush1.msra.mxu0 0.0
    %607 = vmatprep.subr.mxu0 0.0
    %608 = vmatpush1.msra.mxu0 0.0
    %609 = vmatprep.subr.mxu0 0.0
    %610 = vmatpush1.msra.mxu0 0.0
    %611 = vmatprep.subr.mxu0 0.0
    %612 = vmatpush1.msra.mxu0 0.0
    %613 = vmatprep.subr.mxu0 0.0
    %614 = vmatpush1.msra.mxu0 0.0
    %615 = vmatprep.subr.mxu0 0.0
    %616 = vmatpush1.msra.mxu0 %v28
    %617 = vmatprep.subr.mxu0 0.0
    %618 = vmatpush1.msra.mxu0 %v27
    %619 = vmatprep.subr.mxu0 0.0
    %620 = vmatpush1.msra.mxu0 %v26
    %621 = vmatprep.subr.mxu0 0.0
    %622 = vmatpush1.msra.mxu0 %v25
    %623 = vmatprep.subr.mxu0 0.0
    %624 = vmatpush2.msra.mxu0 0.0
    %625 = vmatprep.subr.mxu0 0.0
    %626 = vmatpush2.msra.mxu0 0.0
    %627 = vmatprep.subr.mxu0 0.0
    %628 = vmatpush2.msra.mxu0 0.0
    %629 = vmatprep.subr.mxu0 0.0
    %630 = vmatpush2.msra.mxu0 0.0
    %631 = vmatprep.subr.mxu0 0.0
    %632 = vmatpush2.msra.mxu0 0.0
    %633 = vmatprep.subr.mxu0 0.0
    %634 = vmatpush2.msra.mxu0 0.0
    %635 = vmatprep.subr.mxu0 0.0
    %636 = vmatpush2.msra.mxu0 0.0
    %637 = vmatprep.subr.mxu0 0.0
    %638 = vmatpush2.msra.mxu0 0.0
    %639 = vmatprep.subr.mxu0 0.0
    %640 = vmatpush2.msra.mxu0 0.0
    %641 = vmatprep.subr.mxu0 0.0
    %642 = vmatpush2.msra.mxu0 0.0
    %643 = vmatprep.subr.mxu0 0.0
    %644 = vmatpush2.msra.mxu0 0.0
    %645 = vmatprep.subr.mxu0 0.0
    %646 = vmatpush2.msra.mxu0 0.0
    %647 = vmatprep.subr.mxu0 0.0
    %648 = vmatpush2.msra.mxu0 0.0
    %649 = vmatprep.subr.mxu0 0.0
    %650 = vmatpush2.msra.mxu0 0.0
    %651 = vmatprep.subr.mxu0 0.0
    %652 = vmatpush2.msra.mxu0 0.0
    %653 = vmatprep.subr.mxu0 0.0
    %654 = vmatpush2.msra.mxu0 0.0
    %655 = vmatprep.mubr.f32.mxu0 0.0
    %656 = vmatmul.mubr.f32.gmra.mxu0 %v589
    %v657 = vpop.f32.mrf.mxu0
    %v658 = vadd.f32 %v133, %v657
    %v659 = vpop.f32.mrf.mxu0
    %660 = vdwg.mxu0
    %s661 = scalar_lea.vmem [#allocation2], 6
    %662 = vst.msk [vmem:[%s661] sm:$0x3] %vm208, %v658
    %s663 = scalar_lea.vmem %s0, 8
    %v664 = vld [vmem:[%s663] sm:$0x3]
    %v666 = vsel %vm51, %v664, 0
    %668 = vmatprep.subr.mxu0 0.0
    %669 = vmatpush1.msra.mxu0 0.0
    %670 = vmatprep.subr.mxu0 0.0
    %671 = vmatpush1.msra.mxu0 0.0
    %672 = vmatprep.subr.mxu0 0.0
    %673 = vmatpush1.msra.mxu0 0.0
    %674 = vmatprep.subr.mxu0 0.0
    %675 = vmatpush1.msra.mxu0 0.0
    %676 = vmatprep.subr.mxu0 0.0
    %677 = vmatpush1.msra.mxu0 0.0
    %678 = vmatprep.subr.mxu0 0.0
    %679 = vmatpush1.msra.mxu0 0.0
    %680 = vmatprep.subr.mxu0 0.0
    %681 = vmatpush1.msra.mxu0 0.0
    %682 = vmatprep.subr.mxu0 0.0
    %683 = vmatpush1.msra.mxu0 0.0
    %684 = vmatprep.subr.mxu0 0.0
    %685 = vmatpush1.msra.mxu0 0.0
    %686 = vmatprep.subr.mxu0 0.0
    %687 = vmatpush1.msra.mxu0 0.0
    %688 = vmatprep.subr.mxu0 0.0
    %689 = vmatpush1.msra.mxu0 0.0
    %690 = vmatprep.subr.mxu0 0.0
    %691 = vmatpush1.msra.mxu0 0.0
    %692 = vmatprep.subr.mxu0 0.0
    %693 = vmatpush1.msra.mxu0 0.0
    %694 = vmatprep.subr.mxu0 0.0
    %695 = vmatpush1.msra.mxu0 0.0
    %696 = vmatprep.subr.mxu0 0.0
    %697 = vmatpush1.msra.mxu0 0.0
    %698 = vmatprep.subr.mxu0 0.0
    %699 = vmatpush1.msra.mxu0 %v57
    %700 = vmatprep.subr.mxu0 0.0
    %701 = vmatpush2.msra.mxu0 0.0
    %702 = vmatprep.subr.mxu0 0.0
    %703 = vmatpush2.msra.mxu0 0.0
    %704 = vmatprep.subr.mxu0 0.0
    %705 = vmatpush2.msra.mxu0 0.0
    %706 = vmatprep.subr.mxu0 0.0
    %707 = vmatpush2.msra.mxu0 0.0
    %708 = vmatprep.subr.mxu0 0.0
    %709 = vmatpush2.msra.mxu0 0.0
    %710 = vmatprep.subr.mxu0 0.0
    %711 = vmatpush2.msra.mxu0 0.0
    %712 = vmatprep.subr.mxu0 0.0
    %713 = vmatpush2.msra.mxu0 0.0
    %714 = vmatprep.subr.mxu0 0.0
    %715 = vmatpush2.msra.mxu0 0.0
    %716 = vmatprep.subr.mxu0 0.0
    %717 = vmatpush2.msra.mxu0 0.0
    %718 = vmatprep.subr.mxu0 0.0
    %719 = vmatpush2.msra.mxu0 0.0
    %720 = vmatprep.subr.mxu0 0.0
    %721 = vmatpush2.msra.mxu0 0.0
    %722 = vmatprep.subr.mxu0 0.0
    %723 = vmatpush2.msra.mxu0 0.0
    %724 = vmatprep.subr.mxu0 0.0
    %725 = vmatpush2.msra.mxu0 0.0
    %726 = vmatprep.subr.mxu0 0.0
    %727 = vmatpush2.msra.mxu0 0.0
    %728 = vmatprep.subr.mxu0 0.0
    %729 = vmatpush2.msra.mxu0 0.0
    %730 = vmatprep.subr.mxu0 0.0
    %731 = vmatpush2.msra.mxu0 0.0
    %732 = vmatprep.mubr.f32.mxu0 0.0
    %733 = vmatmul.mubr.f32.gmra.mxu0 %v666
    %v734 = vpop.f32.mrf.mxu0
    %v735 = vadd.f32 %v50, %v734
    %v736 = vpop.f32.mrf.mxu0
    %737 = vdwg.mxu0
    %v738 = vmax.f32 %v735, 0.0
    %v740 = vsel %vm134, %v738, 0
    %742 = vmatprep.subr.mxu0 0.0
    %743 = vmatpush1.msra.mxu0 0.0
    %744 = vmatprep.subr.mxu0 0.0
    %745 = vmatpush1.msra.mxu0 0.0
    %746 = vmatprep.subr.mxu0 0.0
    %747 = vmatpush1.msra.mxu0 0.0
    %748 = vmatprep.subr.mxu0 0.0
    %749 = vmatpush1.msra.mxu0 0.0
    %750 = vmatprep.subr.mxu0 0.0
    %751 = vmatpush1.msra.mxu0 0.0
    %752 = vmatprep.subr.mxu0 0.0
    %753 = vmatpush1.msra.mxu0 0.0
    %754 = vmatprep.subr.mxu0 0.0
    %755 = vmatpush1.msra.mxu0 0.0
    %756 = vmatprep.subr.mxu0 0.0
    %757 = vmatpush1.msra.mxu0 0.0
    %758 = vmatprep.subr.mxu0 0.0
    %759 = vmatpush1.msra.mxu0 0.0
    %760 = vmatprep.subr.mxu0 0.0
    %761 = vmatpush1.msra.mxu0 0.0
    %762 = vmatprep.subr.mxu0 0.0
    %763 = vmatpush1.msra.mxu0 0.0
    %764 = vmatprep.subr.mxu0 0.0
    %765 = vmatpush1.msra.mxu0 0.0
    %766 = vmatprep.subr.mxu0 0.0
    %767 = vmatpush1.msra.mxu0 %v28
    %768 = vmatprep.subr.mxu0 0.0
    %769 = vmatpush1.msra.mxu0 %v27
    %770 = vmatprep.subr.mxu0 0.0
    %771 = vmatpush1.msra.mxu0 %v26
    %772 = vmatprep.subr.mxu0 0.0
    %773 = vmatpush1.msra.mxu0 %v25
    %774 = vmatprep.subr.mxu0 0.0
    %775 = vmatpush2.msra.mxu0 0.0
    %776 = vmatprep.subr.mxu0 0.0
    %777 = vmatpush2.msra.mxu0 0.0
    %778 = vmatprep.subr.mxu0 0.0
    %779 = vmatpush2.msra.mxu0 0.0
    %780 = vmatprep.subr.mxu0 0.0
    %781 = vmatpush2.msra.mxu0 0.0
    %782 = vmatprep.subr.mxu0 0.0
    %783 = vmatpush2.msra.mxu0 0.0
    %784 = vmatprep.subr.mxu0 0.0
    %785 = vmatpush2.msra.mxu0 0.0
    %786 = vmatprep.subr.mxu0 0.0
    %787 = vmatpush2.msra.mxu0 0.0
    %788 = vmatprep.subr.mxu0 0.0
    %789 = vmatpush2.msra.mxu0 0.0
    %790 = vmatprep.subr.mxu0 0.0
    %791 = vmatpush2.msra.mxu0 0.0
    %792 = vmatprep.subr.mxu0 0.0
    %793 = vmatpush2.msra.mxu0 0.0
    %794 = vmatprep.subr.mxu0 0.0
    %795 = vmatpush2.msra.mxu0 0.0
    %796 = vmatprep.subr.mxu0 0.0
    %797 = vmatpush2.msra.mxu0 0.0
    %798 = vmatprep.subr.mxu0 0.0
    %799 = vmatpush2.msra.mxu0 0.0
    %800 = vmatprep.subr.mxu0 0.0
    %801 = vmatpush2.msra.mxu0 0.0
    %802 = vmatprep.subr.mxu0 0.0
    %803 = vmatpush2.msra.mxu0 0.0
    %804 = vmatprep.subr.mxu0 0.0
    %805 = vmatpush2.msra.mxu0 0.0
    %806 = vmatprep.mubr.f32.mxu0 0.0
    %807 = vmatmul.mubr.f32.gmra.mxu0 %v740
    %v808 = vpop.f32.mrf.mxu0
    %v809 = vadd.f32 %v133, %v808
    %v810 = vpop.f32.mrf.mxu0
    %811 = vdwg.mxu0
    %s812 = scalar_lea.vmem [#allocation2], 8
    %813 = vst.msk [vmem:[%s812] sm:$0x3] %vm208, %v809
    %s814 = scalar_lea.vmem %s0, 10
    %v815 = vld [vmem:[%s814] sm:$0x3]
    %v817 = vsel %vm51, %v815, 0
    %819 = vmatprep.subr.mxu0 0.0
    %820 = vmatpush1.msra.mxu0 0.0
    %821 = vmatprep.subr.mxu0 0.0
    %822 = vmatpush1.msra.mxu0 0.0
    %823 = vmatprep.subr.mxu0 0.0
    %824 = vmatpush1.msra.mxu0 0.0
    %825 = vmatprep.subr.mxu0 0.0
    %826 = vmatpush1.msra.mxu0 0.0
    %827 = vmatprep.subr.mxu0 0.0
    %828 = vmatpush1.msra.mxu0 0.0
    %829 = vmatprep.subr.mxu0 0.0
    %830 = vmatpush1.msra.mxu0 0.0
    %831 = vmatprep.subr.mxu0 0.0
    %832 = vmatpush1.msra.mxu0 0.0
    %833 = vmatprep.subr.mxu0 0.0
    %834 = vmatpush1.msra.mxu0 0.0
    %835 = vmatprep.subr.mxu0 0.0
    %836 = vmatpush1.msra.mxu0 0.0
    %837 = vmatprep.subr.mxu0 0.0
    %838 = vmatpush1.msra.mxu0 0.0
    %839 = vmatprep.subr.mxu0 0.0
    %840 = vmatpush1.msra.mxu0 0.0
    %841 = vmatprep.subr.mxu0 0.0
    %842 = vmatpush1.msra.mxu0 0.0
    %843 = vmatprep.subr.mxu0 0.0
    %844 = vmatpush1.msra.mxu0 0.0
    %845 = vmatprep.subr.mxu0 0.0
    %846 = vmatpush1.msra.mxu0 0.0
    %847 = vmatprep.subr.mxu0 0.0
    %848 = vmatpush1.msra.mxu0 0.0
    %849 = vmatprep.subr.mxu0 0.0
    %850 = vmatpush1.msra.mxu0 %v57
    %851 = vmatprep.subr.mxu0 0.0
    %852 = vmatpush2.msra.mxu0 0.0
    %853 = vmatprep.subr.mxu0 0.0
    %854 = vmatpush2.msra.mxu0 0.0
    %855 = vmatprep.subr.mxu0 0.0
    %856 = vmatpush2.msra.mxu0 0.0
    %857 = vmatprep.subr.mxu0 0.0
    %858 = vmatpush2.msra.mxu0 0.0
    %859 = vmatprep.subr.mxu0 0.0
    %860 = vmatpush2.msra.mxu0 0.0
    %861 = vmatprep.subr.mxu0 0.0
    %862 = vmatpush2.msra.mxu0 0.0
    %863 = vmatprep.subr.mxu0 0.0
    %864 = vmatpush2.msra.mxu0 0.0
    %865 = vmatprep.subr.mxu0 0.0
    %866 = vmatpush2.msra.mxu0 0.0
    %867 = vmatprep.subr.mxu0 0.0
    %868 = vmatpush2.msra.mxu0 0.0
    %869 = vmatprep.subr.mxu0 0.0
    %870 = vmatpush2.msra.mxu0 0.0
    %871 = vmatprep.subr.mxu0 0.0
    %872 = vmatpush2.msra.mxu0 0.0
    %873 = vmatprep.subr.mxu0 0.0
    %874 = vmatpush2.msra.mxu0 0.0
    %875 = vmatprep.subr.mxu0 0.0
    %876 = vmatpush2.msra.mxu0 0.0
    %877 = vmatprep.subr.mxu0 0.0
    %878 = vmatpush2.msra.mxu0 0.0
    %879 = vmatprep.subr.mxu0 0.0
    %880 = vmatpush2.msra.mxu0 0.0
    %881 = vmatprep.subr.mxu0 0.0
    %882 = vmatpush2.msra.mxu0 0.0
    %883 = vmatprep.mubr.f32.mxu0 0.0
    %884 = vmatmul.mubr.f32.gmra.mxu0 %v817
    %v885 = vpop.f32.mrf.mxu0
    %v886 = vadd.f32 %v50, %v885
    %v887 = vpop.f32.mrf.mxu0
    %888 = vdwg.mxu0
    %v889 = vmax.f32 %v886, 0.0
    %v891 = vsel %vm134, %v889, 0
    %893 = vmatprep.subr.mxu0 0.0
    %894 = vmatpush1.msra.mxu0 0.0
    %895 = vmatprep.subr.mxu0 0.0
    %896 = vmatpush1.msra.mxu0 0.0
    %897 = vmatprep.subr.mxu0 0.0
    %898 = vmatpush1.msra.mxu0 0.0
    %899 = vmatprep.subr.mxu0 0.0
    %900 = vmatpush1.msra.mxu0 0.0
    %901 = vmatprep.subr.mxu0 0.0
    %902 = vmatpush1.msra.mxu0 0.0
    %903 = vmatprep.subr.mxu0 0.0
    %904 = vmatpush1.msra.mxu0 0.0
    %905 = vmatprep.subr.mxu0 0.0
    %906 = vmatpush1.msra.mxu0 0.0
    %907 = vmatprep.subr.mxu0 0.0
    %908 = vmatpush1.msra.mxu0 0.0
    %909 = vmatprep.subr.mxu0 0.0
    %910 = vmatpush1.msra.mxu0 0.0
    %911 = vmatprep.subr.mxu0 0.0
    %912 = vmatpush1.msra.mxu0 0.0
    %913 = vmatprep.subr.mxu0 0.0
    %914 = vmatpush1.msra.mxu0 0.0
    %915 = vmatprep.subr.mxu0 0.0
    %916 = vmatpush1.msra.mxu0 0.0
    %917 = vmatprep.subr.mxu0 0.0
    %918 = vmatpush1.msra.mxu0 %v28
    %919 = vmatprep.subr.mxu0 0.0
    %920 = vmatpush1.msra.mxu0 %v27
    %921 = vmatprep.subr.mxu0 0.0
    %922 = vmatpush1.msra.mxu0 %v26
    %923 = vmatprep.subr.mxu0 0.0
    %924 = vmatpush1.msra.mxu0 %v25
    %925 = vmatprep.subr.mxu0 0.0
    %926 = vmatpush2.msra.mxu0 0.0
    %927 = vmatprep.subr.mxu0 0.0
    %928 = vmatpush2.msra.mxu0 0.0
    %929 = vmatprep.subr.mxu0 0.0
    %930 = vmatpush2.msra.mxu0 0.0
    %931 = vmatprep.subr.mxu0 0.0
    %932 = vmatpush2.msra.mxu0 0.0
    %933 = vmatprep.subr.mxu0 0.0
    %934 = vmatpush2.msra.mxu0 0.0
    %935 = vmatprep.subr.mxu0 0.0
    %936 = vmatpush2.msra.mxu0 0.0
    %937 = vmatprep.subr.mxu0 0.0
    %938 = vmatpush2.msra.mxu0 0.0
    %939 = vmatprep.subr.mxu0 0.0
    %940 = vmatpush2.msra.mxu0 0.0
    %941 = vmatprep.subr.mxu0 0.0
    %942 = vmatpush2.msra.mxu0 0.0
    %943 = vmatprep.subr.mxu0 0.0
    %944 = vmatpush2.msra.mxu0 0.0
    %945 = vmatprep.subr.mxu0 0.0
    %946 = vmatpush2.msra.mxu0 0.0
    %947 = vmatprep.subr.mxu0 0.0
    %948 = vmatpush2.msra.mxu0 0.0
    %949 = vmatprep.subr.mxu0 0.0
    %950 = vmatpush2.msra.mxu0 0.0
    %951 = vmatprep.subr.mxu0 0.0
    %952 = vmatpush2.msra.mxu0 0.0
    %953 = vmatprep.subr.mxu0 0.0
    %954 = vmatpush2.msra.mxu0 0.0
    %955 = vmatprep.subr.mxu0 0.0
    %956 = vmatpush2.msra.mxu0 0.0
    %957 = vmatprep.mubr.f32.mxu0 0.0
    %958 = vmatmul.mubr.f32.gmra.mxu0 %v891
    %v959 = vpop.f32.mrf.mxu0
    %v960 = vadd.f32 %v133, %v959
    %v961 = vpop.f32.mrf.mxu0
    %962 = vdwg.mxu0
    %s963 = scalar_lea.vmem [#allocation2], 10
    %964 = vst.msk [vmem:[%s963] sm:$0x3] %vm208, %v960
    %s965 = scalar_lea.vmem %s0, 12
    %v966 = vld [vmem:[%s965] sm:$0x3]
    %v968 = vsel %vm51, %v966, 0
    %970 = vmatprep.subr.mxu0 0.0
    %971 = vmatpush1.msra.mxu0 0.0
    %972 = vmatprep.subr.mxu0 0.0
    %973 = vmatpush1.msra.mxu0 0.0
    %974 = vmatprep.subr.mxu0 0.0
    %975 = vmatpush1.msra.mxu0 0.0
    %976 = vmatprep.subr.mxu0 0.0
    %977 = vmatpush1.msra.mxu0 0.0
    %978 = vmatprep.subr.mxu0 0.0
    %979 = vmatpush1.msra.mxu0 0.0
    %980 = vmatprep.subr.mxu0 0.0
    %981 = vmatpush1.msra.mxu0 0.0
    %982 = vmatprep.subr.mxu0 0.0
    %983 = vmatpush1.msra.mxu0 0.0
    %984 = vmatprep.subr.mxu0 0.0
    %985 = vmatpush1.msra.mxu0 0.0
    %986 = vmatprep.subr.mxu0 0.0
    %987 = vmatpush1.msra.mxu0 0.0
    %988 = vmatprep.subr.mxu0 0.0
    %989 = vmatpush1.msra.mxu0 0.0
    %990 = vmatprep.subr.mxu0 0.0
    %991 = vmatpush1.msra.mxu0 0.0
    %992 = vmatprep.subr.mxu0 0.0
    %993 = vmatpush1.msra.mxu0 0.0
    %994 = vmatprep.subr.mxu0 0.0
    %995 = vmatpush1.msra.mxu0 0.0
    %996 = vmatprep.subr.mxu0 0.0
    %997 = vmatpush1.msra.mxu0 0.0
    %998 = vmatprep.subr.mxu0 0.0
    %999 = vmatpush1.msra.mxu0 0.0
    %1000 = vmatprep.subr.mxu0 0.0
    %1001 = vmatpush1.msra.mxu0 %v57
    %1002 = vmatprep.subr.mxu0 0.0
    %1003 = vmatpush2.msra.mxu0 0.0
    %1004 = vmatprep.subr.mxu0 0.0
    %1005 = vmatpush2.msra.mxu0 0.0
    %1006 = vmatprep.subr.mxu0 0.0
    %1007 = vmatpush2.msra.mxu0 0.0
    %1008 = vmatprep.subr.mxu0 0.0
    %1009 = vmatpush2.msra.mxu0 0.0
    %1010 = vmatprep.subr.mxu0 0.0
    %1011 = vmatpush2.msra.mxu0 0.0
    %1012 = vmatprep.subr.mxu0 0.0
    %1013 = vmatpush2.msra.mxu0 0.0
    %1014 = vmatprep.subr.mxu0 0.0
    %1015 = vmatpush2.msra.mxu0 0.0
    %1016 = vmatprep.subr.mxu0 0.0
    %1017 = vmatpush2.msra.mxu0 0.0
    %1018 = vmatprep.subr.mxu0 0.0
    %1019 = vmatpush2.msra.mxu0 0.0
    %1020 = vmatprep.subr.mxu0 0.0
    %1021 = vmatpush2.msra.mxu0 0.0
    %1022 = vmatprep.subr.mxu0 0.0
    %1023 = vmatpush2.msra.mxu0 0.0
    %1024 = vmatprep.subr.mxu0 0.0
    %1025 = vmatpush2.msra.mxu0 0.0
    %1026 = vmatprep.subr.mxu0 0.0
    %1027 = vmatpush2.msra.mxu0 0.0
    %1028 = vmatprep.subr.mxu0 0.0
    %1029 = vmatpush2.msra.mxu0 0.0
    %1030 = vmatprep.subr.mxu0 0.0
    %1031 = vmatpush2.msra.mxu0 0.0
    %1032 = vmatprep.subr.mxu0 0.0
    %1033 = vmatpush2.msra.mxu0 0.0
    %1034 = vmatprep.mubr.f32.mxu0 0.0
    %1035 = vmatmul.mubr.f32.gmra.mxu0 %v968
    %v1036 = vpop.f32.mrf.mxu0
    %v1037 = vadd.f32 %v50, %v1036
    %v1038 = vpop.f32.mrf.mxu0
    %1039 = vdwg.mxu0
    %v1040 = vmax.f32 %v1037, 0.0
    %v1042 = vsel %vm134, %v1040, 0
    %1044 = vmatprep.subr.mxu0 0.0
    %1045 = vmatpush1.msra.mxu0 0.0
    %1046 = vmatprep.subr.mxu0 0.0
    %1047 = vmatpush1.msra.mxu0 0.0
    %1048 = vmatprep.subr.mxu0 0.0
    %1049 = vmatpush1.msra.mxu0 0.0
    %1050 = vmatprep.subr.mxu0 0.0
    %1051 = vmatpush1.msra.mxu0 0.0
    %1052 = vmatprep.subr.mxu0 0.0
    %1053 = vmatpush1.msra.mxu0 0.0
    %1054 = vmatprep.subr.mxu0 0.0
    %1055 = vmatpush1.msra.mxu0 0.0
    %1056 = vmatprep.subr.mxu0 0.0
    %1057 = vmatpush1.msra.mxu0 0.0
    %1058 = vmatprep.subr.mxu0 0.0
    %1059 = vmatpush1.msra.mxu0 0.0
    %1060 = vmatprep.subr.mxu0 0.0
    %1061 = vmatpush1.msra.mxu0 0.0
    %1062 = vmatprep.subr.mxu0 0.0
    %1063 = vmatpush1.msra.mxu0 0.0
    %1064 = vmatprep.subr.mxu0 0.0
    %1065 = vmatpush1.msra.mxu0 0.0
    %1066 = vmatprep.subr.mxu0 0.0
    %1067 = vmatpush1.msra.mxu0 0.0
    %1068 = vmatprep.subr.mxu0 0.0
    %1069 = vmatpush1.msra.mxu0 %v28
    %1070 = vmatprep.subr.mxu0 0.0
    %1071 = vmatpush1.msra.mxu0 %v27
    %1072 = vmatprep.subr.mxu0 0.0
    %1073 = vmatpush1.msra.mxu0 %v26
    %1074 = vmatprep.subr.mxu0 0.0
    %1075 = vmatpush1.msra.mxu0 %v25
    %1076 = vmatprep.subr.mxu0 0.0
    %1077 = vmatpush2.msra.mxu0 0.0
    %1078 = vmatprep.subr.mxu0 0.0
    %1079 = vmatpush2.msra.mxu0 0.0
    %1080 = vmatprep.subr.mxu0 0.0
    %1081 = vmatpush2.msra.mxu0 0.0
    %1082 = vmatprep.subr.mxu0 0.0
    %1083 = vmatpush2.msra.mxu0 0.0
    %1084 = vmatprep.subr.mxu0 0.0
    %1085 = vmatpush2.msra.mxu0 0.0
    %1086 = vmatprep.subr.mxu0 0.0
    %1087 = vmatpush2.msra.mxu0 0.0
    %1088 = vmatprep.subr.mxu0 0.0
    %1089 = vmatpush2.msra.mxu0 0.0
    %1090 = vmatprep.subr.mxu0 0.0
    %1091 = vmatpush2.msra.mxu0 0.0
    %1092 = vmatprep.subr.mxu0 0.0
    %1093 = vmatpush2.msra.mxu0 0.0
    %1094 = vmatprep.subr.mxu0 0.0
    %1095 = vmatpush2.msra.mxu0 0.0
    %1096 = vmatprep.subr.mxu0 0.0
    %1097 = vmatpush2.msra.mxu0 0.0
    %1098 = vmatprep.subr.mxu0 0.0
    %1099 = vmatpush2.msra.mxu0 0.0
    %1100 = vmatprep.subr.mxu0 0.0
    %1101 = vmatpush2.msra.mxu0 0.0
    %1102 = vmatprep.subr.mxu0 0.0
    %1103 = vmatpush2.msra.mxu0 0.0
    %1104 = vmatprep.subr.mxu0 0.0
    %1105 = vmatpush2.msra.mxu0 0.0
    %1106 = vmatprep.subr.mxu0 0.0
    %1107 = vmatpush2.msra.mxu0 0.0
    %1108 = vmatprep.mubr.f32.mxu0 0.0
    %1109 = vmatmul.mubr.f32.gmra.mxu0 %v1042
    %v1110 = vpop.f32.mrf.mxu0
    %v1111 = vadd.f32 %v133, %v1110
    %v1112 = vpop.f32.mrf.mxu0
    %1113 = vdwg.mxu0
    %s1114 = scalar_lea.vmem [#allocation2], 12
    %1115 = vst.msk [vmem:[%s1114] sm:$0x3] %vm208, %v1111
    %s1116 = scalar_lea.vmem %s0, 14
    %v1117 = vld [vmem:[%s1116] sm:$0x3]
    %v1119 = vsel %vm51, %v1117, 0
    %1121 = vmatprep.subr.mxu0 0.0
    %1122 = vmatpush1.msra.mxu0 0.0
    %1123 = vmatprep.subr.mxu0 0.0
    %1124 = vmatpush1.msra.mxu0 0.0
    %1125 = vmatprep.subr.mxu0 0.0
    %1126 = vmatpush1.msra.mxu0 0.0
    %1127 = vmatprep.subr.mxu0 0.0
    %1128 = vmatpush1.msra.mxu0 0.0
    %1129 = vmatprep.subr.mxu0 0.0
    %1130 = vmatpush1.msra.mxu0 0.0
    %1131 = vmatprep.subr.mxu0 0.0
    %1132 = vmatpush1.msra.mxu0 0.0
    %1133 = vmatprep.subr.mxu0 0.0
    %1134 = vmatpush1.msra.mxu0 0.0
    %1135 = vmatprep.subr.mxu0 0.0
    %1136 = vmatpush1.msra.mxu0 0.0
    %1137 = vmatprep.subr.mxu0 0.0
    %1138 = vmatpush1.msra.mxu0 0.0
    %1139 = vmatprep.subr.mxu0 0.0
    %1140 = vmatpush1.msra.mxu0 0.0
    %1141 = vmatprep.subr.mxu0 0.0
    %1142 = vmatpush1.msra.mxu0 0.0
    %1143 = vmatprep.subr.mxu0 0.0
    %1144 = vmatpush1.msra.mxu0 0.0
    %1145 = vmatprep.subr.mxu0 0.0
    %1146 = vmatpush1.msra.mxu0 0.0
    %1147 = vmatprep.subr.mxu0 0.0
    %1148 = vmatpush1.msra.mxu0 0.0
    %1149 = vmatprep.subr.mxu0 0.0
    %1150 = vmatpush1.msra.mxu0 0.0
    %1151 = vmatprep.subr.mxu0 0.0
    %1152 = vmatpush1.msra.mxu0 %v57
    %1153 = vmatprep.subr.mxu0 0.0
    %1154 = vmatpush2.msra.mxu0 0.0
    %1155 = vmatprep.subr.mxu0 0.0
    %1156 = vmatpush2.msra.mxu0 0.0
    %1157 = vmatprep.subr.mxu0 0.0
    %1158 = vmatpush2.msra.mxu0 0.0
    %1159 = vmatprep.subr.mxu0 0.0
    %1160 = vmatpush2.msra.mxu0 0.0
    %1161 = vmatprep.subr.mxu0 0.0
    %1162 = vmatpush2.msra.mxu0 0.0
    %1163 = vmatprep.subr.mxu0 0.0
    %1164 = vmatpush2.msra.mxu0 0.0
    %1165 = vmatprep.subr.mxu0 0.0
    %1166 = vmatpush2.msra.mxu0 0.0
    %1167 = vmatprep.subr.mxu0 0.0
    %1168 = vmatpush2.msra.mxu0 0.0
    %1169 = vmatprep.subr.mxu0 0.0
    %1170 = vmatpush2.msra.mxu0 0.0
    %1171 = vmatprep.subr.mxu0 0.0
    %1172 = vmatpush2.msra.mxu0 0.0
    %1173 = vmatprep.subr.mxu0 0.0
    %1174 = vmatpush2.msra.mxu0 0.0
    %1175 = vmatprep.subr.mxu0 0.0
    %1176 = vmatpush2.msra.mxu0 0.0
    %1177 = vmatprep.subr.mxu0 0.0
    %1178 = vmatpush2.msra.mxu0 0.0
    %1179 = vmatprep.subr.mxu0 0.0
    %1180 = vmatpush2.msra.mxu0 0.0
    %1181 = vmatprep.subr.mxu0 0.0
    %1182 = vmatpush2.msra.mxu0 0.0
    %1183 = vmatprep.subr.mxu0 0.0
    %1184 = vmatpush2.msra.mxu0 0.0
    %1185 = vmatprep.mubr.f32.mxu0 0.0
    %1186 = vmatmul.mubr.f32.gmra.mxu0 %v1119
    %v1187 = vpop.f32.mrf.mxu0
    %v1188 = vadd.f32 %v50, %v1187
    %v1189 = vpop.f32.mrf.mxu0
    %1190 = vdwg.mxu0
    %v1191 = vmax.f32 %v1188, 0.0
    %v1193 = vsel %vm134, %v1191, 0
    %1195 = vmatprep.subr.mxu0 0.0
    %1196 = vmatpush1.msra.mxu0 0.0
    %1197 = vmatprep.subr.mxu0 0.0
    %1198 = vmatpush1.msra.mxu0 0.0
    %1199 = vmatprep.subr.mxu0 0.0
    %1200 = vmatpush1.msra.mxu0 0.0
    %1201 = vmatprep.subr.mxu0 0.0
    %1202 = vmatpush1.msra.mxu0 0.0
    %1203 = vmatprep.subr.mxu0 0.0
    %1204 = vmatpush1.msra.mxu0 0.0
    %1205 = vmatprep.subr.mxu0 0.0
    %1206 = vmatpush1.msra.mxu0 0.0
    %1207 = vmatprep.subr.mxu0 0.0
    %1208 = vmatpush1.msra.mxu0 0.0
    %1209 = vmatprep.subr.mxu0 0.0
    %1210 = vmatpush1.msra.mxu0 0.0
    %1211 = vmatprep.subr.mxu0 0.0
    %1212 = vmatpush1.msra.mxu0 0.0
    %1213 = vmatprep.subr.mxu0 0.0
    %1214 = vmatpush1.msra.mxu0 0.0
    %1215 = vmatprep.subr.mxu0 0.0
    %1216 = vmatpush1.msra.mxu0 0.0
    %1217 = vmatprep.subr.mxu0 0.0
    %1218 = vmatpush1.msra.mxu0 0.0
    %1219 = vmatprep.subr.mxu0 0.0
    %1220 = vmatpush1.msra.mxu0 %v28
    %1221 = vmatprep.subr.mxu0 0.0
    %1222 = vmatpush1.msra.mxu0 %v27
    %1223 = vmatprep.subr.mxu0 0.0
    %1224 = vmatpush1.msra.mxu0 %v26
    %1225 = vmatprep.subr.mxu0 0.0
    %1226 = vmatpush1.msra.mxu0 %v25
    %1227 = vmatprep.subr.mxu0 0.0
    %1228 = vmatpush2.msra.mxu0 0.0
    %1229 = vmatprep.subr.mxu0 0.0
    %1230 = vmatpush2.msra.mxu0 0.0
    %1231 = vmatprep.subr.mxu0 0.0
    %1232 = vmatpush2.msra.mxu0 0.0
    %1233 = vmatprep.subr.mxu0 0.0
    %1234 = vmatpush2.msra.mxu0 0.0
    %1235 = vmatprep.subr.mxu0 0.0
    %1236 = vmatpush2.msra.mxu0 0.0
    %1237 = vmatprep.subr.mxu0 0.0
    %1238 = vmatpush2.msra.mxu0 0.0
    %1239 = vmatprep.subr.mxu0 0.0
    %1240 = vmatpush2.msra.mxu0 0.0
    %1241 = vmatprep.subr.mxu0 0.0
    %1242 = vmatpush2.msra.mxu0 0.0
    %1243 = vmatprep.subr.mxu0 0.0
    %1244 = vmatpush2.msra.mxu0 0.0
    %1245 = vmatprep.subr.mxu0 0.0
    %1246 = vmatpush2.msra.mxu0 0.0
    %1247 = vmatprep.subr.mxu0 0.0
    %1248 = vmatpush2.msra.mxu0 0.0
    %1249 = vmatprep.subr.mxu0 0.0
    %1250 = vmatpush2.msra.mxu0 0.0
    %1251 = vmatprep.subr.mxu0 0.0
    %1252 = vmatpush2.msra.mxu0 0.0
    %1253 = vmatprep.subr.mxu0 0.0
    %1254 = vmatpush2.msra.mxu0 0.0
    %1255 = vmatprep.subr.mxu0 0.0
    %1256 = vmatpush2.msra.mxu0 0.0
    %1257 = vmatprep.subr.mxu0 0.0
    %1258 = vmatpush2.msra.mxu0 0.0
    %1259 = vmatprep.mubr.f32.mxu0 0.0
    %1260 = vmatmul.mubr.f32.gmra.mxu0 %v1193
    %v1261 = vpop.f32.mrf.mxu0
    %v1262 = vadd.f32 %v133, %v1261
    %v1263 = vpop.f32.mrf.mxu0
    %1264 = vdwg.mxu0
    %s1265 = scalar_lea.vmem [#allocation2], 14
    %1266 = vst.msk [vmem:[%s1265] sm:$0x3] %vm208, %v1262
    %v1267 = vld [vmem:[#allocation2] sm:$0x3]
    %v1268 = vld [vmem:[#allocation2 + $0x2] sm:$0x3]
    %v1269 = vld [vmem:[#allocation2 + $0x4] sm:$0x3]
    %v1270 = vld [vmem:[#allocation2 + $0x6] sm:$0x3]
    %v1271 = vld [vmem:[#allocation2 + $0x8] sm:$0x3]
    %v1272 = vld [vmem:[#allocation2 + $0xa] sm:$0x3]
    %v1273 = vld [vmem:[#allocation2 + $0xc] sm:$0x3]
    %v1274 = vld [vmem:[#allocation2 + $0xe] sm:$0x3]
    %v1276 = vsel %vm134, 0.0, 0
    %1278 = vmatprep.subr.mxu0 0.0
    %1279 = vmatpush1.msra.mxu0 0.0
    %1280 = vmatprep.subr.mxu0 0.0
    %1281 = vmatpush1.msra.mxu0 0.0
    %1282 = vmatprep.subr.mxu0 0.0
    %1283 = vmatpush1.msra.mxu0 0.0
    %1284 = vmatprep.subr.mxu0 0.0
    %1285 = vmatpush1.msra.mxu0 0.0
    %1286 = vmatprep.subr.mxu0 0.0
    %1287 = vmatpush1.msra.mxu0 0.0
    %1288 = vmatprep.subr.mxu0 0.0
    %1289 = vmatpush1.msra.mxu0 0.0
    %1290 = vmatprep.subr.mxu0 0.0
    %1291 = vmatpush1.msra.mxu0 0.0
    %1292 = vmatprep.subr.mxu0 0.0
    %1293 = vmatpush1.msra.mxu0 0.0
    %1294 = vmatprep.subr.mxu0 0.0
    %1295 = vmatpush1.msra.mxu0 0.0
    %1296 = vmatprep.subr.mxu0 0.0
    %1297 = vmatpush1.msra.mxu0 0.0
    %1298 = vmatprep.subr.mxu0 0.0
    %1299 = vmatpush1.msra.mxu0 0.0
    %1300 = vmatprep.subr.mxu0 0.0
    %1301 = vmatpush1.msra.mxu0 0.0
    %1302 = vmatprep.subr.mxu0 0.0
    %1303 = vmatpush1.msra.mxu0 %v36
    %1304 = vmatprep.subr.mxu0 0.0
    %1305 = vmatpush1.msra.mxu0 %v35
    %1306 = vmatprep.subr.mxu0 0.0
    %1307 = vmatpush1.msra.mxu0 %v34
    %1308 = vmatprep.subr.mxu0 0.0
    %1309 = vmatpush1.msra.mxu0 %v33
    %1310 = vmatprep.subr.mxu0 0.0
    %1311 = vmatpush2.msra.mxu0 0.0
    %1312 = vmatprep.subr.mxu0 0.0
    %1313 = vmatpush2.msra.mxu0 0.0
    %1314 = vmatprep.subr.mxu0 0.0
    %1315 = vmatpush2.msra.mxu0 0.0
    %1316 = vmatprep.subr.mxu0 0.0
    %1317 = vmatpush2.msra.mxu0 0.0
    %1318 = vmatprep.subr.mxu0 0.0
    %1319 = vmatpush2.msra.mxu0 0.0
    %1320 = vmatprep.subr.mxu0 0.0
    %1321 = vmatpush2.msra.mxu0 0.0
    %1322 = vmatprep.subr.mxu0 0.0
    %1323 = vmatpush2.msra.mxu0 0.0
    %1324 = vmatprep.subr.mxu0 0.0
    %1325 = vmatpush2.msra.mxu0 0.0
    %1326 = vmatprep.subr.mxu0 0.0
    %1327 = vmatpush2.msra.mxu0 0.0
    %1328 = vmatprep.subr.mxu0 0.0
    %1329 = vmatpush2.msra.mxu0 0.0
    %1330 = vmatprep.subr.mxu0 0.0
    %1331 = vmatpush2.msra.mxu0 0.0
    %1332 = vmatprep.subr.mxu0 0.0
    %1333 = vmatpush2.msra.mxu0 0.0
    %1334 = vmatprep.subr.mxu0 0.0
    %1335 = vmatpush2.msra.mxu0 0.0
    %1336 = vmatprep.subr.mxu0 0.0
    %1337 = vmatpush2.msra.mxu0 0.0
    %1338 = vmatprep.subr.mxu0 0.0
    %1339 = vmatpush2.msra.mxu0 0.0
    %1340 = vmatprep.subr.mxu0 0.0
    %1341 = vmatpush2.msra.mxu0 0.0
    %1342 = vmatprep.mubr.f32.mxu0 0.0
    %1343 = vmatmul.mubr.f32.gmra.mxu0 %v1276
    %v1344 = vpop.f32.mrf.mxu0
    %v1345 = vadd.f32 0.0, %v1344
    %v1346 = vpop.f32.mrf.mxu0
    %1347 = vdwg.mxu0
    %1348 = vmatprep.subr.mxu0 0.0
    %1349 = vmatpush1.msra.mxu0 0.0
    %1350 = vmatprep.subr.mxu0 0.0
    %1351 = vmatpush1.msra.mxu0 0.0
    %1352 = vmatprep.subr.mxu0 0.0
    %1353 = vmatpush1.msra.mxu0 0.0
    %1354 = vmatprep.subr.mxu0 0.0
    %1355 = vmatpush1.msra.mxu0 0.0
    %1356 = vmatprep.subr.mxu0 0.0
    %1357 = vmatpush1.msra.mxu0 0.0
    %1358 = vmatprep.subr.mxu0 0.0
    %1359 = vmatpush1.msra.mxu0 0.0
    %1360 = vmatprep.subr.mxu0 0.0
    %1361 = vmatpush1.msra.mxu0 0.0
    %1362 = vmatprep.subr.mxu0 0.0
    %1363 = vmatpush1.msra.mxu0 0.0
    %1364 = vmatprep.subr.mxu0 0.0
    %1365 = vmatpush1.msra.mxu0 0.0
    %1366 = vmatprep.subr.mxu0 0.0
    %1367 = vmatpush1.msra.mxu0 0.0
    %1368 = vmatprep.subr.mxu0 0.0
    %1369 = vmatpush1.msra.mxu0 0.0
    %1370 = vmatprep.subr.mxu0 0.0
    %1371 = vmatpush1.msra.mxu0 0.0
    %1372 = vmatprep.subr.mxu0 0.0
    %1373 = vmatpush1.msra.mxu0 %v32
    %1374 = vmatprep.subr.mxu0 0.0
    %1375 = vmatpush1.msra.mxu0 %v31
    %1376 = vmatprep.subr.mxu0 0.0
    %1377 = vmatpush1.msra.mxu0 %v30
    %1378 = vmatprep.subr.mxu0 0.0
    %1379 = vmatpush1.msra.mxu0 %v29
    %1380 = vmatprep.subr.mxu0 0.0
    %1381 = vmatpush2.msra.mxu0 0.0
    %1382 = vmatprep.subr.mxu0 0.0
    %1383 = vmatpush2.msra.mxu0 0.0
    %1384 = vmatprep.subr.mxu0 0.0
    %1385 = vmatpush2.msra.mxu0 0.0
    %1386 = vmatprep.subr.mxu0 0.0
    %1387 = vmatpush2.msra.mxu0 0.0
    %1388 = vmatprep.subr.mxu0 0.0
    %1389 = vmatpush2.msra.mxu0 0.0
    %1390 = vmatprep.subr.mxu0 0.0
    %1391 = vmatpush2.msra.mxu0 0.0
    %1392 = vmatprep.subr.mxu0 0.0
    %1393 = vmatpush2.msra.mxu0 0.0
    %1394 = vmatprep.subr.mxu0 0.0
    %1395 = vmatpush2.msra.mxu0 0.0
    %1396 = vmatprep.subr.mxu0 0.0
    %1397 = vmatpush2.msra.mxu0 0.0
    %1398 = vmatprep.subr.mxu0 0.0
    %1399 = vmatpush2.msra.mxu0 0.0
    %1400 = vmatprep.subr.mxu0 0.0
    %1401 = vmatpush2.msra.mxu0 0.0
    %1402 = vmatprep.subr.mxu0 0.0
    %1403 = vmatpush2.msra.mxu0 0.0
    %1404 = vmatprep.subr.mxu0 0.0
    %1405 = vmatpush2.msra.mxu0 0.0
    %1406 = vmatprep.subr.mxu0 0.0
    %1407 = vmatpush2.msra.mxu0 0.0
    %1408 = vmatprep.subr.mxu0 0.0
    %1409 = vmatpush2.msra.mxu0 0.0
    %1410 = vmatprep.subr.mxu0 0.0
    %1411 = vmatpush2.msra.mxu0 0.0
    %1412 = vmatprep.mubr.f32.mxu0 0.0
    %1413 = vmatmul.mubr.f32.gmra.mxu0 %v1276
    %v1414 = vpop.f32.mrf.mxu0
    %v1415 = vadd.f32 %v1345, %v1414
    %v1416 = vpop.f32.mrf.mxu0
    %1417 = vdwg.mxu0
    %v1418 = vlaneseq
    %v1419 = vshrl.u32 %v1418, 7
    %v1420 = vsub.s32 2, %v1419
    %v1421 = vrot.slane %v45, %v1420
    %v1422 = vadd.f32 %v1415, %v1421
    %v1423 = vxor.u32 %v1422, 2147483648
    %v1424 = vmul.f32 %v1423, 1.442695
    %v1425 = vpow.pop %v1424
    %v1426 = vadd.f32 %v1425, 1.0
    %v1427 = vrcp.pop %v1426
    %v1428 = vmul.f32 1.0, %v1427
    %1430 = vrot.lane.b32.xlu0 %v1422, 64
    %v1431 = vpop.permute.xlu0 %1430
    %v1433 = vmul.f32 %v1428, %v1431
    %v1434 = vtanh.pop %v1433
    %v1435 = vsub.f32 1.0, %v1428
    %1437 = vrot.lane.b32.xlu0 %v1434, 32
    %v1438 = vpop.permute.xlu0 %1437
    %v1440 = vmul.f32 %v1435, %v1438
    %v1441 = vmul.f32 %v1428, 0.0
    %v1442 = vadd.f32 %v1440, %v1441
    %1451 = vrot.lane.b32.xlu0 %v1267, 32
    %v1452 = vpop.permute.xlu0 %1451
    %1453 = vrot.lane.b32.xlu0 %v1268, 32
    %v1454 = vpop.permute.xlu0 %1453
    %1455 = vrot.lane.b32.xlu0 %v1269, 32
    %v1456 = vpop.permute.xlu0 %1455
    %1457 = vrot.lane.b32.xlu0 %v1270, 32
    %v1458 = vpop.permute.xlu0 %1457
    %1459 = vrot.lane.b32.xlu0 %v1271, 32
    %v1460 = vpop.permute.xlu0 %1459
    %1461 = vrot.lane.b32.xlu0 %v1272, 32
    %v1462 = vpop.permute.xlu0 %1461
    %1463 = vrot.lane.b32.xlu0 %v1273, 32
    %v1464 = vpop.permute.xlu0 %1463
    %1465 = vrot.lane.b32.xlu0 %v1274, 32
    %v1466 = vpop.permute.xlu0 %1465
    %v1475 = vmul.f32 %v1442, %v1452
    %v1476 = vmul.f32 %v1442, %v1454
    %v1477 = vmul.f32 %v1442, %v1456
    %v1478 = vmul.f32 %v1442, %v1458
    %v1479 = vmul.f32 %v1442, %v1460
    %v1480 = vmul.f32 %v1442, %v1462
    %v1481 = vmul.f32 %v1442, %v1464
    %v1482 = vmul.f32 %v1442, %v1466
    %1491 = vrot.lane.b32.xlu0 %v1475, 96
    %v1492 = vpop.permute.xlu0 %1491
    %1493 = vrot.lane.b32.xlu0 %v1476, 96
    %v1494 = vpop.permute.xlu0 %1493
    %1495 = vrot.lane.b32.xlu0 %v1477, 96
    %v1496 = vpop.permute.xlu0 %1495
    %1497 = vrot.lane.b32.xlu0 %v1478, 96
    %v1498 = vpop.permute.xlu0 %1497
    %1499 = vrot.lane.b32.xlu0 %v1479, 96
    %v1500 = vpop.permute.xlu0 %1499
    %1501 = vrot.lane.b32.xlu0 %v1480, 96
    %v1502 = vpop.permute.xlu0 %1501
    %1503 = vrot.lane.b32.xlu0 %v1481, 96
    %v1504 = vpop.permute.xlu0 %1503
    %1505 = vrot.lane.b32.xlu0 %v1482, 96
    %v1506 = vpop.permute.xlu0 %1505
    %v1515 = vsel %vm208, %v1492, 0.0
    %1516 = vadd.xlane.f32.xlu0 %v1515
    %v1517 = vpop.xlane.xlu0 %1516
    %v1518 = vsel %vm208, %v1494, 0.0
    %1519 = vadd.xlane.f32.xlu0 %v1518
    %v1520 = vpop.xlane.xlu0 %1519
    %v1521 = vsel %vm208, %v1496, 0.0
    %1522 = vadd.xlane.f32.xlu0 %v1521
    %v1523 = vpop.xlane.xlu0 %1522
    %v1524 = vsel %vm208, %v1498, 0.0
    %1525 = vadd.xlane.f32.xlu0 %v1524
    %v1526 = vpop.xlane.xlu0 %1525
    %v1527 = vsel %vm208, %v1500, 0.0
    %1528 = vadd.xlane.f32.xlu0 %v1527
    %v1529 = vpop.xlane.xlu0 %1528
    %v1530 = vsel %vm208, %v1502, 0.0
    %1531 = vadd.xlane.f32.xlu0 %v1530
    %v1532 = vpop.xlane.xlu0 %1531
    %v1533 = vsel %vm208, %v1504, 0.0
    %1534 = vadd.xlane.f32.xlu0 %v1533
    %v1535 = vpop.xlane.xlu0 %1534
    %v1536 = vsel %vm208, %v1506, 0.0
    %1537 = vadd.xlane.f32.xlu0 %v1536
    %v1538 = vpop.xlane.xlu0 %1537
    %vm1539 = vcmask 1041408
    %v1540 = vsel %vm1539, %v1517, -inf
    %v1541 = vsel %vm1539, %v1520, -inf
    %v1542 = vsel %vm1539, %v1523, -inf
    %v1543 = vsel %vm1539, %v1526, -inf
    %v1544 = vsel %vm1539, %v1529, -inf
    %v1545 = vmax.f32 %v1540, %v1544
    %v1546 = vsel %vm1539, %v1532, -inf
    %v1547 = vmax.f32 %v1541, %v1546
    %v1548 = vsel %vm1539, %v1535, -inf
    %v1549 = vmax.f32 %v1542, %v1548
    %v1550 = vsel %vm1539, %v1538, -inf
    %v1551 = vmax.f32 %v1543, %v1550
    %v1552 = vmax.f32 %v1545, %v1547
    %v1553 = vmax.f32 %v1549, %v1551
    %v1554 = vmax.f32 %v1552, %v1553
    %v1555 = vsub.f32 %v1517, %v1554
    %v1556 = vsub.f32 %v1520, %v1554
    %v1557 = vsub.f32 %v1523, %v1554
    %v1558 = vsub.f32 %v1526, %v1554
    %v1559 = vsub.f32 %v1529, %v1554
    %v1560 = vsub.f32 %v1532, %v1554
    %v1561 = vsub.f32 %v1535, %v1554
    %v1562 = vsub.f32 %v1538, %v1554
    %v1563 = vmul.f32 %v1555, 1.442695
    %v1564 = vpow.pop %v1563
    %v1565 = vmul.f32 %v1556, 1.442695
    %v1566 = vpow.pop %v1565
    %v1567 = vmul.f32 %v1557, 1.442695
    %v1568 = vpow.pop %v1567
    %v1569 = vmul.f32 %v1558, 1.442695
    %v1570 = vpow.pop %v1569
    %v1571 = vmul.f32 %v1559, 1.442695
    %v1572 = vpow.pop %v1571
    %v1573 = vmul.f32 %v1560, 1.442695
    %v1574 = vpow.pop %v1573
    %v1575 = vmul.f32 %v1561, 1.442695
    %v1576 = vpow.pop %v1575
    %v1577 = vmul.f32 %v1562, 1.442695
    %v1578 = vpow.pop %v1577
    %v1579 = vsel %vm1539, %v1564, 0.0
    %v1580 = vsel %vm1539, %v1566, 0.0
    %v1581 = vadd.f32 %v1579, %v1580
    %v1582 = vsel %vm1539, %v1568, 0.0
    %v1583 = vadd.f32 %v1581, %v1582
    %v1584 = vsel %vm1539, %v1570, 0.0
    %v1585 = vadd.f32 %v1583, %v1584
    %v1586 = vsel %vm1539, %v1572, 0.0
    %v1587 = vadd.f32 %v1585, %v1586
    %v1588 = vsel %vm1539, %v1574, 0.0
    %v1589 = vadd.f32 %v1587, %v1588
    %v1590 = vsel %vm1539, %v1576, 0.0
    %v1591 = vadd.f32 %v1589, %v1590
    %v1592 = vsel %vm1539, %v1578, 0.0
    %v1593 = vadd.f32 %v1591, %v1592
    %v1594 = vrcp.pop %v1593
    %v1595 = vmul.f32 %v1564, %v1594
    %v1596 = vmul.f32 %v1566, %v1594
    %v1597 = vmul.f32 %v1568, %v1594
    %v1598 = vmul.f32 %v1570, %v1594
    %v1599 = vmul.f32 %v1572, %v1594
    %v1600 = vmul.f32 %v1574, %v1594
    %v1601 = vmul.f32 %v1576, %v1594
    %v1602 = vmul.f32 %v1578, %v1594
    %v1603 = vmul.f32 %v1595, %v1267
    %v1604 = vmul.f32 %v1596, %v1268
    %v1605 = vmul.f32 %v1597, %v1269
    %v1606 = vmul.f32 %v1598, %v1270
    %v1607 = vmul.f32 %v1599, %v1271
    %v1608 = vmul.f32 %v1600, %v1272
    %v1609 = vmul.f32 %v1601, %v1273
    %v1610 = vmul.f32 %v1602, %v1274
    %v1611 = vsel %vm208, %v1603, 0.0
    %v1612 = vsel %vm208, %v1604, 0.0
    %v1613 = vadd.f32 %v1611, %v1612
    %v1614 = vsel %vm208, %v1605, 0.0
    %v1615 = vadd.f32 %v1613, %v1614
    %v1616 = vsel %vm208, %v1606, 0.0
    %v1617 = vadd.f32 %v1615, %v1616
    %v1618 = vsel %vm208, %v1607, 0.0
    %v1619 = vadd.f32 %v1617, %v1618
    %v1620 = vsel %vm208, %v1608, 0.0
    %v1621 = vadd.f32 %v1619, %v1620
    %v1622 = vsel %vm208, %v1609, 0.0
    %v1623 = vadd.f32 %v1621, %v1622
    %v1624 = vsel %vm208, %v1610, 0.0
    %v1625 = vadd.f32 %v1623, %v1624
    %v1627 = vsel %vm134, %v1625, 0
    %1629 = vmatprep.subr.mxu0 0.0
    %1630 = vmatpush1.msra.mxu0 0.0
    %1631 = vmatprep.subr.mxu0 0.0
    %1632 = vmatpush1.msra.mxu0 0.0
    %1633 = vmatprep.subr.mxu0 0.0
    %1634 = vmatpush1.msra.mxu0 0.0
    %1635 = vmatprep.subr.mxu0 0.0
    %1636 = vmatpush1.msra.mxu0 0.0
    %1637 = vmatprep.subr.mxu0 0.0
    %1638 = vmatpush1.msra.mxu0 0.0
    %1639 = vmatprep.subr.mxu0 0.0
    %1640 = vmatpush1.msra.mxu0 0.0
    %1641 = vmatprep.subr.mxu0 0.0
    %1642 = vmatpush1.msra.mxu0 0.0
    %1643 = vmatprep.subr.mxu0 0.0
    %1644 = vmatpush1.msra.mxu0 0.0
    %1645 = vmatprep.subr.mxu0 0.0
    %1646 = vmatpush1.msra.mxu0 0.0
    %1647 = vmatprep.subr.mxu0 0.0
    %1648 = vmatpush1.msra.mxu0 0.0
    %1649 = vmatprep.subr.mxu0 0.0
    %1650 = vmatpush1.msra.mxu0 0.0
    %1651 = vmatprep.subr.mxu0 0.0
    %1652 = vmatpush1.msra.mxu0 0.0
    %1653 = vmatprep.subr.mxu0 0.0
    %1654 = vmatpush1.msra.mxu0 %v36
    %1655 = vmatprep.subr.mxu0 0.0
    %1656 = vmatpush1.msra.mxu0 %v35
    %1657 = vmatprep.subr.mxu0 0.0
    %1658 = vmatpush1.msra.mxu0 %v34
    %1659 = vmatprep.subr.mxu0 0.0
    %1660 = vmatpush1.msra.mxu0 %v33
    %1661 = vmatprep.subr.mxu0 0.0
    %1662 = vmatpush2.msra.mxu0 0.0
    %1663 = vmatprep.subr.mxu0 0.0
    %1664 = vmatpush2.msra.mxu0 0.0
    %1665 = vmatprep.subr.mxu0 0.0
    %1666 = vmatpush2.msra.mxu0 0.0
    %1667 = vmatprep.subr.mxu0 0.0
    %1668 = vmatpush2.msra.mxu0 0.0
    %1669 = vmatprep.subr.mxu0 0.0
    %1670 = vmatpush2.msra.mxu0 0.0
    %1671 = vmatprep.subr.mxu0 0.0
    %1672 = vmatpush2.msra.mxu0 0.0
    %1673 = vmatprep.subr.mxu0 0.0
    %1674 = vmatpush2.msra.mxu0 0.0
    %1675 = vmatprep.subr.mxu0 0.0
    %1676 = vmatpush2.msra.mxu0 0.0
    %1677 = vmatprep.subr.mxu0 0.0
    %1678 = vmatpush2.msra.mxu0 0.0
    %1679 = vmatprep.subr.mxu0 0.0
    %1680 = vmatpush2.msra.mxu0 0.0
    %1681 = vmatprep.subr.mxu0 0.0
    %1682 = vmatpush2.msra.mxu0 0.0
    %1683 = vmatprep.subr.mxu0 0.0
    %1684 = vmatpush2.msra.mxu0 0.0
    %1685 = vmatprep.subr.mxu0 0.0
    %1686 = vmatpush2.msra.mxu0 0.0
    %1687 = vmatprep.subr.mxu0 0.0
    %1688 = vmatpush2.msra.mxu0 0.0
    %1689 = vmatprep.subr.mxu0 0.0
    %1690 = vmatpush2.msra.mxu0 0.0
    %1691 = vmatprep.subr.mxu0 0.0
    %1692 = vmatpush2.msra.mxu0 0.0
    %1693 = vmatprep.mubr.f32.mxu0 0.0
    %1694 = vmatmul.mubr.f32.gmra.mxu0 %v1627
    %v1695 = vpop.f32.mrf.mxu0
    %v1696 = vadd.f32 0.0, %v1695
    %v1697 = vpop.f32.mrf.mxu0
    %1698 = vdwg.mxu0
    %1700 = vrot.lane.b32.xlu0 %v1442, 96
    %v1701 = vpop.permute.xlu0 %1700
    %v1702 = vsel %vm134, %v1701, 0
    %1704 = vmatprep.subr.mxu0 0.0
    %1705 = vmatpush1.msra.mxu0 0.0
    %1706 = vmatprep.subr.mxu0 0.0
    %1707 = vmatpush1.msra.mxu0 0.0
    %1708 = vmatprep.subr.mxu0 0.0
    %1709 = vmatpush1.msra.mxu0 0.0
    %1710 = vmatprep.subr.mxu0 0.0
    %1711 = vmatpush1.msra.mxu0 0.0
    %1712 = vmatprep.subr.mxu0 0.0
    %1713 = vmatpush1.msra.mxu0 0.0
    %1714 = vmatprep.subr.mxu0 0.0
    %1715 = vmatpush1.msra.mxu0 0.0
    %1716 = vmatprep.subr.mxu0 0.0
    %1717 = vmatpush1.msra.mxu0 0.0
    %1718 = vmatprep.subr.mxu0 0.0
    %1719 = vmatpush1.msra.mxu0 0.0
    %1720 = vmatprep.subr.mxu0 0.0
    %1721 = vmatpush1.msra.mxu0 0.0
    %1722 = vmatprep.subr.mxu0 0.0
    %1723 = vmatpush1.msra.mxu0 0.0
    %1724 = vmatprep.subr.mxu0 0.0
    %1725 = vmatpush1.msra.mxu0 0.0
    %1726 = vmatprep.subr.mxu0 0.0
    %1727 = vmatpush1.msra.mxu0 0.0
    %1728 = vmatprep.subr.mxu0 0.0
    %1729 = vmatpush1.msra.mxu0 %v32
    %1730 = vmatprep.subr.mxu0 0.0
    %1731 = vmatpush1.msra.mxu0 %v31
    %1732 = vmatprep.subr.mxu0 0.0
    %1733 = vmatpush1.msra.mxu0 %v30
    %1734 = vmatprep.subr.mxu0 0.0
    %1735 = vmatpush1.msra.mxu0 %v29
    %1736 = vmatprep.subr.mxu0 0.0
    %1737 = vmatpush2.msra.mxu0 0.0
    %1738 = vmatprep.subr.mxu0 0.0
    %1739 = vmatpush2.msra.mxu0 0.0
    %1740 = vmatprep.subr.mxu0 0.0
    %1741 = vmatpush2.msra.mxu0 0.0
    %1742 = vmatprep.subr.mxu0 0.0
    %1743 = vmatpush2.msra.mxu0 0.0
    %1744 = vmatprep.subr.mxu0 0.0
    %1745 = vmatpush2.msra.mxu0 0.0
    %1746 = vmatprep.subr.mxu0 0.0
    %1747 = vmatpush2.msra.mxu0 0.0
    %1748 = vmatprep.subr.mxu0 0.0
    %1749 = vmatpush2.msra.mxu0 0.0
    %1750 = vmatprep.subr.mxu0 0.0
    %1751 = vmatpush2.msra.mxu0 0.0
    %1752 = vmatprep.subr.mxu0 0.0
    %1753 = vmatpush2.msra.mxu0 0.0
    %1754 = vmatprep.subr.mxu0 0.0
    %1755 = vmatpush2.msra.mxu0 0.0
    %1756 = vmatprep.subr.mxu0 0.0
    %1757 = vmatpush2.msra.mxu0 0.0
    %1758 = vmatprep.subr.mxu0 0.0
    %1759 = vmatpush2.msra.mxu0 0.0
    %1760 = vmatprep.subr.mxu0 0.0
    %1761 = vmatpush2.msra.mxu0 0.0
    %1762 = vmatprep.subr.mxu0 0.0
    %1763 = vmatpush2.msra.mxu0 0.0
    %1764 = vmatprep.subr.mxu0 0.0
    %1765 = vmatpush2.msra.mxu0 0.0
    %1766 = vmatprep.subr.mxu0 0.0
    %1767 = vmatpush2.msra.mxu0 0.0
    %1768 = vmatprep.mubr.f32.mxu0 0.0
    %1769 = vmatmul.mubr.f32.gmra.mxu0 %v1702
    %v1770 = vpop.f32.mrf.mxu0
    %v1771 = vadd.f32 %v1696, %v1770
    %v1772 = vpop.f32.mrf.mxu0
    %1773 = vdwg.mxu0
    %v1774 = vadd.f32 %v1771, %v1421
    %v1775 = vxor.u32 %v1774, 2147483648
    %v1776 = vmul.f32 %v1775, 1.442695
    %v1777 = vpow.pop %v1776
    %v1778 = vadd.f32 %v1777, 1.0
    %v1779 = vrcp.pop %v1778
    %v1780 = vmul.f32 1.0, %v1779
    %1782 = vrot.lane.b32.xlu0 %v1774, 64
    %v1783 = vpop.permute.xlu0 %1782
    %v1785 = vmul.f32 %v1780, %v1783
    %v1786 = vtanh.pop %v1785
    %v1787 = vsub.f32 1.0, %v1780
    %1789 = vrot.lane.b32.xlu0 %v1786, 32
    %v1790 = vpop.permute.xlu0 %1789
    %v1792 = vmul.f32 %v1787, %v1790
    %v1793 = vmul.f32 %v1780, %v1442
    %v1794 = vadd.f32 %v1792, %v1793
    %v1795 = vmul.f32 %v1794, %v1452
    %v1796 = vmul.f32 %v1794, %v1454
    %v1797 = vmul.f32 %v1794, %v1456
    %v1798 = vmul.f32 %v1794, %v1458
    %v1799 = vmul.f32 %v1794, %v1460
    %v1800 = vmul.f32 %v1794, %v1462
    %v1801 = vmul.f32 %v1794, %v1464
    %v1802 = vmul.f32 %v1794, %v1466
    %1811 = vrot.lane.b32.xlu0 %v1795, 96
    %v1812 = vpop.permute.xlu0 %1811
    %1813 = vrot.lane.b32.xlu0 %v1796, 96
    %v1814 = vpop.permute.xlu0 %1813
    %1815 = vrot.lane.b32.xlu0 %v1797, 96
    %v1816 = vpop.permute.xlu0 %1815
    %1817 = vrot.lane.b32.xlu0 %v1798, 96
    %v1818 = vpop.permute.xlu0 %1817
    %1819 = vrot.lane.b32.xlu0 %v1799, 96
    %v1820 = vpop.permute.xlu0 %1819
    %1821 = vrot.lane.b32.xlu0 %v1800, 96
    %v1822 = vpop.permute.xlu0 %1821
    %1823 = vrot.lane.b32.xlu0 %v1801, 96
    %v1824 = vpop.permute.xlu0 %1823
    %1825 = vrot.lane.b32.xlu0 %v1802, 96
    %v1826 = vpop.permute.xlu0 %1825
    %v1835 = vsel %vm208, %v1812, 0.0
    %1836 = vadd.xlane.f32.xlu0 %v1835
    %v1837 = vpop.xlane.xlu0 %1836
    %v1838 = vsel %vm208, %v1814, 0.0
    %1839 = vadd.xlane.f32.xlu0 %v1838
    %v1840 = vpop.xlane.xlu0 %1839
    %v1841 = vsel %vm208, %v1816, 0.0
    %1842 = vadd.xlane.f32.xlu0 %v1841
    %v1843 = vpop.xlane.xlu0 %1842
    %v1844 = vsel %vm208, %v1818, 0.0
    %1845 = vadd.xlane.f32.xlu0 %v1844
    %v1846 = vpop.xlane.xlu0 %1845
    %v1847 = vsel %vm208, %v1820, 0.0
    %1848 = vadd.xlane.f32.xlu0 %v1847
    %v1849 = vpop.xlane.xlu0 %1848
    %v1850 = vsel %vm208, %v1822, 0.0
    %1851 = vadd.xlane.f32.xlu0 %v1850
    %v1852 = vpop.xlane.xlu0 %1851
    %v1853 = vsel %vm208, %v1824, 0.0
    %1854 = vadd.xlane.f32.xlu0 %v1853
    %v1855 = vpop.xlane.xlu0 %1854
    %v1856 = vsel %vm208, %v1826, 0.0
    %1857 = vadd.xlane.f32.xlu0 %v1856
    %v1858 = vpop.xlane.xlu0 %1857
    %v1859 = vsel %vm1539, %v1837, -inf
    %v1860 = vsel %vm1539, %v1840, -inf
    %v1861 = vsel %vm1539, %v1843, -inf
    %v1862 = vsel %vm1539, %v1846, -inf
    %v1863 = vsel %vm1539, %v1849, -inf
    %v1864 = vmax.f32 %v1859, %v1863
    %v1865 = vsel %vm1539, %v1852, -inf
    %v1866 = vmax.f32 %v1860, %v1865
    %v1867 = vsel %vm1539, %v1855, -inf
    %v1868 = vmax.f32 %v1861, %v1867
    %v1869 = vsel %vm1539, %v1858, -inf
    %v1870 = vmax.f32 %v1862, %v1869
    %v1871 = vmax.f32 %v1864, %v1866
    %v1872 = vmax.f32 %v1868, %v1870
    %v1873 = vmax.f32 %v1871, %v1872
    %v1874 = vsub.f32 %v1837, %v1873
    %v1875 = vsub.f32 %v1840, %v1873
    %v1876 = vsub.f32 %v1843, %v1873
    %v1877 = vsub.f32 %v1846, %v1873
    %v1878 = vsub.f32 %v1849, %v1873
    %v1879 = vsub.f32 %v1852, %v1873
    %v1880 = vsub.f32 %v1855, %v1873
    %v1881 = vsub.f32 %v1858, %v1873
    %v1882 = vmul.f32 %v1874, 1.442695
    %v1883 = vpow.pop %v1882
    %v1884 = vmul.f32 %v1875, 1.442695
    %v1885 = vpow.pop %v1884
    %v1886 = vmul.f32 %v1876, 1.442695
    %v1887 = vpow.pop %v1886
    %v1888 = vmul.f32 %v1877, 1.442695
    %v1889 = vpow.pop %v1888
    %v1890 = vmul.f32 %v1878, 1.442695
    %v1891 = vpow.pop %v1890
    %v1892 = vmul.f32 %v1879, 1.442695
    %v1893 = vpow.pop %v1892
    %v1894 = vmul.f32 %v1880, 1.442695
    %v1895 = vpow.pop %v1894
    %v1896 = vmul.f32 %v1881, 1.442695
    %v1897 = vpow.pop %v1896
    %v1898 = vsel %vm1539, %v1883, 0.0
    %v1899 = vsel %vm1539, %v1885, 0.0
    %v1900 = vadd.f32 %v1898, %v1899
    %v1901 = vsel %vm1539, %v1887, 0.0
    %v1902 = vadd.f32 %v1900, %v1901
    %v1903 = vsel %vm1539, %v1889, 0.0
    %v1904 = vadd.f32 %v1902, %v1903
    %v1905 = vsel %vm1539, %v1891, 0.0
    %v1906 = vadd.f32 %v1904, %v1905
    %v1907 = vsel %vm1539, %v1893, 0.0
    %v1908 = vadd.f32 %v1906, %v1907
    %v1909 = vsel %vm1539, %v1895, 0.0
    %v1910 = vadd.f32 %v1908, %v1909
    %v1911 = vsel %vm1539, %v1897, 0.0
    %v1912 = vadd.f32 %v1910, %v1911
    %v1913 = vrcp.pop %v1912
    %v1914 = vmul.f32 %v1883, %v1913
    %v1915 = vmul.f32 %v1885, %v1913
    %v1916 = vmul.f32 %v1887, %v1913
    %v1917 = vmul.f32 %v1889, %v1913
    %v1918 = vmul.f32 %v1891, %v1913
    %v1919 = vmul.f32 %v1893, %v1913
    %v1920 = vmul.f32 %v1895, %v1913
    %v1921 = vmul.f32 %v1897, %v1913
    %v1922 = vmul.f32 %v1914, %v1267
    %v1923 = vmul.f32 %v1915, %v1268
    %v1924 = vmul.f32 %v1916, %v1269
    %v1925 = vmul.f32 %v1917, %v1270
    %v1926 = vmul.f32 %v1918, %v1271
    %v1927 = vmul.f32 %v1919, %v1272
    %v1928 = vmul.f32 %v1920, %v1273
    %v1929 = vmul.f32 %v1921, %v1274
    %v1930 = vsel %vm208, %v1922, 0.0
    %v1931 = vsel %vm208, %v1923, 0.0
    %v1932 = vadd.f32 %v1930, %v1931
    %v1933 = vsel %vm208, %v1924, 0.0
    %v1934 = vadd.f32 %v1932, %v1933
    %v1935 = vsel %vm208, %v1925, 0.0
    %v1936 = vadd.f32 %v1934, %v1935
    %v1937 = vsel %vm208, %v1926, 0.0
    %v1938 = vadd.f32 %v1936, %v1937
    %v1939 = vsel %vm208, %v1927, 0.0
    %v1940 = vadd.f32 %v1938, %v1939
    %v1941 = vsel %vm208, %v1928, 0.0
    %v1942 = vadd.f32 %v1940, %v1941
    %v1943 = vsel %vm208, %v1929, 0.0
    %v1944 = vadd.f32 %v1942, %v1943
    %v1946 = vsel %vm134, %v1944, 0
    %1948 = vmatprep.subr.mxu0 0.0
    %1949 = vmatpush1.msra.mxu0 0.0
    %1950 = vmatprep.subr.mxu0 0.0
    %1951 = vmatpush1.msra.mxu0 0.0
    %1952 = vmatprep.subr.mxu0 0.0
    %1953 = vmatpush1.msra.mxu0 0.0
    %1954 = vmatprep.subr.mxu0 0.0
    %1955 = vmatpush1.msra.mxu0 0.0
    %1956 = vmatprep.subr.mxu0 0.0
    %1957 = vmatpush1.msra.mxu0 0.0
    %1958 = vmatprep.subr.mxu0 0.0
    %1959 = vmatpush1.msra.mxu0 0.0
    %1960 = vmatprep.subr.mxu0 0.0
    %1961 = vmatpush1.msra.mxu0 0.0
    %1962 = vmatprep.subr.mxu0 0.0
    %1963 = vmatpush1.msra.mxu0 0.0
    %1964 = vmatprep.subr.mxu0 0.0
    %1965 = vmatpush1.msra.mxu0 0.0
    %1966 = vmatprep.subr.mxu0 0.0
    %1967 = vmatpush1.msra.mxu0 0.0
    %1968 = vmatprep.subr.mxu0 0.0
    %1969 = vmatpush1.msra.mxu0 0.0
    %1970 = vmatprep.subr.mxu0 0.0
    %1971 = vmatpush1.msra.mxu0 0.0
    %1972 = vmatprep.subr.mxu0 0.0
    %1973 = vmatpush1.msra.mxu0 %v36
    %1974 = vmatprep.subr.mxu0 0.0
    %1975 = vmatpush1.msra.mxu0 %v35
    %1976 = vmatprep.subr.mxu0 0.0
    %1977 = vmatpush1.msra.mxu0 %v34
    %1978 = vmatprep.subr.mxu0 0.0
    %1979 = vmatpush1.msra.mxu0 %v33
    %1980 = vmatprep.subr.mxu0 0.0
    %1981 = vmatpush2.msra.mxu0 0.0
    %1982 = vmatprep.subr.mxu0 0.0
    %1983 = vmatpush2.msra.mxu0 0.0
    %1984 = vmatprep.subr.mxu0 0.0
    %1985 = vmatpush2.msra.mxu0 0.0
    %1986 = vmatprep.subr.mxu0 0.0
    %1987 = vmatpush2.msra.mxu0 0.0
    %1988 = vmatprep.subr.mxu0 0.0
    %1989 = vmatpush2.msra.mxu0 0.0
    %1990 = vmatprep.subr.mxu0 0.0
    %1991 = vmatpush2.msra.mxu0 0.0
    %1992 = vmatprep.subr.mxu0 0.0
    %1993 = vmatpush2.msra.mxu0 0.0
    %1994 = vmatprep.subr.mxu0 0.0
    %1995 = vmatpush2.msra.mxu0 0.0
    %1996 = vmatprep.subr.mxu0 0.0
    %1997 = vmatpush2.msra.mxu0 0.0
    %1998 = vmatprep.subr.mxu0 0.0
    %1999 = vmatpush2.msra.mxu0 0.0
    %2000 = vmatprep.subr.mxu0 0.0
    %2001 = vmatpush2.msra.mxu0 0.0
    %2002 = vmatprep.subr.mxu0 0.0
    %2003 = vmatpush2.msra.mxu0 0.0
    %2004 = vmatprep.subr.mxu0 0.0
    %2005 = vmatpush2.msra.mxu0 0.0
    %2006 = vmatprep.subr.mxu0 0.0
    %2007 = vmatpush2.msra.mxu0 0.0
    %2008 = vmatprep.subr.mxu0 0.0
    %2009 = vmatpush2.msra.mxu0 0.0
    %2010 = vmatprep.subr.mxu0 0.0
    %2011 = vmatpush2.msra.mxu0 0.0
    %2012 = vmatprep.mubr.f32.mxu0 0.0
    %2013 = vmatmul.mubr.f32.gmra.mxu0 %v1946
    %v2014 = vpop.f32.mrf.mxu0
    %v2015 = vadd.f32 0.0, %v2014
    %v2016 = vpop.f32.mrf.mxu0
    %2017 = vdwg.mxu0
    %2019 = vrot.lane.b32.xlu0 %v1794, 96
    %v2020 = vpop.permute.xlu0 %2019
    %v2021 = vsel %vm134, %v2020, 0
    %2023 = vmatprep.subr.mxu0 0.0
    %2024 = vmatpush1.msra.mxu0 0.0
    %2025 = vmatprep.subr.mxu0 0.0
    %2026 = vmatpush1.msra.mxu0 0.0
    %2027 = vmatprep.subr.mxu0 0.0
    %2028 = vmatpush1.msra.mxu0 0.0
    %2029 = vmatprep.subr.mxu0 0.0
    %2030 = vmatpush1.msra.mxu0 0.0
    %2031 = vmatprep.subr.mxu0 0.0
    %2032 = vmatpush1.msra.mxu0 0.0
    %2033 = vmatprep.subr.mxu0 0.0
    %2034 = vmatpush1.msra.mxu0 0.0
    %2035 = vmatprep.subr.mxu0 0.0
    %2036 = vmatpush1.msra.mxu0 0.0
    %2037 = vmatprep.subr.mxu0 0.0
    %2038 = vmatpush1.msra.mxu0 0.0
    %2039 = vmatprep.subr.mxu0 0.0
    %2040 = vmatpush1.msra.mxu0 0.0
    %2041 = vmatprep.subr.mxu0 0.0
    %2042 = vmatpush1.msra.mxu0 0.0
    %2043 = vmatprep.subr.mxu0 0.0
    %2044 = vmatpush1.msra.mxu0 0.0
    %2045 = vmatprep.subr.mxu0 0.0
    %2046 = vmatpush1.msra.mxu0 0.0
    %2047 = vmatprep.subr.mxu0 0.0
    %2048 = vmatpush1.msra.mxu0 %v32
    %2049 = vmatprep.subr.mxu0 0.0
    %2050 = vmatpush1.msra.mxu0 %v31
    %2051 = vmatprep.subr.mxu0 0.0
    %2052 = vmatpush1.msra.mxu0 %v30
    %2053 = vmatprep.subr.mxu0 0.0
    %2054 = vmatpush1.msra.mxu0 %v29
    %2055 = vmatprep.subr.mxu0 0.0
    %2056 = vmatpush2.msra.mxu0 0.0
    %2057 = vmatprep.subr.mxu0 0.0
    %2058 = vmatpush2.msra.mxu0 0.0
    %2059 = vmatprep.subr.mxu0 0.0
    %2060 = vmatpush2.msra.mxu0 0.0
    %2061 = vmatprep.subr.mxu0 0.0
    %2062 = vmatpush2.msra.mxu0 0.0
    %2063 = vmatprep.subr.mxu0 0.0
    %2064 = vmatpush2.msra.mxu0 0.0
    %2065 = vmatprep.subr.mxu0 0.0
    %2066 = vmatpush2.msra.mxu0 0.0
    %2067 = vmatprep.subr.mxu0 0.0
    %2068 = vmatpush2.msra.mxu0 0.0
    %2069 = vmatprep.subr.mxu0 0.0
    %2070 = vmatpush2.msra.mxu0 0.0
    %2071 = vmatprep.subr.mxu0 0.0
    %2072 = vmatpush2.msra.mxu0 0.0
    %2073 = vmatprep.subr.mxu0 0.0
    %2074 = vmatpush2.msra.mxu0 0.0
    %2075 = vmatprep.subr.mxu0 0.0
    %2076 = vmatpush2.msra.mxu0 0.0
    %2077 = vmatprep.subr.mxu0 0.0
    %2078 = vmatpush2.msra.mxu0 0.0
    %2079 = vmatprep.subr.mxu0 0.0
    %2080 = vmatpush2.msra.mxu0 0.0
    %2081 = vmatprep.subr.mxu0 0.0
    %2082 = vmatpush2.msra.mxu0 0.0
    %2083 = vmatprep.subr.mxu0 0.0
    %2084 = vmatpush2.msra.mxu0 0.0
    %2085 = vmatprep.subr.mxu0 0.0
    %2086 = vmatpush2.msra.mxu0 0.0
    %2087 = vmatprep.mubr.f32.mxu0 0.0
    %2088 = vmatmul.mubr.f32.gmra.mxu0 %v2021
    %v2089 = vpop.f32.mrf.mxu0
    %v2090 = vadd.f32 %v2015, %v2089
    %v2091 = vpop.f32.mrf.mxu0
    %2092 = vdwg.mxu0
    %v2093 = vadd.f32 %v2090, %v1421
    %v2094 = vxor.u32 %v2093, 2147483648
    %v2095 = vmul.f32 %v2094, 1.442695
    %v2096 = vpow.pop %v2095
    %v2097 = vadd.f32 %v2096, 1.0
    %v2098 = vrcp.pop %v2097
    %v2099 = vmul.f32 1.0, %v2098
    %2101 = vrot.lane.b32.xlu0 %v2093, 64
    %v2102 = vpop.permute.xlu0 %2101
    %v2104 = vmul.f32 %v2099, %v2102
    %v2105 = vtanh.pop %v2104
    %v2106 = vsub.f32 1.0, %v2099
    %2108 = vrot.lane.b32.xlu0 %v2105, 32
    %v2109 = vpop.permute.xlu0 %2108
    %v2111 = vmul.f32 %v2106, %v2109
    %v2112 = vmul.f32 %v2099, %v1794
    %v2113 = vadd.f32 %v2111, %v2112
    %v2114 = vmul.f32 %v2113, %v1452
    %v2115 = vmul.f32 %v2113, %v1454
    %v2116 = vmul.f32 %v2113, %v1456
    %v2117 = vmul.f32 %v2113, %v1458
    %v2118 = vmul.f32 %v2113, %v1460
    %v2119 = vmul.f32 %v2113, %v1462
    %v2120 = vmul.f32 %v2113, %v1464
    %v2121 = vmul.f32 %v2113, %v1466
    %2130 = vrot.lane.b32.xlu0 %v2114, 96
    %v2131 = vpop.permute.xlu0 %2130
    %2132 = vrot.lane.b32.xlu0 %v2115, 96
    %v2133 = vpop.permute.xlu0 %2132
    %2134 = vrot.lane.b32.xlu0 %v2116, 96
    %v2135 = vpop.permute.xlu0 %2134
    %2136 = vrot.lane.b32.xlu0 %v2117, 96
    %v2137 = vpop.permute.xlu0 %2136
    %2138 = vrot.lane.b32.xlu0 %v2118, 96
    %v2139 = vpop.permute.xlu0 %2138
    %2140 = vrot.lane.b32.xlu0 %v2119, 96
    %v2141 = vpop.permute.xlu0 %2140
    %2142 = vrot.lane.b32.xlu0 %v2120, 96
    %v2143 = vpop.permute.xlu0 %2142
    %2144 = vrot.lane.b32.xlu0 %v2121, 96
    %v2145 = vpop.permute.xlu0 %2144
    %v2154 = vsel %vm208, %v2131, 0.0
    %2155 = vadd.xlane.f32.xlu0 %v2154
    %v2156 = vpop.xlane.xlu0 %2155
    %v2157 = vsel %vm208, %v2133, 0.0
    %2158 = vadd.xlane.f32.xlu0 %v2157
    %v2159 = vpop.xlane.xlu0 %2158
    %v2160 = vsel %vm208, %v2135, 0.0
    %2161 = vadd.xlane.f32.xlu0 %v2160
    %v2162 = vpop.xlane.xlu0 %2161
    %v2163 = vsel %vm208, %v2137, 0.0
    %2164 = vadd.xlane.f32.xlu0 %v2163
    %v2165 = vpop.xlane.xlu0 %2164
    %v2166 = vsel %vm208, %v2139, 0.0
    %2167 = vadd.xlane.f32.xlu0 %v2166
    %v2168 = vpop.xlane.xlu0 %2167
    %v2169 = vsel %vm208, %v2141, 0.0
    %2170 = vadd.xlane.f32.xlu0 %v2169
    %v2171 = vpop.xlane.xlu0 %2170
    %v2172 = vsel %vm208, %v2143, 0.0
    %2173 = vadd.xlane.f32.xlu0 %v2172
    %v2174 = vpop.xlane.xlu0 %2173
    %v2175 = vsel %vm208, %v2145, 0.0
    %2176 = vadd.xlane.f32.xlu0 %v2175
    %v2177 = vpop.xlane.xlu0 %2176
    %v2178 = vsel %vm1539, %v2156, -inf
    %v2179 = vsel %vm1539, %v2159, -inf
    %v2180 = vsel %vm1539, %v2162, -inf
    %v2181 = vsel %vm1539, %v2165, -inf
    %v2182 = vsel %vm1539, %v2168, -inf
    %v2183 = vmax.f32 %v2178, %v2182
    %v2184 = vsel %vm1539, %v2171, -inf
    %v2185 = vmax.f32 %v2179, %v2184
    %v2186 = vsel %vm1539, %v2174, -inf
    %v2187 = vmax.f32 %v2180, %v2186
    %v2188 = vsel %vm1539, %v2177, -inf
    %v2189 = vmax.f32 %v2181, %v2188
    %v2190 = vmax.f32 %v2183, %v2185
    %v2191 = vmax.f32 %v2187, %v2189
    %v2192 = vmax.f32 %v2190, %v2191
    %v2193 = vsub.f32 %v2156, %v2192
    %v2194 = vsub.f32 %v2159, %v2192
    %v2195 = vsub.f32 %v2162, %v2192
    %v2196 = vsub.f32 %v2165, %v2192
    %v2197 = vsub.f32 %v2168, %v2192
    %v2198 = vsub.f32 %v2171, %v2192
    %v2199 = vsub.f32 %v2174, %v2192
    %v2200 = vsub.f32 %v2177, %v2192
    %v2201 = vmul.f32 %v2193, 1.442695
    %v2202 = vpow.pop %v2201
    %v2203 = vmul.f32 %v2194, 1.442695
    %v2204 = vpow.pop %v2203
    %v2205 = vmul.f32 %v2195, 1.442695
    %v2206 = vpow.pop %v2205
    %v2207 = vmul.f32 %v2196, 1.442695
    %v2208 = vpow.pop %v2207
    %v2209 = vmul.f32 %v2197, 1.442695
    %v2210 = vpow.pop %v2209
    %v2211 = vmul.f32 %v2198, 1.442695
    %v2212 = vpow.pop %v2211
    %v2213 = vmul.f32 %v2199, 1.442695
    %v2214 = vpow.pop %v2213
    %v2215 = vmul.f32 %v2200, 1.442695
    %v2216 = vpow.pop %v2215
    %v2217 = vsel %vm1539, %v2202, 0.0
    %v2218 = vsel %vm1539, %v2204, 0.0
    %v2219 = vadd.f32 %v2217, %v2218
    %v2220 = vsel %vm1539, %v2206, 0.0
    %v2221 = vadd.f32 %v2219, %v2220
    %v2222 = vsel %vm1539, %v2208, 0.0
    %v2223 = vadd.f32 %v2221, %v2222
    %v2224 = vsel %vm1539, %v2210, 0.0
    %v2225 = vadd.f32 %v2223, %v2224
    %v2226 = vsel %vm1539, %v2212, 0.0
    %v2227 = vadd.f32 %v2225, %v2226
    %v2228 = vsel %vm1539, %v2214, 0.0
    %v2229 = vadd.f32 %v2227, %v2228
    %v2230 = vsel %vm1539, %v2216, 0.0
    %v2231 = vadd.f32 %v2229, %v2230
    %v2232 = vrcp.pop %v2231
    %v2233 = vmul.f32 %v2202, %v2232
    %v2234 = vmul.f32 %v2204, %v2232
    %v2235 = vmul.f32 %v2206, %v2232
    %v2236 = vmul.f32 %v2208, %v2232
    %v2237 = vmul.f32 %v2210, %v2232
    %v2238 = vmul.f32 %v2212, %v2232
    %v2239 = vmul.f32 %v2214, %v2232
    %v2240 = vmul.f32 %v2216, %v2232
    %v2241 = vmul.f32 %v2233, %v1267
    %v2242 = vmul.f32 %v2234, %v1268
    %v2243 = vmul.f32 %v2235, %v1269
    %v2244 = vmul.f32 %v2236, %v1270
    %v2245 = vmul.f32 %v2237, %v1271
    %v2246 = vmul.f32 %v2238, %v1272
    %v2247 = vmul.f32 %v2239, %v1273
    %v2248 = vmul.f32 %v2240, %v1274
    %v2249 = vsel %vm208, %v2241, 0.0
    %v2250 = vsel %vm208, %v2242, 0.0
    %v2251 = vadd.f32 %v2249, %v2250
    %v2252 = vsel %vm208, %v2243, 0.0
    %v2253 = vadd.f32 %v2251, %v2252
    %v2254 = vsel %vm208, %v2244, 0.0
    %v2255 = vadd.f32 %v2253, %v2254
    %v2256 = vsel %vm208, %v2245, 0.0
    %v2257 = vadd.f32 %v2255, %v2256
    %v2258 = vsel %vm208, %v2246, 0.0
    %v2259 = vadd.f32 %v2257, %v2258
    %v2260 = vsel %vm208, %v2247, 0.0
    %v2261 = vadd.f32 %v2259, %v2260
    %v2262 = vsel %vm208, %v2248, 0.0
    %v2263 = vadd.f32 %v2261, %v2262
    %v2265 = vsel %vm134, %v2263, 0
    %2267 = vmatprep.subr.mxu0 0.0
    %2268 = vmatpush1.msra.mxu0 0.0
    %2269 = vmatprep.subr.mxu0 0.0
    %2270 = vmatpush1.msra.mxu0 0.0
    %2271 = vmatprep.subr.mxu0 0.0
    %2272 = vmatpush1.msra.mxu0 0.0
    %2273 = vmatprep.subr.mxu0 0.0
    %2274 = vmatpush1.msra.mxu0 0.0
    %2275 = vmatprep.subr.mxu0 0.0
    %2276 = vmatpush1.msra.mxu0 0.0
    %2277 = vmatprep.subr.mxu0 0.0
    %2278 = vmatpush1.msra.mxu0 0.0
    %2279 = vmatprep.subr.mxu0 0.0
    %2280 = vmatpush1.msra.mxu0 0.0
    %2281 = vmatprep.subr.mxu0 0.0
    %2282 = vmatpush1.msra.mxu0 0.0
    %2283 = vmatprep.subr.mxu0 0.0
    %2284 = vmatpush1.msra.mxu0 0.0
    %2285 = vmatprep.subr.mxu0 0.0
    %2286 = vmatpush1.msra.mxu0 0.0
    %2287 = vmatprep.subr.mxu0 0.0
    %2288 = vmatpush1.msra.mxu0 0.0
    %2289 = vmatprep.subr.mxu0 0.0
    %2290 = vmatpush1.msra.mxu0 0.0
    %2291 = vmatprep.subr.mxu0 0.0
    %2292 = vmatpush1.msra.mxu0 %v36
    %2293 = vmatprep.subr.mxu0 0.0
    %2294 = vmatpush1.msra.mxu0 %v35
    %2295 = vmatprep.subr.mxu0 0.0
    %2296 = vmatpush1.msra.mxu0 %v34
    %2297 = vmatprep.subr.mxu0 0.0
    %2298 = vmatpush1.msra.mxu0 %v33
    %2299 = vmatprep.subr.mxu0 0.0
    %2300 = vmatpush2.msra.mxu0 0.0
    %2301 = vmatprep.subr.mxu0 0.0
    %2302 = vmatpush2.msra.mxu0 0.0
    %2303 = vmatprep.subr.mxu0 0.0
    %2304 = vmatpush2.msra.mxu0 0.0
    %2305 = vmatprep.subr.mxu0 0.0
    %2306 = vmatpush2.msra.mxu0 0.0
    %2307 = vmatprep.subr.mxu0 0.0
    %2308 = vmatpush2.msra.mxu0 0.0
    %2309 = vmatprep.subr.mxu0 0.0
    %2310 = vmatpush2.msra.mxu0 0.0
    %2311 = vmatprep.subr.mxu0 0.0
    %2312 = vmatpush2.msra.mxu0 0.0
    %2313 = vmatprep.subr.mxu0 0.0
    %2314 = vmatpush2.msra.mxu0 0.0
    %2315 = vmatprep.subr.mxu0 0.0
    %2316 = vmatpush2.msra.mxu0 0.0
    %2317 = vmatprep.subr.mxu0 0.0
    %2318 = vmatpush2.msra.mxu0 0.0
    %2319 = vmatprep.subr.mxu0 0.0
    %2320 = vmatpush2.msra.mxu0 0.0
    %2321 = vmatprep.subr.mxu0 0.0
    %2322 = vmatpush2.msra.mxu0 0.0
    %2323 = vmatprep.subr.mxu0 0.0
    %2324 = vmatpush2.msra.mxu0 0.0
    %2325 = vmatprep.subr.mxu0 0.0
    %2326 = vmatpush2.msra.mxu0 0.0
    %2327 = vmatprep.subr.mxu0 0.0
    %2328 = vmatpush2.msra.mxu0 0.0
    %2329 = vmatprep.subr.mxu0 0.0
    %2330 = vmatpush2.msra.mxu0 0.0
    %2331 = vmatprep.mubr.f32.mxu0 0.0
    %2332 = vmatmul.mubr.f32.gmra.mxu0 %v2265
    %v2333 = vpop.f32.mrf.mxu0
    %v2334 = vadd.f32 0.0, %v2333
    %v2335 = vpop.f32.mrf.mxu0
    %2336 = vdwg.mxu0
    %2338 = vrot.lane.b32.xlu0 %v2113, 96
    %v2339 = vpop.permute.xlu0 %2338
    %v2340 = vsel %vm134, %v2339, 0
    %2342 = vmatprep.subr.mxu0 0.0
    %2343 = vmatpush1.msra.mxu0 0.0
    %2344 = vmatprep.subr.mxu0 0.0
    %2345 = vmatpush1.msra.mxu0 0.0
    %2346 = vmatprep.subr.mxu0 0.0
    %2347 = vmatpush1.msra.mxu0 0.0
    %2348 = vmatprep.subr.mxu0 0.0
    %2349 = vmatpush1.msra.mxu0 0.0
    %2350 = vmatprep.subr.mxu0 0.0
    %2351 = vmatpush1.msra.mxu0 0.0
    %2352 = vmatprep.subr.mxu0 0.0
    %2353 = vmatpush1.msra.mxu0 0.0
    %2354 = vmatprep.subr.mxu0 0.0
    %2355 = vmatpush1.msra.mxu0 0.0
    %2356 = vmatprep.subr.mxu0 0.0
    %2357 = vmatpush1.msra.mxu0 0.0
    %2358 = vmatprep.subr.mxu0 0.0
    %2359 = vmatpush1.msra.mxu0 0.0
    %2360 = vmatprep.subr.mxu0 0.0
    %2361 = vmatpush1.msra.mxu0 0.0
    %2362 = vmatprep.subr.mxu0 0.0
    %2363 = vmatpush1.msra.mxu0 0.0
    %2364 = vmatprep.subr.mxu0 0.0
    %2365 = vmatpush1.msra.mxu0 0.0
    %2366 = vmatprep.subr.mxu0 0.0
    %2367 = vmatpush1.msra.mxu0 %v32
    %2368 = vmatprep.subr.mxu0 0.0
    %2369 = vmatpush1.msra.mxu0 %v31
    %2370 = vmatprep.subr.mxu0 0.0
    %2371 = vmatpush1.msra.mxu0 %v30
    %2372 = vmatprep.subr.mxu0 0.0
    %2373 = vmatpush1.msra.mxu0 %v29
    %2374 = vmatprep.subr.mxu0 0.0
    %2375 = vmatpush2.msra.mxu0 0.0
    %2376 = vmatprep.subr.mxu0 0.0
    %2377 = vmatpush2.msra.mxu0 0.0
    %2378 = vmatprep.subr.mxu0 0.0
    %2379 = vmatpush2.msra.mxu0 0.0
    %2380 = vmatprep.subr.mxu0 0.0
    %2381 = vmatpush2.msra.mxu0 0.0
    %2382 = vmatprep.subr.mxu0 0.0
    %2383 = vmatpush2.msra.mxu0 0.0
    %2384 = vmatprep.subr.mxu0 0.0
    %2385 = vmatpush2.msra.mxu0 0.0
    %2386 = vmatprep.subr.mxu0 0.0
    %2387 = vmatpush2.msra.mxu0 0.0
    %2388 = vmatprep.subr.mxu0 0.0
    %2389 = vmatpush2.msra.mxu0 0.0
    %2390 = vmatprep.subr.mxu0 0.0
    %2391 = vmatpush2.msra.mxu0 0.0
    %2392 = vmatprep.subr.mxu0 0.0
    %2393 = vmatpush2.msra.mxu0 0.0
    %2394 = vmatprep.subr.mxu0 0.0
    %2395 = vmatpush2.msra.mxu0 0.0
    %2396 = vmatprep.subr.mxu0 0.0
    %2397 = vmatpush2.msra.mxu0 0.0
    %2398 = vmatprep.subr.mxu0 0.0
    %2399 = vmatpush2.msra.mxu0 0.0
    %2400 = vmatprep.subr.mxu0 0.0
    %2401 = vmatpush2.msra.mxu0 0.0
    %2402 = vmatprep.subr.mxu0 0.0
    %2403 = vmatpush2.msra.mxu0 0.0
    %2404 = vmatprep.subr.mxu0 0.0
    %2405 = vmatpush2.msra.mxu0 0.0
    %2406 = vmatprep.mubr.f32.mxu0 0.0
    %2407 = vmatmul.mubr.f32.gmra.mxu0 %v2340
    %v2408 = vpop.f32.mrf.mxu0
    %v2409 = vadd.f32 %v2334, %v2408
    %v2410 = vpop.f32.mrf.mxu0
    %2411 = vdwg.mxu0
    %v2412 = vadd.f32 %v2409, %v1421
    %v2413 = vxor.u32 %v2412, 2147483648
    %v2414 = vmul.f32 %v2413, 1.442695
    %v2415 = vpow.pop %v2414
    %v2416 = vadd.f32 %v2415, 1.0
    %v2417 = vrcp.pop %v2416
    %v2418 = vmul.f32 1.0, %v2417
    %2420 = vrot.lane.b32.xlu0 %v2412, 64
    %v2421 = vpop.permute.xlu0 %2420
    %v2423 = vmul.f32 %v2418, %v2421
    %v2424 = vtanh.pop %v2423
    %v2425 = vsub.f32 1.0, %v2418
    %2427 = vrot.lane.b32.xlu0 %v2424, 32
    %v2428 = vpop.permute.xlu0 %2427
    %v2430 = vmul.f32 %v2425, %v2428
    %v2431 = vmul.f32 %v2418, %v2113
    %v2432 = vadd.f32 %v2430, %v2431
    %v2433 = vmul.f32 %v2432, %v1452
    %v2434 = vmul.f32 %v2432, %v1454
    %v2435 = vmul.f32 %v2432, %v1456
    %v2436 = vmul.f32 %v2432, %v1458
    %v2437 = vmul.f32 %v2432, %v1460
    %v2438 = vmul.f32 %v2432, %v1462
    %v2439 = vmul.f32 %v2432, %v1464
    %v2440 = vmul.f32 %v2432, %v1466
    %2449 = vrot.lane.b32.xlu0 %v2433, 96
    %v2450 = vpop.permute.xlu0 %2449
    %2451 = vrot.lane.b32.xlu0 %v2434, 96
    %v2452 = vpop.permute.xlu0 %2451
    %2453 = vrot.lane.b32.xlu0 %v2435, 96
    %v2454 = vpop.permute.xlu0 %2453
    %2455 = vrot.lane.b32.xlu0 %v2436, 96
    %v2456 = vpop.permute.xlu0 %2455
    %2457 = vrot.lane.b32.xlu0 %v2437, 96
    %v2458 = vpop.permute.xlu0 %2457
    %2459 = vrot.lane.b32.xlu0 %v2438, 96
    %v2460 = vpop.permute.xlu0 %2459
    %2461 = vrot.lane.b32.xlu0 %v2439, 96
    %v2462 = vpop.permute.xlu0 %2461
    %2463 = vrot.lane.b32.xlu0 %v2440, 96
    %v2464 = vpop.permute.xlu0 %2463
    %v2473 = vsel %vm208, %v2450, 0.0
    %2474 = vadd.xlane.f32.xlu0 %v2473
    %v2475 = vpop.xlane.xlu0 %2474
    %v2476 = vsel %vm208, %v2452, 0.0
    %2477 = vadd.xlane.f32.xlu0 %v2476
    %v2478 = vpop.xlane.xlu0 %2477
    %v2479 = vsel %vm208, %v2454, 0.0
    %2480 = vadd.xlane.f32.xlu0 %v2479
    %v2481 = vpop.xlane.xlu0 %2480
    %v2482 = vsel %vm208, %v2456, 0.0
    %2483 = vadd.xlane.f32.xlu0 %v2482
    %v2484 = vpop.xlane.xlu0 %2483
    %v2485 = vsel %vm208, %v2458, 0.0
    %2486 = vadd.xlane.f32.xlu0 %v2485
    %v2487 = vpop.xlane.xlu0 %2486
    %v2488 = vsel %vm208, %v2460, 0.0
    %2489 = vadd.xlane.f32.xlu0 %v2488
    %v2490 = vpop.xlane.xlu0 %2489
    %v2491 = vsel %vm208, %v2462, 0.0
    %2492 = vadd.xlane.f32.xlu0 %v2491
    %v2493 = vpop.xlane.xlu0 %2492
    %v2494 = vsel %vm208, %v2464, 0.0
    %2495 = vadd.xlane.f32.xlu0 %v2494
    %v2496 = vpop.xlane.xlu0 %2495
    %v2497 = vsel %vm1539, %v2475, -inf
    %v2498 = vsel %vm1539, %v2478, -inf
    %v2499 = vsel %vm1539, %v2481, -inf
    %v2500 = vsel %vm1539, %v2484, -inf
    %v2501 = vsel %vm1539, %v2487, -inf
    %v2502 = vmax.f32 %v2497, %v2501
    %v2503 = vsel %vm1539, %v2490, -inf
    %v2504 = vmax.f32 %v2498, %v2503
    %v2505 = vsel %vm1539, %v2493, -inf
    %v2506 = vmax.f32 %v2499, %v2505
    %v2507 = vsel %vm1539, %v2496, -inf
    %v2508 = vmax.f32 %v2500, %v2507
    %v2509 = vmax.f32 %v2502, %v2504
    %v2510 = vmax.f32 %v2506, %v2508
    %v2511 = vmax.f32 %v2509, %v2510
    %v2512 = vsub.f32 %v2475, %v2511
    %v2513 = vsub.f32 %v2478, %v2511
    %v2514 = vsub.f32 %v2481, %v2511
    %v2515 = vsub.f32 %v2484, %v2511
    %v2516 = vsub.f32 %v2487, %v2511
    %v2517 = vsub.f32 %v2490, %v2511
    %v2518 = vsub.f32 %v2493, %v2511
    %v2519 = vsub.f32 %v2496, %v2511
    %v2520 = vmul.f32 %v2512, 1.442695
    %v2521 = vpow.pop %v2520
    %v2522 = vmul.f32 %v2513, 1.442695
    %v2523 = vpow.pop %v2522
    %v2524 = vmul.f32 %v2514, 1.442695
    %v2525 = vpow.pop %v2524
    %v2526 = vmul.f32 %v2515, 1.442695
    %v2527 = vpow.pop %v2526
    %v2528 = vmul.f32 %v2516, 1.442695
    %v2529 = vpow.pop %v2528
    %v2530 = vmul.f32 %v2517, 1.442695
    %v2531 = vpow.pop %v2530
    %v2532 = vmul.f32 %v2518, 1.442695
    %v2533 = vpow.pop %v2532
    %v2534 = vmul.f32 %v2519, 1.442695
    %v2535 = vpow.pop %v2534
    %v2536 = vsel %vm1539, %v2521, 0.0
    %v2537 = vsel %vm1539, %v2523, 0.0
    %v2538 = vadd.f32 %v2536, %v2537
    %v2539 = vsel %vm1539, %v2525, 0.0
    %v2540 = vadd.f32 %v2538, %v2539
    %v2541 = vsel %vm1539, %v2527, 0.0
    %v2542 = vadd.f32 %v2540, %v2541
    %v2543 = vsel %vm1539, %v2529, 0.0
    %v2544 = vadd.f32 %v2542, %v2543
    %v2545 = vsel %vm1539, %v2531, 0.0
    %v2546 = vadd.f32 %v2544, %v2545
    %v2547 = vsel %vm1539, %v2533, 0.0
    %v2548 = vadd.f32 %v2546, %v2547
    %v2549 = vsel %vm1539, %v2535, 0.0
    %v2550 = vadd.f32 %v2548, %v2549
    %v2551 = vrcp.pop %v2550
    %v2552 = vmul.f32 %v2521, %v2551
    %v2553 = vmul.f32 %v2523, %v2551
    %v2554 = vmul.f32 %v2525, %v2551
    %v2555 = vmul.f32 %v2527, %v2551
    %v2556 = vmul.f32 %v2529, %v2551
    %v2557 = vmul.f32 %v2531, %v2551
    %v2558 = vmul.f32 %v2533, %v2551
    %v2559 = vmul.f32 %v2535, %v2551
    %v2560 = vmul.f32 %v2552, %v1267
    %v2561 = vmul.f32 %v2553, %v1268
    %v2562 = vmul.f32 %v2554, %v1269
    %v2563 = vmul.f32 %v2555, %v1270
    %v2564 = vmul.f32 %v2556, %v1271
    %v2565 = vmul.f32 %v2557, %v1272
    %v2566 = vmul.f32 %v2558, %v1273
    %v2567 = vmul.f32 %v2559, %v1274
    %v2568 = vsel %vm208, %v2560, 0.0
    %v2569 = vsel %vm208, %v2561, 0.0
    %v2570 = vadd.f32 %v2568, %v2569
    %v2571 = vsel %vm208, %v2562, 0.0
    %v2572 = vadd.f32 %v2570, %v2571
    %v2573 = vsel %vm208, %v2563, 0.0
    %v2574 = vadd.f32 %v2572, %v2573
    %v2575 = vsel %vm208, %v2564, 0.0
    %v2576 = vadd.f32 %v2574, %v2575
    %v2577 = vsel %vm208, %v2565, 0.0
    %v2578 = vadd.f32 %v2576, %v2577
    %v2579 = vsel %vm208, %v2566, 0.0
    %v2580 = vadd.f32 %v2578, %v2579
    %v2581 = vsel %vm208, %v2567, 0.0
    %v2582 = vadd.f32 %v2580, %v2581
    %v2584 = vsel %vm134, %v2582, 0
    %2586 = vmatprep.subr.mxu0 0.0
    %2587 = vmatpush1.msra.mxu0 0.0
    %2588 = vmatprep.subr.mxu0 0.0
    %2589 = vmatpush1.msra.mxu0 0.0
    %2590 = vmatprep.subr.mxu0 0.0
    %2591 = vmatpush1.msra.mxu0 0.0
    %2592 = vmatprep.subr.mxu0 0.0
    %2593 = vmatpush1.msra.mxu0 0.0
    %2594 = vmatprep.subr.mxu0 0.0
    %2595 = vmatpush1.msra.mxu0 0.0
    %2596 = vmatprep.subr.mxu0 0.0
    %2597 = vmatpush1.msra.mxu0 0.0
    %2598 = vmatprep.subr.mxu0 0.0
    %2599 = vmatpush1.msra.mxu0 0.0
    %2600 = vmatprep.subr.mxu0 0.0
    %2601 = vmatpush1.msra.mxu0 0.0
    %2602 = vmatprep.subr.mxu0 0.0
    %2603 = vmatpush1.msra.mxu0 0.0
    %2604 = vmatprep.subr.mxu0 0.0
    %2605 = vmatpush1.msra.mxu0 0.0
    %2606 = vmatprep.subr.mxu0 0.0
    %2607 = vmatpush1.msra.mxu0 0.0
    %2608 = vmatprep.subr.mxu0 0.0
    %2609 = vmatpush1.msra.mxu0 0.0
    %2610 = vmatprep.subr.mxu0 0.0
    %2611 = vmatpush1.msra.mxu0 %v36
    %2612 = vmatprep.subr.mxu0 0.0
    %2613 = vmatpush1.msra.mxu0 %v35
    %2614 = vmatprep.subr.mxu0 0.0
    %2615 = vmatpush1.msra.mxu0 %v34
    %2616 = vmatprep.subr.mxu0 0.0
    %2617 = vmatpush1.msra.mxu0 %v33
    %2618 = vmatprep.subr.mxu0 0.0
    %2619 = vmatpush2.msra.mxu0 0.0
    %2620 = vmatprep.subr.mxu0 0.0
    %2621 = vmatpush2.msra.mxu0 0.0
    %2622 = vmatprep.subr.mxu0 0.0
    %2623 = vmatpush2.msra.mxu0 0.0
    %2624 = vmatprep.subr.mxu0 0.0
    %2625 = vmatpush2.msra.mxu0 0.0
    %2626 = vmatprep.subr.mxu0 0.0
    %2627 = vmatpush2.msra.mxu0 0.0
    %2628 = vmatprep.subr.mxu0 0.0
    %2629 = vmatpush2.msra.mxu0 0.0
    %2630 = vmatprep.subr.mxu0 0.0
    %2631 = vmatpush2.msra.mxu0 0.0
    %2632 = vmatprep.subr.mxu0 0.0
    %2633 = vmatpush2.msra.mxu0 0.0
    %2634 = vmatprep.subr.mxu0 0.0
    %2635 = vmatpush2.msra.mxu0 0.0
    %2636 = vmatprep.subr.mxu0 0.0
    %2637 = vmatpush2.msra.mxu0 0.0
    %2638 = vmatprep.subr.mxu0 0.0
    %2639 = vmatpush2.msra.mxu0 0.0
    %2640 = vmatprep.subr.mxu0 0.0
    %2641 = vmatpush2.msra.mxu0 0.0
    %2642 = vmatprep.subr.mxu0 0.0
    %2643 = vmatpush2.msra.mxu0 0.0
    %2644 = vmatprep.subr.mxu0 0.0
    %2645 = vmatpush2.msra.mxu0 0.0
    %2646 = vmatprep.subr.mxu0 0.0
    %2647 = vmatpush2.msra.mxu0 0.0
    %2648 = vmatprep.subr.mxu0 0.0
    %2649 = vmatpush2.msra.mxu0 0.0
    %2650 = vmatprep.mubr.f32.mxu0 0.0
    %2651 = vmatmul.mubr.f32.gmra.mxu0 %v2584
    %v2652 = vpop.f32.mrf.mxu0
    %v2653 = vadd.f32 0.0, %v2652
    %v2654 = vpop.f32.mrf.mxu0
    %2655 = vdwg.mxu0
    %2657 = vrot.lane.b32.xlu0 %v2432, 96
    %v2658 = vpop.permute.xlu0 %2657
    %v2659 = vsel %vm134, %v2658, 0
    %2661 = vmatprep.subr.mxu0 0.0
    %2662 = vmatpush1.msra.mxu0 0.0
    %2663 = vmatprep.subr.mxu0 0.0
    %2664 = vmatpush1.msra.mxu0 0.0
    %2665 = vmatprep.subr.mxu0 0.0
    %2666 = vmatpush1.msra.mxu0 0.0
    %2667 = vmatprep.subr.mxu0 0.0
    %2668 = vmatpush1.msra.mxu0 0.0
    %2669 = vmatprep.subr.mxu0 0.0
    %2670 = vmatpush1.msra.mxu0 0.0
    %2671 = vmatprep.subr.mxu0 0.0
    %2672 = vmatpush1.msra.mxu0 0.0
    %2673 = vmatprep.subr.mxu0 0.0
    %2674 = vmatpush1.msra.mxu0 0.0
    %2675 = vmatprep.subr.mxu0 0.0
    %2676 = vmatpush1.msra.mxu0 0.0
    %2677 = vmatprep.subr.mxu0 0.0
    %2678 = vmatpush1.msra.mxu0 0.0
    %2679 = vmatprep.subr.mxu0 0.0
    %2680 = vmatpush1.msra.mxu0 0.0
    %2681 = vmatprep.subr.mxu0 0.0
    %2682 = vmatpush1.msra.mxu0 0.0
    %2683 = vmatprep.subr.mxu0 0.0
    %2684 = vmatpush1.msra.mxu0 0.0
    %2685 = vmatprep.subr.mxu0 0.0
    %2686 = vmatpush1.msra.mxu0 %v32
    %2687 = vmatprep.subr.mxu0 0.0
    %2688 = vmatpush1.msra.mxu0 %v31
    %2689 = vmatprep.subr.mxu0 0.0
    %2690 = vmatpush1.msra.mxu0 %v30
    %2691 = vmatprep.subr.mxu0 0.0
    %2692 = vmatpush1.msra.mxu0 %v29
    %2693 = vmatprep.subr.mxu0 0.0
    %2694 = vmatpush2.msra.mxu0 0.0
    %2695 = vmatprep.subr.mxu0 0.0
    %2696 = vmatpush2.msra.mxu0 0.0
    %2697 = vmatprep.subr.mxu0 0.0
    %2698 = vmatpush2.msra.mxu0 0.0
    %2699 = vmatprep.subr.mxu0 0.0
    %2700 = vmatpush2.msra.mxu0 0.0
    %2701 = vmatprep.subr.mxu0 0.0
    %2702 = vmatpush2.msra.mxu0 0.0
    %2703 = vmatprep.subr.mxu0 0.0
    %2704 = vmatpush2.msra.mxu0 0.0
    %2705 = vmatprep.subr.mxu0 0.0
    %2706 = vmatpush2.msra.mxu0 0.0
    %2707 = vmatprep.subr.mxu0 0.0
    %2708 = vmatpush2.msra.mxu0 0.0
    %2709 = vmatprep.subr.mxu0 0.0
    %2710 = vmatpush2.msra.mxu0 0.0
    %2711 = vmatprep.subr.mxu0 0.0
    %2712 = vmatpush2.msra.mxu0 0.0
    %2713 = vmatprep.subr.mxu0 0.0
    %2714 = vmatpush2.msra.mxu0 0.0
    %2715 = vmatprep.subr.mxu0 0.0
    %2716 = vmatpush2.msra.mxu0 0.0
    %2717 = vmatprep.subr.mxu0 0.0
    %2718 = vmatpush2.msra.mxu0 0.0
    %2719 = vmatprep.subr.mxu0 0.0
    %2720 = vmatpush2.msra.mxu0 0.0
    %2721 = vmatprep.subr.mxu0 0.0
    %2722 = vmatpush2.msra.mxu0 0.0
    %2723 = vmatprep.subr.mxu0 0.0
    %2724 = vmatpush2.msra.mxu0 0.0
    %2725 = vmatprep.mubr.f32.mxu0 0.0
    %2726 = vmatmul.mubr.f32.gmra.mxu0 %v2659
    %v2727 = vpop.f32.mrf.mxu0
    %v2728 = vadd.f32 %v2653, %v2727
    %v2729 = vpop.f32.mrf.mxu0
    %2730 = vdwg.mxu0
    %v2731 = vadd.f32 %v2728, %v1421
    %v2732 = vxor.u32 %v2731, 2147483648
    %v2733 = vmul.f32 %v2732, 1.442695
    %v2734 = vpow.pop %v2733
    %v2735 = vadd.f32 %v2734, 1.0
    %v2736 = vrcp.pop %v2735
    %v2737 = vmul.f32 1.0, %v2736
    %2739 = vrot.lane.b32.xlu0 %v2731, 64
    %v2740 = vpop.permute.xlu0 %2739
    %v2742 = vmul.f32 %v2737, %v2740
    %v2743 = vtanh.pop %v2742
    %v2744 = vsub.f32 1.0, %v2737
    %2746 = vrot.lane.b32.xlu0 %v2743, 32
    %v2747 = vpop.permute.xlu0 %2746
    %v2749 = vmul.f32 %v2744, %v2747
    %v2750 = vmul.f32 %v2737, %v2432
    %v2751 = vadd.f32 %v2749, %v2750
    %v2752 = vmul.f32 %v2751, %v1452
    %v2753 = vmul.f32 %v2751, %v1454
    %v2754 = vmul.f32 %v2751, %v1456
    %v2755 = vmul.f32 %v2751, %v1458
    %v2756 = vmul.f32 %v2751, %v1460
    %v2757 = vmul.f32 %v2751, %v1462
    %v2758 = vmul.f32 %v2751, %v1464
    %v2759 = vmul.f32 %v2751, %v1466
    %2768 = vrot.lane.b32.xlu0 %v2752, 96
    %v2769 = vpop.permute.xlu0 %2768
    %2770 = vrot.lane.b32.xlu0 %v2753, 96
    %v2771 = vpop.permute.xlu0 %2770
    %2772 = vrot.lane.b32.xlu0 %v2754, 96
    %v2773 = vpop.permute.xlu0 %2772
    %2774 = vrot.lane.b32.xlu0 %v2755, 96
    %v2775 = vpop.permute.xlu0 %2774
    %2776 = vrot.lane.b32.xlu0 %v2756, 96
    %v2777 = vpop.permute.xlu0 %2776
    %2778 = vrot.lane.b32.xlu0 %v2757, 96
    %v2779 = vpop.permute.xlu0 %2778
    %2780 = vrot.lane.b32.xlu0 %v2758, 96
    %v2781 = vpop.permute.xlu0 %2780
    %2782 = vrot.lane.b32.xlu0 %v2759, 96
    %v2783 = vpop.permute.xlu0 %2782
    %v2792 = vsel %vm208, %v2769, 0.0
    %2793 = vadd.xlane.f32.xlu0 %v2792
    %v2794 = vpop.xlane.xlu0 %2793
    %v2795 = vsel %vm208, %v2771, 0.0
    %2796 = vadd.xlane.f32.xlu0 %v2795
    %v2797 = vpop.xlane.xlu0 %2796
    %v2798 = vsel %vm208, %v2773, 0.0
    %2799 = vadd.xlane.f32.xlu0 %v2798
    %v2800 = vpop.xlane.xlu0 %2799
    %v2801 = vsel %vm208, %v2775, 0.0
    %2802 = vadd.xlane.f32.xlu0 %v2801
    %v2803 = vpop.xlane.xlu0 %2802
    %v2804 = vsel %vm208, %v2777, 0.0
    %2805 = vadd.xlane.f32.xlu0 %v2804
    %v2806 = vpop.xlane.xlu0 %2805
    %v2807 = vsel %vm208, %v2779, 0.0
    %2808 = vadd.xlane.f32.xlu0 %v2807
    %v2809 = vpop.xlane.xlu0 %2808
    %v2810 = vsel %vm208, %v2781, 0.0
    %2811 = vadd.xlane.f32.xlu0 %v2810
    %v2812 = vpop.xlane.xlu0 %2811
    %v2813 = vsel %vm208, %v2783, 0.0
    %2814 = vadd.xlane.f32.xlu0 %v2813
    %v2815 = vpop.xlane.xlu0 %2814
    %v2816 = vsel %vm1539, %v2794, -inf
    %v2817 = vsel %vm1539, %v2797, -inf
    %v2818 = vsel %vm1539, %v2800, -inf
    %v2819 = vsel %vm1539, %v2803, -inf
    %v2820 = vsel %vm1539, %v2806, -inf
    %v2821 = vmax.f32 %v2816, %v2820
    %v2822 = vsel %vm1539, %v2809, -inf
    %v2823 = vmax.f32 %v2817, %v2822
    %v2824 = vsel %vm1539, %v2812, -inf
    %v2825 = vmax.f32 %v2818, %v2824
    %v2826 = vsel %vm1539, %v2815, -inf
    %v2827 = vmax.f32 %v2819, %v2826
    %v2828 = vmax.f32 %v2821, %v2823
    %v2829 = vmax.f32 %v2825, %v2827
    %v2830 = vmax.f32 %v2828, %v2829
    %v2831 = vsub.f32 %v2794, %v2830
    %v2832 = vsub.f32 %v2797, %v2830
    %v2833 = vsub.f32 %v2800, %v2830
    %v2834 = vsub.f32 %v2803, %v2830
    %v2835 = vsub.f32 %v2806, %v2830
    %v2836 = vsub.f32 %v2809, %v2830
    %v2837 = vsub.f32 %v2812, %v2830
    %v2838 = vsub.f32 %v2815, %v2830
    %v2839 = vmul.f32 %v2831, 1.442695
    %v2840 = vpow.pop %v2839
    %v2841 = vmul.f32 %v2832, 1.442695
    %v2842 = vpow.pop %v2841
    %v2843 = vmul.f32 %v2833, 1.442695
    %v2844 = vpow.pop %v2843
    %v2845 = vmul.f32 %v2834, 1.442695
    %v2846 = vpow.pop %v2845
    %v2847 = vmul.f32 %v2835, 1.442695
    %v2848 = vpow.pop %v2847
    %v2849 = vmul.f32 %v2836, 1.442695
    %v2850 = vpow.pop %v2849
    %v2851 = vmul.f32 %v2837, 1.442695
    %v2852 = vpow.pop %v2851
    %v2853 = vmul.f32 %v2838, 1.442695
    %v2854 = vpow.pop %v2853
    %v2855 = vsel %vm1539, %v2840, 0.0
    %v2856 = vsel %vm1539, %v2842, 0.0
    %v2857 = vadd.f32 %v2855, %v2856
    %v2858 = vsel %vm1539, %v2844, 0.0
    %v2859 = vadd.f32 %v2857, %v2858
    %v2860 = vsel %vm1539, %v2846, 0.0
    %v2861 = vadd.f32 %v2859, %v2860
    %v2862 = vsel %vm1539, %v2848, 0.0
    %v2863 = vadd.f32 %v2861, %v2862
    %v2864 = vsel %vm1539, %v2850, 0.0
    %v2865 = vadd.f32 %v2863, %v2864
    %v2866 = vsel %vm1539, %v2852, 0.0
    %v2867 = vadd.f32 %v2865, %v2866
    %v2868 = vsel %vm1539, %v2854, 0.0
    %v2869 = vadd.f32 %v2867, %v2868
    %v2870 = vrcp.pop %v2869
    %v2871 = vmul.f32 %v2840, %v2870
    %v2872 = vmul.f32 %v2842, %v2870
    %v2873 = vmul.f32 %v2844, %v2870
    %v2874 = vmul.f32 %v2846, %v2870
    %v2875 = vmul.f32 %v2848, %v2870
    %v2876 = vmul.f32 %v2850, %v2870
    %v2877 = vmul.f32 %v2852, %v2870
    %v2878 = vmul.f32 %v2854, %v2870
    %v2879 = vmul.f32 %v2871, %v1267
    %v2880 = vmul.f32 %v2872, %v1268
    %v2881 = vmul.f32 %v2873, %v1269
    %v2882 = vmul.f32 %v2874, %v1270
    %v2883 = vmul.f32 %v2875, %v1271
    %v2884 = vmul.f32 %v2876, %v1272
    %v2885 = vmul.f32 %v2877, %v1273
    %v2886 = vmul.f32 %v2878, %v1274
    %v2887 = vsel %vm208, %v2879, 0.0
    %v2888 = vsel %vm208, %v2880, 0.0
    %v2889 = vadd.f32 %v2887, %v2888
    %v2890 = vsel %vm208, %v2881, 0.0
    %v2891 = vadd.f32 %v2889, %v2890
    %v2892 = vsel %vm208, %v2882, 0.0
    %v2893 = vadd.f32 %v2891, %v2892
    %v2894 = vsel %vm208, %v2883, 0.0
    %v2895 = vadd.f32 %v2893, %v2894
    %v2896 = vsel %vm208, %v2884, 0.0
    %v2897 = vadd.f32 %v2895, %v2896
    %v2898 = vsel %vm208, %v2885, 0.0
    %v2899 = vadd.f32 %v2897, %v2898
    %v2900 = vsel %vm208, %v2886, 0.0
    %v2901 = vadd.f32 %v2899, %v2900
    %v2903 = vsel %vm134, %v2901, 0
    %2905 = vmatprep.subr.mxu0 0.0
    %2906 = vmatpush1.msra.mxu0 0.0
    %2907 = vmatprep.subr.mxu0 0.0
    %2908 = vmatpush1.msra.mxu0 0.0
    %2909 = vmatprep.subr.mxu0 0.0
    %2910 = vmatpush1.msra.mxu0 0.0
    %2911 = vmatprep.subr.mxu0 0.0
    %2912 = vmatpush1.msra.mxu0 0.0
    %2913 = vmatprep.subr.mxu0 0.0
    %2914 = vmatpush1.msra.mxu0 0.0
    %2915 = vmatprep.subr.mxu0 0.0
    %2916 = vmatpush1.msra.mxu0 0.0
    %2917 = vmatprep.subr.mxu0 0.0
    %2918 = vmatpush1.msra.mxu0 0.0
    %2919 = vmatprep.subr.mxu0 0.0
    %2920 = vmatpush1.msra.mxu0 0.0
    %2921 = vmatprep.subr.mxu0 0.0
    %2922 = vmatpush1.msra.mxu0 0.0
    %2923 = vmatprep.subr.mxu0 0.0
    %2924 = vmatpush1.msra.mxu0 0.0
    %2925 = vmatprep.subr.mxu0 0.0
    %2926 = vmatpush1.msra.mxu0 0.0
    %2927 = vmatprep.subr.mxu0 0.0
    %2928 = vmatpush1.msra.mxu0 0.0
    %2929 = vmatprep.subr.mxu0 0.0
    %2930 = vmatpush1.msra.mxu0 %v36
    %2931 = vmatprep.subr.mxu0 0.0
    %2932 = vmatpush1.msra.mxu0 %v35
    %2933 = vmatprep.subr.mxu0 0.0
    %2934 = vmatpush1.msra.mxu0 %v34
    %2935 = vmatprep.subr.mxu0 0.0
    %2936 = vmatpush1.msra.mxu0 %v33
    %2937 = vmatprep.subr.mxu0 0.0
    %2938 = vmatpush2.msra.mxu0 0.0
    %2939 = vmatprep.subr.mxu0 0.0
    %2940 = vmatpush2.msra.mxu0 0.0
    %2941 = vmatprep.subr.mxu0 0.0
    %2942 = vmatpush2.msra.mxu0 0.0
    %2943 = vmatprep.subr.mxu0 0.0
    %2944 = vmatpush2.msra.mxu0 0.0
    %2945 = vmatprep.subr.mxu0 0.0
    %2946 = vmatpush2.msra.mxu0 0.0
    %2947 = vmatprep.subr.mxu0 0.0
    %2948 = vmatpush2.msra.mxu0 0.0
    %2949 = vmatprep.subr.mxu0 0.0
    %2950 = vmatpush2.msra.mxu0 0.0
    %2951 = vmatprep.subr.mxu0 0.0
    %2952 = vmatpush2.msra.mxu0 0.0
    %2953 = vmatprep.subr.mxu0 0.0
    %2954 = vmatpush2.msra.mxu0 0.0
    %2955 = vmatprep.subr.mxu0 0.0
    %2956 = vmatpush2.msra.mxu0 0.0
    %2957 = vmatprep.subr.mxu0 0.0
    %2958 = vmatpush2.msra.mxu0 0.0
    %2959 = vmatprep.subr.mxu0 0.0
    %2960 = vmatpush2.msra.mxu0 0.0
    %2961 = vmatprep.subr.mxu0 0.0
    %2962 = vmatpush2.msra.mxu0 0.0
    %2963 = vmatprep.subr.mxu0 0.0
    %2964 = vmatpush2.msra.mxu0 0.0
    %2965 = vmatprep.subr.mxu0 0.0
    %2966 = vmatpush2.msra.mxu0 0.0
    %2967 = vmatprep.subr.mxu0 0.0
    %2968 = vmatpush2.msra.mxu0 0.0
    %2969 = vmatprep.mubr.f32.mxu0 0.0
    %2970 = vmatmul.mubr.f32.gmra.mxu0 %v2903
    %v2971 = vpop.f32.mrf.mxu0
    %v2972 = vadd.f32 0.0, %v2971
    %v2973 = vpop.f32.mrf.mxu0
    %2974 = vdwg.mxu0
    %2976 = vrot.lane.b32.xlu0 %v2751, 96
    %v2977 = vpop.permute.xlu0 %2976
    %v2978 = vsel %vm134, %v2977, 0
    %2980 = vmatprep.subr.mxu0 0.0
    %2981 = vmatpush1.msra.mxu0 0.0
    %2982 = vmatprep.subr.mxu0 0.0
    %2983 = vmatpush1.msra.mxu0 0.0
    %2984 = vmatprep.subr.mxu0 0.0
    %2985 = vmatpush1.msra.mxu0 0.0
    %2986 = vmatprep.subr.mxu0 0.0
    %2987 = vmatpush1.msra.mxu0 0.0
    %2988 = vmatprep.subr.mxu0 0.0
    %2989 = vmatpush1.msra.mxu0 0.0
    %2990 = vmatprep.subr.mxu0 0.0
    %2991 = vmatpush1.msra.mxu0 0.0
    %2992 = vmatprep.subr.mxu0 0.0
    %2993 = vmatpush1.msra.mxu0 0.0
    %2994 = vmatprep.subr.mxu0 0.0
    %2995 = vmatpush1.msra.mxu0 0.0
    %2996 = vmatprep.subr.mxu0 0.0
    %2997 = vmatpush1.msra.mxu0 0.0
    %2998 = vmatprep.subr.mxu0 0.0
    %2999 = vmatpush1.msra.mxu0 0.0
    %3000 = vmatprep.subr.mxu0 0.0
    %3001 = vmatpush1.msra.mxu0 0.0
    %3002 = vmatprep.subr.mxu0 0.0
    %3003 = vmatpush1.msra.mxu0 0.0
    %3004 = vmatprep.subr.mxu0 0.0
    %3005 = vmatpush1.msra.mxu0 %v32
    %3006 = vmatprep.subr.mxu0 0.0
    %3007 = vmatpush1.msra.mxu0 %v31
    %3008 = vmatprep.subr.mxu0 0.0
    %3009 = vmatpush1.msra.mxu0 %v30
    %3010 = vmatprep.subr.mxu0 0.0
    %3011 = vmatpush1.msra.mxu0 %v29
    %3012 = vmatprep.subr.mxu0 0.0
    %3013 = vmatpush2.msra.mxu0 0.0
    %3014 = vmatprep.subr.mxu0 0.0
    %3015 = vmatpush2.msra.mxu0 0.0
    %3016 = vmatprep.subr.mxu0 0.0
    %3017 = vmatpush2.msra.mxu0 0.0
    %3018 = vmatprep.subr.mxu0 0.0
    %3019 = vmatpush2.msra.mxu0 0.0
    %3020 = vmatprep.subr.mxu0 0.0
    %3021 = vmatpush2.msra.mxu0 0.0
    %3022 = vmatprep.subr.mxu0 0.0
    %3023 = vmatpush2.msra.mxu0 0.0
    %3024 = vmatprep.subr.mxu0 0.0
    %3025 = vmatpush2.msra.mxu0 0.0
    %3026 = vmatprep.subr.mxu0 0.0
    %3027 = vmatpush2.msra.mxu0 0.0
    %3028 = vmatprep.subr.mxu0 0.0
    %3029 = vmatpush2.msra.mxu0 0.0
    %3030 = vmatprep.subr.mxu0 0.0
    %3031 = vmatpush2.msra.mxu0 0.0
    %3032 = vmatprep.subr.mxu0 0.0
    %3033 = vmatpush2.msra.mxu0 0.0
    %3034 = vmatprep.subr.mxu0 0.0
    %3035 = vmatpush2.msra.mxu0 0.0
    %3036 = vmatprep.subr.mxu0 0.0
    %3037 = vmatpush2.msra.mxu0 0.0
    %3038 = vmatprep.subr.mxu0 0.0
    %3039 = vmatpush2.msra.mxu0 0.0
    %3040 = vmatprep.subr.mxu0 0.0
    %3041 = vmatpush2.msra.mxu0 0.0
    %3042 = vmatprep.subr.mxu0 0.0
    %3043 = vmatpush2.msra.mxu0 0.0
    %3044 = vmatprep.mubr.f32.mxu0 0.0
    %3045 = vmatmul.mubr.f32.gmra.mxu0 %v2978
    %v3046 = vpop.f32.mrf.mxu0
    %v3047 = vadd.f32 %v2972, %v3046
    %v3048 = vpop.f32.mrf.mxu0
    %3049 = vdwg.mxu0
    %v3050 = vadd.f32 %v3047, %v1421
    %v3051 = vxor.u32 %v3050, 2147483648
    %v3052 = vmul.f32 %v3051, 1.442695
    %v3053 = vpow.pop %v3052
    %v3054 = vadd.f32 %v3053, 1.0
    %v3055 = vrcp.pop %v3054
    %v3056 = vmul.f32 1.0, %v3055
    %3058 = vrot.lane.b32.xlu0 %v3050, 64
    %v3059 = vpop.permute.xlu0 %3058
    %v3061 = vmul.f32 %v3056, %v3059
    %v3062 = vtanh.pop %v3061
    %v3063 = vsub.f32 1.0, %v3056
    %3065 = vrot.lane.b32.xlu0 %v3062, 32
    %v3066 = vpop.permute.xlu0 %3065
    %v3068 = vmul.f32 %v3063, %v3066
    %v3069 = vmul.f32 %v3056, %v2751
    %v3070 = vadd.f32 %v3068, %v3069
    %v3071 = vmul.f32 %v3070, %v1452
    %v3072 = vmul.f32 %v3070, %v1454
    %v3073 = vmul.f32 %v3070, %v1456
    %v3074 = vmul.f32 %v3070, %v1458
    %v3075 = vmul.f32 %v3070, %v1460
    %v3076 = vmul.f32 %v3070, %v1462
    %v3077 = vmul.f32 %v3070, %v1464
    %v3078 = vmul.f32 %v3070, %v1466
    %3087 = vrot.lane.b32.xlu0 %v3071, 96
    %v3088 = vpop.permute.xlu0 %3087
    %3089 = vrot.lane.b32.xlu0 %v3072, 96
    %v3090 = vpop.permute.xlu0 %3089
    %3091 = vrot.lane.b32.xlu0 %v3073, 96
    %v3092 = vpop.permute.xlu0 %3091
    %3093 = vrot.lane.b32.xlu0 %v3074, 96
    %v3094 = vpop.permute.xlu0 %3093
    %3095 = vrot.lane.b32.xlu0 %v3075, 96
    %v3096 = vpop.permute.xlu0 %3095
    %3097 = vrot.lane.b32.xlu0 %v3076, 96
    %v3098 = vpop.permute.xlu0 %3097
    %3099 = vrot.lane.b32.xlu0 %v3077, 96
    %v3100 = vpop.permute.xlu0 %3099
    %3101 = vrot.lane.b32.xlu0 %v3078, 96
    %v3102 = vpop.permute.xlu0 %3101
    %v3111 = vsel %vm208, %v3088, 0.0
    %3112 = vadd.xlane.f32.xlu0 %v3111
    %v3113 = vpop.xlane.xlu0 %3112
    %v3114 = vsel %vm208, %v3090, 0.0
    %3115 = vadd.xlane.f32.xlu0 %v3114
    %v3116 = vpop.xlane.xlu0 %3115
    %v3117 = vsel %vm208, %v3092, 0.0
    %3118 = vadd.xlane.f32.xlu0 %v3117
    %v3119 = vpop.xlane.xlu0 %3118
    %v3120 = vsel %vm208, %v3094, 0.0
    %3121 = vadd.xlane.f32.xlu0 %v3120
    %v3122 = vpop.xlane.xlu0 %3121
    %v3123 = vsel %vm208, %v3096, 0.0
    %3124 = vadd.xlane.f32.xlu0 %v3123
    %v3125 = vpop.xlane.xlu0 %3124
    %v3126 = vsel %vm208, %v3098, 0.0
    %3127 = vadd.xlane.f32.xlu0 %v3126
    %v3128 = vpop.xlane.xlu0 %3127
    %v3129 = vsel %vm208, %v3100, 0.0
    %3130 = vadd.xlane.f32.xlu0 %v3129
    %v3131 = vpop.xlane.xlu0 %3130
    %v3132 = vsel %vm208, %v3102, 0.0
    %3133 = vadd.xlane.f32.xlu0 %v3132
    %v3134 = vpop.xlane.xlu0 %3133
    %v3135 = vsel %vm1539, %v3113, -inf
    %v3136 = vsel %vm1539, %v3116, -inf
    %v3137 = vsel %vm1539, %v3119, -inf
    %v3138 = vsel %vm1539, %v3122, -inf
    %v3139 = vsel %vm1539, %v3125, -inf
    %v3140 = vmax.f32 %v3135, %v3139
    %v3141 = vsel %vm1539, %v3128, -inf
    %v3142 = vmax.f32 %v3136, %v3141
    %v3143 = vsel %vm1539, %v3131, -inf
    %v3144 = vmax.f32 %v3137, %v3143
    %v3145 = vsel %vm1539, %v3134, -inf
    %v3146 = vmax.f32 %v3138, %v3145
    %v3147 = vmax.f32 %v3140, %v3142
    %v3148 = vmax.f32 %v3144, %v3146
    %v3149 = vmax.f32 %v3147, %v3148
    %v3150 = vsub.f32 %v3113, %v3149
    %v3151 = vsub.f32 %v3116, %v3149
    %v3152 = vsub.f32 %v3119, %v3149
    %v3153 = vsub.f32 %v3122, %v3149
    %v3154 = vsub.f32 %v3125, %v3149
    %v3155 = vsub.f32 %v3128, %v3149
    %v3156 = vsub.f32 %v3131, %v3149
    %v3157 = vsub.f32 %v3134, %v3149
    %v3158 = vmul.f32 %v3150, 1.442695
    %v3159 = vpow.pop %v3158
    %v3160 = vmul.f32 %v3151, 1.442695
    %v3161 = vpow.pop %v3160
    %v3162 = vmul.f32 %v3152, 1.442695
    %v3163 = vpow.pop %v3162
    %v3164 = vmul.f32 %v3153, 1.442695
    %v3165 = vpow.pop %v3164
    %v3166 = vmul.f32 %v3154, 1.442695
    %v3167 = vpow.pop %v3166
    %v3168 = vmul.f32 %v3155, 1.442695
    %v3169 = vpow.pop %v3168
    %v3170 = vmul.f32 %v3156, 1.442695
    %v3171 = vpow.pop %v3170
    %v3172 = vmul.f32 %v3157, 1.442695
    %v3173 = vpow.pop %v3172
    %v3174 = vsel %vm1539, %v3159, 0.0
    %v3175 = vsel %vm1539, %v3161, 0.0
    %v3176 = vadd.f32 %v3174, %v3175
    %v3177 = vsel %vm1539, %v3163, 0.0
    %v3178 = vadd.f32 %v3176, %v3177
    %v3179 = vsel %vm1539, %v3165, 0.0
    %v3180 = vadd.f32 %v3178, %v3179
    %v3181 = vsel %vm1539, %v3167, 0.0
    %v3182 = vadd.f32 %v3180, %v3181
    %v3183 = vsel %vm1539, %v3169, 0.0
    %v3184 = vadd.f32 %v3182, %v3183
    %v3185 = vsel %vm1539, %v3171, 0.0
    %v3186 = vadd.f32 %v3184, %v3185
    %v3187 = vsel %vm1539, %v3173, 0.0
    %v3188 = vadd.f32 %v3186, %v3187
    %v3189 = vrcp.pop %v3188
    %v3190 = vmul.f32 %v3159, %v3189
    %v3191 = vmul.f32 %v3161, %v3189
    %v3192 = vmul.f32 %v3163, %v3189
    %v3193 = vmul.f32 %v3165, %v3189
    %v3194 = vmul.f32 %v3167, %v3189
    %v3195 = vmul.f32 %v3169, %v3189
    %v3196 = vmul.f32 %v3171, %v3189
    %v3197 = vmul.f32 %v3173, %v3189
    %v3198 = vmul.f32 %v3190, %v1267
    %v3199 = vmul.f32 %v3191, %v1268
    %v3200 = vmul.f32 %v3192, %v1269
    %v3201 = vmul.f32 %v3193, %v1270
    %v3202 = vmul.f32 %v3194, %v1271
    %v3203 = vmul.f32 %v3195, %v1272
    %v3204 = vmul.f32 %v3196, %v1273
    %v3205 = vmul.f32 %v3197, %v1274
    %v3206 = vsel %vm208, %v3198, 0.0
    %v3207 = vsel %vm208, %v3199, 0.0
    %v3208 = vadd.f32 %v3206, %v3207
    %v3209 = vsel %vm208, %v3200, 0.0
    %v3210 = vadd.f32 %v3208, %v3209
    %v3211 = vsel %vm208, %v3201, 0.0
    %v3212 = vadd.f32 %v3210, %v3211
    %v3213 = vsel %vm208, %v3202, 0.0
    %v3214 = vadd.f32 %v3212, %v3213
    %v3215 = vsel %vm208, %v3203, 0.0
    %v3216 = vadd.f32 %v3214, %v3215
    %v3217 = vsel %vm208, %v3204, 0.0
    %v3218 = vadd.f32 %v3216, %v3217
    %v3219 = vsel %vm208, %v3205, 0.0
    %v3220 = vadd.f32 %v3218, %v3219
    %v3222 = vsel %vm134, %v3220, 0
    %3224 = vmatprep.subr.mxu0 0.0
    %3225 = vmatpush1.msra.mxu0 0.0
    %3226 = vmatprep.subr.mxu0 0.0
    %3227 = vmatpush1.msra.mxu0 0.0
    %3228 = vmatprep.subr.mxu0 0.0
    %3229 = vmatpush1.msra.mxu0 0.0
    %3230 = vmatprep.subr.mxu0 0.0
    %3231 = vmatpush1.msra.mxu0 0.0
    %3232 = vmatprep.subr.mxu0 0.0
    %3233 = vmatpush1.msra.mxu0 0.0
    %3234 = vmatprep.subr.mxu0 0.0
    %3235 = vmatpush1.msra.mxu0 0.0
    %3236 = vmatprep.subr.mxu0 0.0
    %3237 = vmatpush1.msra.mxu0 0.0
    %3238 = vmatprep.subr.mxu0 0.0
    %3239 = vmatpush1.msra.mxu0 0.0
    %3240 = vmatprep.subr.mxu0 0.0
    %3241 = vmatpush1.msra.mxu0 0.0
    %3242 = vmatprep.subr.mxu0 0.0
    %3243 = vmatpush1.msra.mxu0 0.0
    %3244 = vmatprep.subr.mxu0 0.0
    %3245 = vmatpush1.msra.mxu0 0.0
    %3246 = vmatprep.subr.mxu0 0.0
    %3247 = vmatpush1.msra.mxu0 0.0
    %3248 = vmatprep.subr.mxu0 0.0
    %3249 = vmatpush1.msra.mxu0 %v36
    %3250 = vmatprep.subr.mxu0 0.0
    %3251 = vmatpush1.msra.mxu0 %v35
    %3252 = vmatprep.subr.mxu0 0.0
    %3253 = vmatpush1.msra.mxu0 %v34
    %3254 = vmatprep.subr.mxu0 0.0
    %3255 = vmatpush1.msra.mxu0 %v33
    %3256 = vmatprep.subr.mxu0 0.0
    %3257 = vmatpush2.msra.mxu0 0.0
    %3258 = vmatprep.subr.mxu0 0.0
    %3259 = vmatpush2.msra.mxu0 0.0
    %3260 = vmatprep.subr.mxu0 0.0
    %3261 = vmatpush2.msra.mxu0 0.0
    %3262 = vmatprep.subr.mxu0 0.0
    %3263 = vmatpush2.msra.mxu0 0.0
    %3264 = vmatprep.subr.mxu0 0.0
    %3265 = vmatpush2.msra.mxu0 0.0
    %3266 = vmatprep.subr.mxu0 0.0
    %3267 = vmatpush2.msra.mxu0 0.0
    %3268 = vmatprep.subr.mxu0 0.0
    %3269 = vmatpush2.msra.mxu0 0.0
    %3270 = vmatprep.subr.mxu0 0.0
    %3271 = vmatpush2.msra.mxu0 0.0
    %3272 = vmatprep.subr.mxu0 0.0
    %3273 = vmatpush2.msra.mxu0 0.0
    %3274 = vmatprep.subr.mxu0 0.0
    %3275 = vmatpush2.msra.mxu0 0.0
    %3276 = vmatprep.subr.mxu0 0.0
    %3277 = vmatpush2.msra.mxu0 0.0
    %3278 = vmatprep.subr.mxu0 0.0
    %3279 = vmatpush2.msra.mxu0 0.0
    %3280 = vmatprep.subr.mxu0 0.0
    %3281 = vmatpush2.msra.mxu0 0.0
    %3282 = vmatprep.subr.mxu0 0.0
    %3283 = vmatpush2.msra.mxu0 0.0
    %3284 = vmatprep.subr.mxu0 0.0
    %3285 = vmatpush2.msra.mxu0 0.0
    %3286 = vmatprep.subr.mxu0 0.0
    %3287 = vmatpush2.msra.mxu0 0.0
    %3288 = vmatprep.mubr.f32.mxu0 0.0
    %3289 = vmatmul.mubr.f32.gmra.mxu0 %v3222
    %v3290 = vpop.f32.mrf.mxu0
    %v3291 = vadd.f32 0.0, %v3290
    %v3292 = vpop.f32.mrf.mxu0
    %3293 = vdwg.mxu0
    %3295 = vrot.lane.b32.xlu0 %v3070, 96
    %v3296 = vpop.permute.xlu0 %3295
    %v3297 = vsel %vm134, %v3296, 0
    %3299 = vmatprep.subr.mxu0 0.0
    %3300 = vmatpush1.msra.mxu0 0.0
    %3301 = vmatprep.subr.mxu0 0.0
    %3302 = vmatpush1.msra.mxu0 0.0
    %3303 = vmatprep.subr.mxu0 0.0
    %3304 = vmatpush1.msra.mxu0 0.0
    %3305 = vmatprep.subr.mxu0 0.0
    %3306 = vmatpush1.msra.mxu0 0.0
    %3307 = vmatprep.subr.mxu0 0.0
    %3308 = vmatpush1.msra.mxu0 0.0
    %3309 = vmatprep.subr.mxu0 0.0
    %3310 = vmatpush1.msra.mxu0 0.0
    %3311 = vmatprep.subr.mxu0 0.0
    %3312 = vmatpush1.msra.mxu0 0.0
    %3313 = vmatprep.subr.mxu0 0.0
    %3314 = vmatpush1.msra.mxu0 0.0
    %3315 = vmatprep.subr.mxu0 0.0
    %3316 = vmatpush1.msra.mxu0 0.0
    %3317 = vmatprep.subr.mxu0 0.0
    %3318 = vmatpush1.msra.mxu0 0.0
    %3319 = vmatprep.subr.mxu0 0.0
    %3320 = vmatpush1.msra.mxu0 0.0
    %3321 = vmatprep.subr.mxu0 0.0
    %3322 = vmatpush1.msra.mxu0 0.0
    %3323 = vmatprep.subr.mxu0 0.0
    %3324 = vmatpush1.msra.mxu0 %v32
    %3325 = vmatprep.subr.mxu0 0.0
    %3326 = vmatpush1.msra.mxu0 %v31
    %3327 = vmatprep.subr.mxu0 0.0
    %3328 = vmatpush1.msra.mxu0 %v30
    %3329 = vmatprep.subr.mxu0 0.0
    %3330 = vmatpush1.msra.mxu0 %v29
    %3331 = vmatprep.subr.mxu0 0.0
    %3332 = vmatpush2.msra.mxu0 0.0
    %3333 = vmatprep.subr.mxu0 0.0
    %3334 = vmatpush2.msra.mxu0 0.0
    %3335 = vmatprep.subr.mxu0 0.0
    %3336 = vmatpush2.msra.mxu0 0.0
    %3337 = vmatprep.subr.mxu0 0.0
    %3338 = vmatpush2.msra.mxu0 0.0
    %3339 = vmatprep.subr.mxu0 0.0
    %3340 = vmatpush2.msra.mxu0 0.0
    %3341 = vmatprep.subr.mxu0 0.0
    %3342 = vmatpush2.msra.mxu0 0.0
    %3343 = vmatprep.subr.mxu0 0.0
    %3344 = vmatpush2.msra.mxu0 0.0
    %3345 = vmatprep.subr.mxu0 0.0
    %3346 = vmatpush2.msra.mxu0 0.0
    %3347 = vmatprep.subr.mxu0 0.0
    %3348 = vmatpush2.msra.mxu0 0.0
    %3349 = vmatprep.subr.mxu0 0.0
    %3350 = vmatpush2.msra.mxu0 0.0
    %3351 = vmatprep.subr.mxu0 0.0
    %3352 = vmatpush2.msra.mxu0 0.0
    %3353 = vmatprep.subr.mxu0 0.0
    %3354 = vmatpush2.msra.mxu0 0.0
    %3355 = vmatprep.subr.mxu0 0.0
    %3356 = vmatpush2.msra.mxu0 0.0
    %3357 = vmatprep.subr.mxu0 0.0
    %3358 = vmatpush2.msra.mxu0 0.0
    %3359 = vmatprep.subr.mxu0 0.0
    %3360 = vmatpush2.msra.mxu0 0.0
    %3361 = vmatprep.subr.mxu0 0.0
    %3362 = vmatpush2.msra.mxu0 0.0
    %3363 = vmatprep.mubr.f32.mxu0 0.0
    %3364 = vmatmul.mubr.f32.gmra.mxu0 %v3297
    %v3365 = vpop.f32.mrf.mxu0
    %v3366 = vadd.f32 %v3291, %v3365
    %v3367 = vpop.f32.mrf.mxu0
    %3368 = vdwg.mxu0
    %v3369 = vadd.f32 %v3366, %v1421
    %v3370 = vxor.u32 %v3369, 2147483648
    %v3371 = vmul.f32 %v3370, 1.442695
    %v3372 = vpow.pop %v3371
    %v3373 = vadd.f32 %v3372, 1.0
    %v3374 = vrcp.pop %v3373
    %v3375 = vmul.f32 1.0, %v3374
    %3377 = vrot.lane.b32.xlu0 %v3369, 64
    %v3378 = vpop.permute.xlu0 %3377
    %v3380 = vmul.f32 %v3375, %v3378
    %v3381 = vtanh.pop %v3380
    %v3382 = vsub.f32 1.0, %v3375
    %3384 = vrot.lane.b32.xlu0 %v3381, 32
    %v3385 = vpop.permute.xlu0 %3384
    %v3387 = vmul.f32 %v3382, %v3385
    %v3388 = vmul.f32 %v3375, %v3070
    %v3389 = vadd.f32 %v3387, %v3388
    %v3390 = vmul.f32 %v3389, %v1452
    %v3391 = vmul.f32 %v3389, %v1454
    %v3392 = vmul.f32 %v3389, %v1456
    %v3393 = vmul.f32 %v3389, %v1458
    %v3394 = vmul.f32 %v3389, %v1460
    %v3395 = vmul.f32 %v3389, %v1462
    %v3396 = vmul.f32 %v3389, %v1464
    %v3397 = vmul.f32 %v3389, %v1466
    %3406 = vrot.lane.b32.xlu0 %v3390, 96
    %v3407 = vpop.permute.xlu0 %3406
    %3408 = vrot.lane.b32.xlu0 %v3391, 96
    %v3409 = vpop.permute.xlu0 %3408
    %3410 = vrot.lane.b32.xlu0 %v3392, 96
    %v3411 = vpop.permute.xlu0 %3410
    %3412 = vrot.lane.b32.xlu0 %v3393, 96
    %v3413 = vpop.permute.xlu0 %3412
    %3414 = vrot.lane.b32.xlu0 %v3394, 96
    %v3415 = vpop.permute.xlu0 %3414
    %3416 = vrot.lane.b32.xlu0 %v3395, 96
    %v3417 = vpop.permute.xlu0 %3416
    %3418 = vrot.lane.b32.xlu0 %v3396, 96
    %v3419 = vpop.permute.xlu0 %3418
    %3420 = vrot.lane.b32.xlu0 %v3397, 96
    %v3421 = vpop.permute.xlu0 %3420
    %v3430 = vsel %vm208, %v3407, 0.0
    %3431 = vadd.xlane.f32.xlu0 %v3430
    %v3432 = vpop.xlane.xlu0 %3431
    %v3433 = vsel %vm208, %v3409, 0.0
    %3434 = vadd.xlane.f32.xlu0 %v3433
    %v3435 = vpop.xlane.xlu0 %3434
    %v3436 = vsel %vm208, %v3411, 0.0
    %3437 = vadd.xlane.f32.xlu0 %v3436
    %v3438 = vpop.xlane.xlu0 %3437
    %v3439 = vsel %vm208, %v3413, 0.0
    %3440 = vadd.xlane.f32.xlu0 %v3439
    %v3441 = vpop.xlane.xlu0 %3440
    %v3442 = vsel %vm208, %v3415, 0.0
    %3443 = vadd.xlane.f32.xlu0 %v3442
    %v3444 = vpop.xlane.xlu0 %3443
    %v3445 = vsel %vm208, %v3417, 0.0
    %3446 = vadd.xlane.f32.xlu0 %v3445
    %v3447 = vpop.xlane.xlu0 %3446
    %v3448 = vsel %vm208, %v3419, 0.0
    %3449 = vadd.xlane.f32.xlu0 %v3448
    %v3450 = vpop.xlane.xlu0 %3449
    %v3451 = vsel %vm208, %v3421, 0.0
    %3452 = vadd.xlane.f32.xlu0 %v3451
    %v3453 = vpop.xlane.xlu0 %3452
    %v3454 = vsel %vm1539, %v3432, -inf
    %v3455 = vsel %vm1539, %v3435, -inf
    %v3456 = vsel %vm1539, %v3438, -inf
    %v3457 = vsel %vm1539, %v3441, -inf
    %v3458 = vsel %vm1539, %v3444, -inf
    %v3459 = vmax.f32 %v3454, %v3458
    %v3460 = vsel %vm1539, %v3447, -inf
    %v3461 = vmax.f32 %v3455, %v3460
    %v3462 = vsel %vm1539, %v3450, -inf
    %v3463 = vmax.f32 %v3456, %v3462
    %v3464 = vsel %vm1539, %v3453, -inf
    %v3465 = vmax.f32 %v3457, %v3464
    %v3466 = vmax.f32 %v3459, %v3461
    %v3467 = vmax.f32 %v3463, %v3465
    %v3468 = vmax.f32 %v3466, %v3467
    %v3469 = vsub.f32 %v3432, %v3468
    %v3470 = vsub.f32 %v3435, %v3468
    %v3471 = vsub.f32 %v3438, %v3468
    %v3472 = vsub.f32 %v3441, %v3468
    %v3473 = vsub.f32 %v3444, %v3468
    %v3474 = vsub.f32 %v3447, %v3468
    %v3475 = vsub.f32 %v3450, %v3468
    %v3476 = vsub.f32 %v3453, %v3468
    %v3477 = vmul.f32 %v3469, 1.442695
    %v3478 = vpow.pop %v3477
    %v3479 = vmul.f32 %v3470, 1.442695
    %v3480 = vpow.pop %v3479
    %v3481 = vmul.f32 %v3471, 1.442695
    %v3482 = vpow.pop %v3481
    %v3483 = vmul.f32 %v3472, 1.442695
    %v3484 = vpow.pop %v3483
    %v3485 = vmul.f32 %v3473, 1.442695
    %v3486 = vpow.pop %v3485
    %v3487 = vmul.f32 %v3474, 1.442695
    %v3488 = vpow.pop %v3487
    %v3489 = vmul.f32 %v3475, 1.442695
    %v3490 = vpow.pop %v3489
    %v3491 = vmul.f32 %v3476, 1.442695
    %v3492 = vpow.pop %v3491
    %v3493 = vsel %vm1539, %v3478, 0.0
    %v3494 = vsel %vm1539, %v3480, 0.0
    %v3495 = vadd.f32 %v3493, %v3494
    %v3496 = vsel %vm1539, %v3482, 0.0
    %v3497 = vadd.f32 %v3495, %v3496
    %v3498 = vsel %vm1539, %v3484, 0.0
    %v3499 = vadd.f32 %v3497, %v3498
    %v3500 = vsel %vm1539, %v3486, 0.0
    %v3501 = vadd.f32 %v3499, %v3500
    %v3502 = vsel %vm1539, %v3488, 0.0
    %v3503 = vadd.f32 %v3501, %v3502
    %v3504 = vsel %vm1539, %v3490, 0.0
    %v3505 = vadd.f32 %v3503, %v3504
    %v3506 = vsel %vm1539, %v3492, 0.0
    %v3507 = vadd.f32 %v3505, %v3506
    %v3508 = vrcp.pop %v3507
    %v3509 = vmul.f32 %v3478, %v3508
    %v3510 = vmul.f32 %v3480, %v3508
    %v3511 = vmul.f32 %v3482, %v3508
    %v3512 = vmul.f32 %v3484, %v3508
    %v3513 = vmul.f32 %v3486, %v3508
    %v3514 = vmul.f32 %v3488, %v3508
    %v3515 = vmul.f32 %v3490, %v3508
    %v3516 = vmul.f32 %v3492, %v3508
    %v3517 = vmul.f32 %v3509, %v1267
    %v3518 = vmul.f32 %v3510, %v1268
    %v3519 = vmul.f32 %v3511, %v1269
    %v3520 = vmul.f32 %v3512, %v1270
    %v3521 = vmul.f32 %v3513, %v1271
    %v3522 = vmul.f32 %v3514, %v1272
    %v3523 = vmul.f32 %v3515, %v1273
    %v3524 = vmul.f32 %v3516, %v1274
    %v3525 = vsel %vm208, %v3517, 0.0
    %v3526 = vsel %vm208, %v3518, 0.0
    %v3527 = vadd.f32 %v3525, %v3526
    %v3528 = vsel %vm208, %v3519, 0.0
    %v3529 = vadd.f32 %v3527, %v3528
    %v3530 = vsel %vm208, %v3520, 0.0
    %v3531 = vadd.f32 %v3529, %v3530
    %v3532 = vsel %vm208, %v3521, 0.0
    %v3533 = vadd.f32 %v3531, %v3532
    %v3534 = vsel %vm208, %v3522, 0.0
    %v3535 = vadd.f32 %v3533, %v3534
    %v3536 = vsel %vm208, %v3523, 0.0
    %v3537 = vadd.f32 %v3535, %v3536
    %v3538 = vsel %vm208, %v3524, 0.0
    %v3539 = vadd.f32 %v3537, %v3538
    %v3541 = vsel %vm134, %v3539, 0
    %3543 = vmatprep.subr.mxu0 0.0
    %3544 = vmatpush1.msra.mxu0 0.0
    %3545 = vmatprep.subr.mxu0 0.0
    %3546 = vmatpush1.msra.mxu0 0.0
    %3547 = vmatprep.subr.mxu0 0.0
    %3548 = vmatpush1.msra.mxu0 0.0
    %3549 = vmatprep.subr.mxu0 0.0
    %3550 = vmatpush1.msra.mxu0 0.0
    %3551 = vmatprep.subr.mxu0 0.0
    %3552 = vmatpush1.msra.mxu0 0.0
    %3553 = vmatprep.subr.mxu0 0.0
    %3554 = vmatpush1.msra.mxu0 0.0
    %3555 = vmatprep.subr.mxu0 0.0
    %3556 = vmatpush1.msra.mxu0 0.0
    %3557 = vmatprep.subr.mxu0 0.0
    %3558 = vmatpush1.msra.mxu0 0.0
    %3559 = vmatprep.subr.mxu0 0.0
    %3560 = vmatpush1.msra.mxu0 0.0
    %3561 = vmatprep.subr.mxu0 0.0
    %3562 = vmatpush1.msra.mxu0 0.0
    %3563 = vmatprep.subr.mxu0 0.0
    %3564 = vmatpush1.msra.mxu0 0.0
    %3565 = vmatprep.subr.mxu0 0.0
    %3566 = vmatpush1.msra.mxu0 0.0
    %3567 = vmatprep.subr.mxu0 0.0
    %3568 = vmatpush1.msra.mxu0 %v36
    %3569 = vmatprep.subr.mxu0 0.0
    %3570 = vmatpush1.msra.mxu0 %v35
    %3571 = vmatprep.subr.mxu0 0.0
    %3572 = vmatpush1.msra.mxu0 %v34
    %3573 = vmatprep.subr.mxu0 0.0
    %3574 = vmatpush1.msra.mxu0 %v33
    %3575 = vmatprep.subr.mxu0 0.0
    %3576 = vmatpush2.msra.mxu0 0.0
    %3577 = vmatprep.subr.mxu0 0.0
    %3578 = vmatpush2.msra.mxu0 0.0
    %3579 = vmatprep.subr.mxu0 0.0
    %3580 = vmatpush2.msra.mxu0 0.0
    %3581 = vmatprep.subr.mxu0 0.0
    %3582 = vmatpush2.msra.mxu0 0.0
    %3583 = vmatprep.subr.mxu0 0.0
    %3584 = vmatpush2.msra.mxu0 0.0
    %3585 = vmatprep.subr.mxu0 0.0
    %3586 = vmatpush2.msra.mxu0 0.0
    %3587 = vmatprep.subr.mxu0 0.0
    %3588 = vmatpush2.msra.mxu0 0.0
    %3589 = vmatprep.subr.mxu0 0.0
    %3590 = vmatpush2.msra.mxu0 0.0
    %3591 = vmatprep.subr.mxu0 0.0
    %3592 = vmatpush2.msra.mxu0 0.0
    %3593 = vmatprep.subr.mxu0 0.0
    %3594 = vmatpush2.msra.mxu0 0.0
    %3595 = vmatprep.subr.mxu0 0.0
    %3596 = vmatpush2.msra.mxu0 0.0
    %3597 = vmatprep.subr.mxu0 0.0
    %3598 = vmatpush2.msra.mxu0 0.0
    %3599 = vmatprep.subr.mxu0 0.0
    %3600 = vmatpush2.msra.mxu0 0.0
    %3601 = vmatprep.subr.mxu0 0.0
    %3602 = vmatpush2.msra.mxu0 0.0
    %3603 = vmatprep.subr.mxu0 0.0
    %3604 = vmatpush2.msra.mxu0 0.0
    %3605 = vmatprep.subr.mxu0 0.0
    %3606 = vmatpush2.msra.mxu0 0.0
    %3607 = vmatprep.mubr.f32.mxu0 0.0
    %3608 = vmatmul.mubr.f32.gmra.mxu0 %v3541
    %v3609 = vpop.f32.mrf.mxu0
    %v3610 = vadd.f32 0.0, %v3609
    %v3611 = vpop.f32.mrf.mxu0
    %3612 = vdwg.mxu0
    %3614 = vrot.lane.b32.xlu0 %v3389, 96
    %v3615 = vpop.permute.xlu0 %3614
    %v3616 = vsel %vm134, %v3615, 0
    %3618 = vmatprep.subr.mxu0 0.0
    %3619 = vmatpush1.msra.mxu0 0.0
    %3620 = vmatprep.subr.mxu0 0.0
    %3621 = vmatpush1.msra.mxu0 0.0
    %3622 = vmatprep.subr.mxu0 0.0
    %3623 = vmatpush1.msra.mxu0 0.0
    %3624 = vmatprep.subr.mxu0 0.0
    %3625 = vmatpush1.msra.mxu0 0.0
    %3626 = vmatprep.subr.mxu0 0.0
    %3627 = vmatpush1.msra.mxu0 0.0
    %3628 = vmatprep.subr.mxu0 0.0
    %3629 = vmatpush1.msra.mxu0 0.0
    %3630 = vmatprep.subr.mxu0 0.0
    %3631 = vmatpush1.msra.mxu0 0.0
    %3632 = vmatprep.subr.mxu0 0.0
    %3633 = vmatpush1.msra.mxu0 0.0
    %3634 = vmatprep.subr.mxu0 0.0
    %3635 = vmatpush1.msra.mxu0 0.0
    %3636 = vmatprep.subr.mxu0 0.0
    %3637 = vmatpush1.msra.mxu0 0.0
    %3638 = vmatprep.subr.mxu0 0.0
    %3639 = vmatpush1.msra.mxu0 0.0
    %3640 = vmatprep.subr.mxu0 0.0
    %3641 = vmatpush1.msra.mxu0 0.0
    %3642 = vmatprep.subr.mxu0 0.0
    %3643 = vmatpush1.msra.mxu0 %v32
    %3644 = vmatprep.subr.mxu0 0.0
    %3645 = vmatpush1.msra.mxu0 %v31
    %3646 = vmatprep.subr.mxu0 0.0
    %3647 = vmatpush1.msra.mxu0 %v30
    %3648 = vmatprep.subr.mxu0 0.0
    %3649 = vmatpush1.msra.mxu0 %v29
    %3650 = vmatprep.subr.mxu0 0.0
    %3651 = vmatpush2.msra.mxu0 0.0
    %3652 = vmatprep.subr.mxu0 0.0
    %3653 = vmatpush2.msra.mxu0 0.0
    %3654 = vmatprep.subr.mxu0 0.0
    %3655 = vmatpush2.msra.mxu0 0.0
    %3656 = vmatprep.subr.mxu0 0.0
    %3657 = vmatpush2.msra.mxu0 0.0
    %3658 = vmatprep.subr.mxu0 0.0
    %3659 = vmatpush2.msra.mxu0 0.0
    %3660 = vmatprep.subr.mxu0 0.0
    %3661 = vmatpush2.msra.mxu0 0.0
    %3662 = vmatprep.subr.mxu0 0.0
    %3663 = vmatpush2.msra.mxu0 0.0
    %3664 = vmatprep.subr.mxu0 0.0
    %3665 = vmatpush2.msra.mxu0 0.0
    %3666 = vmatprep.subr.mxu0 0.0
    %3667 = vmatpush2.msra.mxu0 0.0
    %3668 = vmatprep.subr.mxu0 0.0
    %3669 = vmatpush2.msra.mxu0 0.0
    %3670 = vmatprep.subr.mxu0 0.0
    %3671 = vmatpush2.msra.mxu0 0.0
    %3672 = vmatprep.subr.mxu0 0.0
    %3673 = vmatpush2.msra.mxu0 0.0
    %3674 = vmatprep.subr.mxu0 0.0
    %3675 = vmatpush2.msra.mxu0 0.0
    %3676 = vmatprep.subr.mxu0 0.0
    %3677 = vmatpush2.msra.mxu0 0.0
    %3678 = vmatprep.subr.mxu0 0.0
    %3679 = vmatpush2.msra.mxu0 0.0
    %3680 = vmatprep.subr.mxu0 0.0
    %3681 = vmatpush2.msra.mxu0 0.0
    %3682 = vmatprep.mubr.f32.mxu0 0.0
    %3683 = vmatmul.mubr.f32.gmra.mxu0 %v3616
    %v3684 = vpop.f32.mrf.mxu0
    %v3685 = vadd.f32 %v3610, %v3684
    %v3686 = vpop.f32.mrf.mxu0
    %3687 = vdwg.mxu0
    %v3688 = vadd.f32 %v3685, %v1421
    %v3689 = vxor.u32 %v3688, 2147483648
    %v3690 = vmul.f32 %v3689, 1.442695
    %v3691 = vpow.pop %v3690
    %v3692 = vadd.f32 %v3691, 1.0
    %v3693 = vrcp.pop %v3692
    %v3694 = vmul.f32 1.0, %v3693
    %3696 = vrot.lane.b32.xlu0 %v3688, 64
    %v3697 = vpop.permute.xlu0 %3696
    %v3699 = vmul.f32 %v3694, %v3697
    %v3700 = vtanh.pop %v3699
    %v3701 = vsub.f32 1.0, %v3694
    %3703 = vrot.lane.b32.xlu0 %v3700, 32
    %v3704 = vpop.permute.xlu0 %3703
    %v3706 = vmul.f32 %v3701, %v3704
    %v3707 = vmul.f32 %v3694, %v3389
    %v3708 = vadd.f32 %v3706, %v3707
    %v3709 = vmul.f32 %v3708, %v1452
    %v3710 = vmul.f32 %v3708, %v1454
    %v3711 = vmul.f32 %v3708, %v1456
    %v3712 = vmul.f32 %v3708, %v1458
    %v3713 = vmul.f32 %v3708, %v1460
    %v3714 = vmul.f32 %v3708, %v1462
    %v3715 = vmul.f32 %v3708, %v1464
    %v3716 = vmul.f32 %v3708, %v1466
    %3725 = vrot.lane.b32.xlu0 %v3709, 96
    %v3726 = vpop.permute.xlu0 %3725
    %3727 = vrot.lane.b32.xlu0 %v3710, 96
    %v3728 = vpop.permute.xlu0 %3727
    %3729 = vrot.lane.b32.xlu0 %v3711, 96
    %v3730 = vpop.permute.xlu0 %3729
    %3731 = vrot.lane.b32.xlu0 %v3712, 96
    %v3732 = vpop.permute.xlu0 %3731
    %3733 = vrot.lane.b32.xlu0 %v3713, 96
    %v3734 = vpop.permute.xlu0 %3733
    %3735 = vrot.lane.b32.xlu0 %v3714, 96
    %v3736 = vpop.permute.xlu0 %3735
    %3737 = vrot.lane.b32.xlu0 %v3715, 96
    %v3738 = vpop.permute.xlu0 %3737
    %3739 = vrot.lane.b32.xlu0 %v3716, 96
    %v3740 = vpop.permute.xlu0 %3739
    %v3749 = vsel %vm208, %v3726, 0.0
    %3750 = vadd.xlane.f32.xlu0 %v3749
    %v3751 = vpop.xlane.xlu0 %3750
    %v3752 = vsel %vm208, %v3728, 0.0
    %3753 = vadd.xlane.f32.xlu0 %v3752
    %v3754 = vpop.xlane.xlu0 %3753
    %v3755 = vsel %vm208, %v3730, 0.0
    %3756 = vadd.xlane.f32.xlu0 %v3755
    %v3757 = vpop.xlane.xlu0 %3756
    %v3758 = vsel %vm208, %v3732, 0.0
    %3759 = vadd.xlane.f32.xlu0 %v3758
    %v3760 = vpop.xlane.xlu0 %3759
    %v3761 = vsel %vm208, %v3734, 0.0
    %3762 = vadd.xlane.f32.xlu0 %v3761
    %v3763 = vpop.xlane.xlu0 %3762
    %v3764 = vsel %vm208, %v3736, 0.0
    %3765 = vadd.xlane.f32.xlu0 %v3764
    %v3766 = vpop.xlane.xlu0 %3765
    %v3767 = vsel %vm208, %v3738, 0.0
    %3768 = vadd.xlane.f32.xlu0 %v3767
    %v3769 = vpop.xlane.xlu0 %3768
    %v3770 = vsel %vm208, %v3740, 0.0
    %3771 = vadd.xlane.f32.xlu0 %v3770
    %v3772 = vpop.xlane.xlu0 %3771
    %v3773 = vsel %vm1539, %v3751, -inf
    %v3774 = vsel %vm1539, %v3754, -inf
    %v3775 = vsel %vm1539, %v3757, -inf
    %v3776 = vsel %vm1539, %v3760, -inf
    %v3777 = vsel %vm1539, %v3763, -inf
    %v3778 = vmax.f32 %v3773, %v3777
    %v3779 = vsel %vm1539, %v3766, -inf
    %v3780 = vmax.f32 %v3774, %v3779
    %v3781 = vsel %vm1539, %v3769, -inf
    %v3782 = vmax.f32 %v3775, %v3781
    %v3783 = vsel %vm1539, %v3772, -inf
    %v3784 = vmax.f32 %v3776, %v3783
    %v3785 = vmax.f32 %v3778, %v3780
    %v3786 = vmax.f32 %v3782, %v3784
    %v3787 = vmax.f32 %v3785, %v3786
    %v3788 = vsub.f32 %v3751, %v3787
    %v3789 = vsub.f32 %v3754, %v3787
    %v3790 = vsub.f32 %v3757, %v3787
    %v3791 = vsub.f32 %v3760, %v3787
    %v3792 = vsub.f32 %v3763, %v3787
    %v3793 = vsub.f32 %v3766, %v3787
    %v3794 = vsub.f32 %v3769, %v3787
    %v3795 = vsub.f32 %v3772, %v3787
    %v3796 = vmul.f32 %v3788, 1.442695
    %v3797 = vpow.pop %v3796
    %v3798 = vmul.f32 %v3789, 1.442695
    %v3799 = vpow.pop %v3798
    %v3800 = vmul.f32 %v3790, 1.442695
    %v3801 = vpow.pop %v3800
    %v3802 = vmul.f32 %v3791, 1.442695
    %v3803 = vpow.pop %v3802
    %v3804 = vmul.f32 %v3792, 1.442695
    %v3805 = vpow.pop %v3804
    %v3806 = vmul.f32 %v3793, 1.442695
    %v3807 = vpow.pop %v3806
    %v3808 = vmul.f32 %v3794, 1.442695
    %v3809 = vpow.pop %v3808
    %v3810 = vmul.f32 %v3795, 1.442695
    %v3811 = vpow.pop %v3810
    %v3812 = vsel %vm1539, %v3797, 0.0
    %v3813 = vsel %vm1539, %v3799, 0.0
    %v3814 = vadd.f32 %v3812, %v3813
    %v3815 = vsel %vm1539, %v3801, 0.0
    %v3816 = vadd.f32 %v3814, %v3815
    %v3817 = vsel %vm1539, %v3803, 0.0
    %v3818 = vadd.f32 %v3816, %v3817
    %v3819 = vsel %vm1539, %v3805, 0.0
    %v3820 = vadd.f32 %v3818, %v3819
    %v3821 = vsel %vm1539, %v3807, 0.0
    %v3822 = vadd.f32 %v3820, %v3821
    %v3823 = vsel %vm1539, %v3809, 0.0
    %v3824 = vadd.f32 %v3822, %v3823
    %v3825 = vsel %vm1539, %v3811, 0.0
    %v3826 = vadd.f32 %v3824, %v3825
    %v3827 = vrcp.pop %v3826
    %v3828 = vmul.f32 %v3797, %v3827
    %v3829 = vmul.f32 %v3799, %v3827
    %v3830 = vmul.f32 %v3801, %v3827
    %v3831 = vmul.f32 %v3803, %v3827
    %v3832 = vmul.f32 %v3805, %v3827
    %v3833 = vmul.f32 %v3807, %v3827
    %v3834 = vmul.f32 %v3809, %v3827
    %v3835 = vmul.f32 %v3811, %v3827
    %v3836 = vmul.f32 %v3828, %v1267
    %v3837 = vmul.f32 %v3829, %v1268
    %v3838 = vmul.f32 %v3830, %v1269
    %v3839 = vmul.f32 %v3831, %v1270
    %v3840 = vmul.f32 %v3832, %v1271
    %v3841 = vmul.f32 %v3833, %v1272
    %v3842 = vmul.f32 %v3834, %v1273
    %v3843 = vmul.f32 %v3835, %v1274
    %v3844 = vsel %vm208, %v3836, 0.0
    %v3845 = vsel %vm208, %v3837, 0.0
    %v3846 = vadd.f32 %v3844, %v3845
    %v3847 = vsel %vm208, %v3838, 0.0
    %v3848 = vadd.f32 %v3846, %v3847
    %v3849 = vsel %vm208, %v3839, 0.0
    %v3850 = vadd.f32 %v3848, %v3849
    %v3851 = vsel %vm208, %v3840, 0.0
    %v3852 = vadd.f32 %v3850, %v3851
    %v3853 = vsel %vm208, %v3841, 0.0
    %v3854 = vadd.f32 %v3852, %v3853
    %v3855 = vsel %vm208, %v3842, 0.0
    %v3856 = vadd.f32 %v3854, %v3855
    %v3857 = vsel %vm208, %v3843, 0.0
    %v3858 = vadd.f32 %v3856, %v3857
    %v3860 = vsel %vm134, %v3858, 0
    %3862 = vmatprep.subr.mxu0 0.0
    %3863 = vmatpush1.msra.mxu0 0.0
    %3864 = vmatprep.subr.mxu0 0.0
    %3865 = vmatpush1.msra.mxu0 0.0
    %3866 = vmatprep.subr.mxu0 0.0
    %3867 = vmatpush1.msra.mxu0 0.0
    %3868 = vmatprep.subr.mxu0 0.0
    %3869 = vmatpush1.msra.mxu0 0.0
    %3870 = vmatprep.subr.mxu0 0.0
    %3871 = vmatpush1.msra.mxu0 0.0
    %3872 = vmatprep.subr.mxu0 0.0
    %3873 = vmatpush1.msra.mxu0 0.0
    %3874 = vmatprep.subr.mxu0 0.0
    %3875 = vmatpush1.msra.mxu0 0.0
    %3876 = vmatprep.subr.mxu0 0.0
    %3877 = vmatpush1.msra.mxu0 0.0
    %3878 = vmatprep.subr.mxu0 0.0
    %3879 = vmatpush1.msra.mxu0 0.0
    %3880 = vmatprep.subr.mxu0 0.0
    %3881 = vmatpush1.msra.mxu0 0.0
    %3882 = vmatprep.subr.mxu0 0.0
    %3883 = vmatpush1.msra.mxu0 0.0
    %3884 = vmatprep.subr.mxu0 0.0
    %3885 = vmatpush1.msra.mxu0 0.0
    %3886 = vmatprep.subr.mxu0 0.0
    %3887 = vmatpush1.msra.mxu0 %v44
    %3888 = vmatprep.subr.mxu0 0.0
    %3889 = vmatpush1.msra.mxu0 %v43
    %3890 = vmatprep.subr.mxu0 0.0
    %3891 = vmatpush1.msra.mxu0 %v42
    %3892 = vmatprep.subr.mxu0 0.0
    %3893 = vmatpush1.msra.mxu0 %v41
    %3894 = vmatprep.subr.mxu0 0.0
    %3895 = vmatpush2.msra.mxu0 0.0
    %3896 = vmatprep.subr.mxu0 0.0
    %3897 = vmatpush2.msra.mxu0 0.0
    %3898 = vmatprep.subr.mxu0 0.0
    %3899 = vmatpush2.msra.mxu0 0.0
    %3900 = vmatprep.subr.mxu0 0.0
    %3901 = vmatpush2.msra.mxu0 0.0
    %3902 = vmatprep.subr.mxu0 0.0
    %3903 = vmatpush2.msra.mxu0 0.0
    %3904 = vmatprep.subr.mxu0 0.0
    %3905 = vmatpush2.msra.mxu0 0.0
    %3906 = vmatprep.subr.mxu0 0.0
    %3907 = vmatpush2.msra.mxu0 0.0
    %3908 = vmatprep.subr.mxu0 0.0
    %3909 = vmatpush2.msra.mxu0 0.0
    %3910 = vmatprep.subr.mxu0 0.0
    %3911 = vmatpush2.msra.mxu0 0.0
    %3912 = vmatprep.subr.mxu0 0.0
    %3913 = vmatpush2.msra.mxu0 0.0
    %3914 = vmatprep.subr.mxu0 0.0
    %3915 = vmatpush2.msra.mxu0 0.0
    %3916 = vmatprep.subr.mxu0 0.0
    %3917 = vmatpush2.msra.mxu0 0.0
    %3918 = vmatprep.subr.mxu0 0.0
    %3919 = vmatpush2.msra.mxu0 0.0
    %3920 = vmatprep.subr.mxu0 0.0
    %3921 = vmatpush2.msra.mxu0 0.0
    %3922 = vmatprep.subr.mxu0 0.0
    %3923 = vmatpush2.msra.mxu0 0.0
    %3924 = vmatprep.subr.mxu0 0.0
    %3925 = vmatpush2.msra.mxu0 0.0
    %3926 = vmatprep.mubr.f32.mxu0 0.0
    %3927 = vmatmul.mubr.f32.gmra.mxu0 %v3860
    %v3928 = vpop.f32.mrf.mxu0
    %v3929 = vadd.f32 0.0, %v3928
    %v3930 = vpop.f32.mrf.mxu0
    %3931 = vdwg.mxu0
    %3933 = vrot.lane.b32.xlu0 %v3708, 96
    %v3934 = vpop.permute.xlu0 %3933
    %v3935 = vsel %vm134, %v3934, 0
    %3937 = vmatprep.subr.mxu0 0.0
    %3938 = vmatpush1.msra.mxu0 0.0
    %3939 = vmatprep.subr.mxu0 0.0
    %3940 = vmatpush1.msra.mxu0 0.0
    %3941 = vmatprep.subr.mxu0 0.0
    %3942 = vmatpush1.msra.mxu0 0.0
    %3943 = vmatprep.subr.mxu0 0.0
    %3944 = vmatpush1.msra.mxu0 0.0
    %3945 = vmatprep.subr.mxu0 0.0
    %3946 = vmatpush1.msra.mxu0 0.0
    %3947 = vmatprep.subr.mxu0 0.0
    %3948 = vmatpush1.msra.mxu0 0.0
    %3949 = vmatprep.subr.mxu0 0.0
    %3950 = vmatpush1.msra.mxu0 0.0
    %3951 = vmatprep.subr.mxu0 0.0
    %3952 = vmatpush1.msra.mxu0 0.0
    %3953 = vmatprep.subr.mxu0 0.0
    %3954 = vmatpush1.msra.mxu0 0.0
    %3955 = vmatprep.subr.mxu0 0.0
    %3956 = vmatpush1.msra.mxu0 0.0
    %3957 = vmatprep.subr.mxu0 0.0
    %3958 = vmatpush1.msra.mxu0 0.0
    %3959 = vmatprep.subr.mxu0 0.0
    %3960 = vmatpush1.msra.mxu0 0.0
    %3961 = vmatprep.subr.mxu0 0.0
    %3962 = vmatpush1.msra.mxu0 %v40
    %3963 = vmatprep.subr.mxu0 0.0
    %3964 = vmatpush1.msra.mxu0 %v39
    %3965 = vmatprep.subr.mxu0 0.0
    %3966 = vmatpush1.msra.mxu0 %v38
    %3967 = vmatprep.subr.mxu0 0.0
    %3968 = vmatpush1.msra.mxu0 %v37
    %3969 = vmatprep.subr.mxu0 0.0
    %3970 = vmatpush2.msra.mxu0 0.0
    %3971 = vmatprep.subr.mxu0 0.0
    %3972 = vmatpush2.msra.mxu0 0.0
    %3973 = vmatprep.subr.mxu0 0.0
    %3974 = vmatpush2.msra.mxu0 0.0
    %3975 = vmatprep.subr.mxu0 0.0
    %3976 = vmatpush2.msra.mxu0 0.0
    %3977 = vmatprep.subr.mxu0 0.0
    %3978 = vmatpush2.msra.mxu0 0.0
    %3979 = vmatprep.subr.mxu0 0.0
    %3980 = vmatpush2.msra.mxu0 0.0
    %3981 = vmatprep.subr.mxu0 0.0
    %3982 = vmatpush2.msra.mxu0 0.0
    %3983 = vmatprep.subr.mxu0 0.0
    %3984 = vmatpush2.msra.mxu0 0.0
    %3985 = vmatprep.subr.mxu0 0.0
    %3986 = vmatpush2.msra.mxu0 0.0
    %3987 = vmatprep.subr.mxu0 0.0
    %3988 = vmatpush2.msra.mxu0 0.0
    %3989 = vmatprep.subr.mxu0 0.0
    %3990 = vmatpush2.msra.mxu0 0.0
    %3991 = vmatprep.subr.mxu0 0.0
    %3992 = vmatpush2.msra.mxu0 0.0
    %3993 = vmatprep.subr.mxu0 0.0
    %3994 = vmatpush2.msra.mxu0 0.0
    %3995 = vmatprep.subr.mxu0 0.0
    %3996 = vmatpush2.msra.mxu0 0.0
    %3997 = vmatprep.subr.mxu0 0.0
    %3998 = vmatpush2.msra.mxu0 0.0
    %3999 = vmatprep.subr.mxu0 0.0
    %4000 = vmatpush2.msra.mxu0 0.0
    %4001 = vmatprep.mubr.f32.mxu0 0.0
    %4002 = vmatmul.mubr.f32.gmra.mxu0 %v3935
    %v4003 = vpop.f32.mrf.mxu0
    %v4004 = vadd.f32 %v3929, %v4003
    %v4005 = vpop.f32.mrf.mxu0
    %4006 = vdwg.mxu0
    %v4007 = vlaneseq
    %v4008 = vshrl.u32 %v4007, 7
    %v4009 = vsub.s32 3, %v4008
    %v4010 = vrot.slane %v45, %v4009
    %v4011 = vadd.f32 %v4004, %v4010
    %vm4012 = vcmask 123904
    %4013 = vst.msk [vmem:[#allocation3] sm:$0x3] %vm4012, %v4011
    // Predicated region
    $region26: #{tpu_custom_call.1} parent=1 // pred_check
      _
    $region27: #{tpu_custom_call.1} parent=1 // pred_check_branch
      %4015 = sbr.rel (0) target = $region29
    $region28: #{tpu_custom_call.1} parent=1 // pred_region
      %s4017 = ssub.s32 32, 32
      %4018 = vsyncadd [#allocation4], %s4017
      %s4020 = sshll.u32 [#allocation3], 4
      %s4021 = int_to_ptr.vmem [resolvable:$true] %s4020
      %4023 = dma.vmem_to_hbm [thread:$0]  %s4021, 32, %s6, [#allocation4]
    $region29: #{tpu_custom_call.1} parent=1 // pred_fallthru
      _
    // Predicated region
    $region30: #{tpu_custom_call.1} parent=1 // pred_check
      _
    $region31: #{tpu_custom_call.1} parent=1 // pred_check_branch
      %4025 = sbr.rel (0) target = $region33
    $region32: #{tpu_custom_call.1} parent=1 // pred_region
      %4026 = dma.done [#allocation4], 32
    $region33: #{tpu_custom_call.1} parent=1 // pred_fallthru
      _
    %4027 = vsyncpa [#allocation4], 1

</llo_original>
